<compile_context>
chip_gen: v5e
topology: v5e:2x2
jax: 0.10.0
libtpu: 0.0.40
codegen_flags: <defaults>
</compile_context>

<pallas_src>
import jax
import jax.numpy as jnp
from jax.experimental import pallas as pl
from jax.experimental.pallas import tpu as pltpu

# MLP layer sizes (from the PyTorch module's __init__)
LAYER_SIZES = [2, 256, 128, 64, 64, 64, 1]

# MXU operand dtype for the hidden-layer matmuls (accumulation is always f32).
# TODO(synk): if this forward ever feeds PINN residual/gradient computation,
# consider keeping the 64-wide layers' weights in f32 (they underfill the MXU).
MATMUL_DTYPE = jnp.bfloat16


def _fast_tanh(x):
    """Numerically robust one-exp tanh.

    One EUP exp + one approx EUP reciprocal (rides the same EUP slot nearly
    free) instead of the 2-exp + divide expansion jnp.tanh can lower to.
    exp(-2|x|) <= 1, so there is no overflow for any input magnitude.
    """
    t = jnp.exp(-2.0 * jnp.abs(x))
    y = (1.0 - t) * pl.reciprocal(1.0 + t, approx=True)
    return jnp.where(x >= 0, y, -y)


def mlp_kernel(x_ref,
               w1_ref, b1_ref,
               w2_ref, b2_ref,
               w3_ref, b3_ref,
               w4_ref, b4_ref,
               w5_ref, b5_ref,
               w6_ref, b6_ref,
               o_ref):
    """One (2, TM) batch tile through the whole MLP, features-on-sublanes layout.

    x_ref : (2, TM)    f32  input points, batch on the lane axis
    w1    : (256, 2)   f32  (out, in)  -- layer 1 on the VPU
    w2..5 : (out, in)  bf16             -- MXU matmuls, f32 accumulation
    w6    : (64, 1)    f32  (in, out)  -- VPU mul + sublane reduce
    b1..6 : (out, 1)   f32
    o_ref : (1, TM)    f32  lane-dense output row
    """
    tm = x_ref.shape[1]
    hm = tm // 2          # two independent lane-chunks -> MXU/EUP/VPU overlap

    w1 = w1_ref[...]                                               # (256, 2)
    b1 = b1_ref[...]                                               # (256, 1)

    # Layer 1: K == 2 -> two broadcast mul-adds on the VPU (no wasted MXU pass).
    def layer1(xc):                                                # (2, hm)
        return _fast_tanh(w1[:, 0:1] * xc[0:1, :] +
                          w1[:, 1:2] * xc[1:2, :] + b1)

    # Layers 2-5: (out, in) @ (in, hm) on the MXU; bf16 operands, f32 accumulate.
    def layer(h, w_ref, b_ref):
        y = jnp.dot(w_ref[...], h.astype(MATMUL_DTYPE),
                    preferred_element_type=jnp.float32) + b_ref[...]
        return _fast_tanh(y)

    # Layer 6: out == 1 -> VPU multiply + cross-sublane reduce (XLU), lane-dense.
    def layer6(h):
        y = jnp.sum(w6_ref[...] * h, axis=0, keepdims=True) + b6_ref[...]
        return _fast_tanh(y)                                       # (1, hm)

    # Two independent chunks, interleaved layer-by-layer in one basic block so
    # the LLO scheduler can co-issue chunk-B matmuls with chunk-A epilogues.
    ha = layer1(x_ref[:, :hm])
    hb = layer1(x_ref[:, hm:])
    for w_ref, b_ref in ((w2_ref, b2_ref), (w3_ref, b3_ref),
                         (w4_ref, b4_ref), (w5_ref, b5_ref)):
        ha = layer(ha, w_ref, b_ref)
        hb = layer(hb, w_ref, b_ref)
    o_ref[:, :hm] = layer6(ha).astype(o_ref.dtype)
    o_ref[:, hm:] = layer6(hb).astype(o_ref.dtype)


def init_params(key):
    """PyTorch nn.Linear-style init: U(-1/sqrt(fan_in), 1/sqrt(fan_in)).

    Returns [(w, b)] with w: (out, in), b: (out,) in float32 (PyTorch layout).
    """
    params = []
    for i in range(len(LAYER_SIZES) - 1):
        fan_in, fan_out = LAYER_SIZES[i], LAYER_SIZES[i + 1]
        key, kw, kb = jax.random.split(key, 3)
        bound = 1.0 / (fan_in ** 0.5)
        w = jax.random.uniform(kw, (fan_out, fan_in), jnp.float32, -bound, bound)
        b = jax.random.uniform(kb, (fan_out,), jnp.float32, -bound, bound)
        params.append((w, b))
    return params


def prepare_params(params):
    """Convert PyTorch-layout params to the kernel's operand layout/dtypes."""
    (w1, b1), (w2, b2), (w3, b3), (w4, b4), (w5, b5), (w6, b6) = params
    return [
        w1, b1[:, None],                                    # (256, 2) f32, (256, 1)
        w2.astype(MATMUL_DTYPE), b2[:, None],               # (128, 256) bf16
        w3.astype(MATMUL_DTYPE), b3[:, None],               # (64, 128)  bf16
        w4.astype(MATMUL_DTYPE), b4[:, None],               # (64, 64)   bf16
        w5.astype(MATMUL_DTYPE), b5[:, None],               # (64, 64)   bf16
        w6.T, b6[:, None],                                  # (64, 1) f32, (1, 1)
    ]


def mlp_forward(x, flat_params, *, tm=4096):
    """x: (N, 2) float32 -> (N, 1) float32."""
    n = x.shape[0]

    # Batch tile: unconditionally a multiple of 256 (lane alignment / MXU
    # streaming); capped so small batches aren't over-padded and so the grid
    # has >= 2 steps whenever the batch allows it (v7x has 2 TensorCores).
    tm = max(256, (int(tm) // 256) * 256)
    tm = min(tm, max(256, pl.cdiv(n, 2 * 256) * 256))
    n_pad = pl.cdiv(n, tm) * tm
    grid = (n_pad // tm,)

    # Flip to (features, batch) so the batch sits on the 128-wide lane axis;
    # zero-pad ragged batches (padded columns are computed and then discarded).
    x_t = x.T.astype(jnp.float32)                          # (2, N)
    if n_pad != n:
        x_t = jnp.pad(x_t, ((0, 0), (0, n_pad - n)))

    in_specs = [pl.BlockSpec((2, tm), lambda i: (0, i))]
    # Weights / biases: whole-array blocks with a constant index_map -> DMA'd
    # once, VMEM-resident across the whole batch loop.
    for p in flat_params:
        in_specs.append(pl.BlockSpec(p.shape, lambda i: (0, 0)))

    flops = 2 * sum(a * b for a, b in zip(LAYER_SIZES[:-1], LAYER_SIZES[1:])) * n_pad
    transcendentals = sum(LAYER_SIZES[1:]) * n_pad
    bytes_accessed = (x_t.size * 4 + n_pad * 4
                      + sum(int(p.size) * p.dtype.itemsize for p in flat_params))

    out = pl.pallas_call(
        mlp_kernel,
        out_shape=jax.ShapeDtypeStruct((1, n_pad), jnp.float32),
        grid=grid,
        in_specs=in_specs,
        out_specs=pl.BlockSpec((1, tm), lambda i: (0, i)),
        compiler_params=pltpu.CompilerParams(
            dimension_semantics=("parallel",),
            # TM=4096 activations (~10-12 MiB live, 2 chunks) + double-buffered
            # x/out blocks; 48 MiB fits under v7x's 64 MiB physical VMEM and is
            # well above the v5e/v6e defaults.
            vmem_limit_bytes=48 * 1024 * 1024),
        cost_estimate=pl.CostEstimate(
            flops=int(flops),
            transcendentals=int(transcendentals),
            bytes_accessed=int(bytes_accessed)),
    )(x_t, *flat_params)

    return out[:, :n].T                                    # (N, 1)


def _ref_tanh(x):
    """Same one-exp tanh formulation as the kernel, with an exact reciprocal."""
    t = jnp.exp(-2.0 * jnp.abs(x))
    y = (1.0 - t) / (1.0 + t)
    return jnp.where(x >= 0, y, -y)


def mlp_reference(x, flat_params):
    """Pure-JAX mirror of the kernel math (same layout, same bf16 casts)."""
    (w1, b1, w2, b2, w3, b3, w4, b4, w5, b5, w6, b6) = flat_params
    h = x.T.astype(jnp.float32)                            # (2, N)
    h = _ref_tanh(w1 @ h + b1)
    for w, b in ((w2, b2), (w3, b3), (w4, b4), (w5, b5)):
        h = _ref_tanh(jnp.dot(w, h.astype(MATMUL_DTYPE),
                              preferred_element_type=jnp.float32) + b)
    h = _ref_tanh(jnp.sum(w6 * h, axis=0, keepdims=True) + b6)
    return h.T                                              # (N, 1)


def mlp_reference_f32(x, params):
    """Full-f32 reference with the original PyTorch semantics (y = x @ W.T + b)."""
    h = x
    for w, b in params:
        h = jnp.tanh(h @ w.T + b)
    return h


if __name__ == "__main__":
    key = jax.random.PRNGKey(0)
    key, kx = jax.random.split(key)

    # Small batch of 2-D collocation points (x, t), consistent with the module.
    batch = 8
    x = jax.random.uniform(kx, (batch, 2), jnp.float32)

    params = init_params(key)             # PyTorch-layout f32 params
    flat_params = prepare_params(params)  # kernel-layout operands

    out = jax.block_until_ready(mlp_forward(x, flat_params))
    assert out.shape == (batch, 1)

    # Mirror check (same dtypes/casts; only diff is the approx reciprocal).
    ref = mlp_reference(x, flat_params)
    assert jnp.allclose(out, ref, atol=2e-2, rtol=2e-2), float(
        jnp.max(jnp.abs(out - ref)))

    # Semantic check against the full-f32 PyTorch-style forward (bf16 matmuls
    # + approx-recip tanh introduce small, bounded error).
    ref32 = mlp_reference_f32(x, params)
    assert jnp.allclose(out, ref32, atol=5e-2, rtol=5e-2), float(
        jnp.max(jnp.abs(out - ref32)))

    # Exercise the multi-tile / ragged-padding path (grid > 1 step).
    key, kx2 = jax.random.split(key)
    n2 = 1000
    x2 = jax.random.uniform(kx2, (n2, 2), jnp.float32)
    out2 = jax.block_until_ready(mlp_forward(x2, flat_params))
    assert out2.shape == (n2, 1)
    ref2 = mlp_reference_f32(x2, params)
    assert jnp.allclose(out2, ref2, atol=5e-2, rtol=5e-2), float(
        jnp.max(jnp.abs(out2 - ref2)))

    print("KERNEL_OK")
</pallas_src>

<mosaic_0001>
module attributes {stable_mosaic.version = 11 : i64} {
  func.func @mlp_kernel(%arg0: i32, %arg1: memref<2x256xf32, #tpu.memory_space<vmem>>, %arg2: memref<256x2xf32, #tpu.memory_space<vmem>>, %arg3: memref<256x1xf32, #tpu.memory_space<vmem>>, %arg4: memref<128x256xbf16, #tpu.memory_space<vmem>>, %arg5: memref<128x1xf32, #tpu.memory_space<vmem>>, %arg6: memref<64x128xbf16, #tpu.memory_space<vmem>>, %arg7: memref<64x1xf32, #tpu.memory_space<vmem>>, %arg8: memref<64x64xbf16, #tpu.memory_space<vmem>>, %arg9: memref<64x1xf32, #tpu.memory_space<vmem>>, %arg10: memref<64x64xbf16, #tpu.memory_space<vmem>>, %arg11: memref<64x1xf32, #tpu.memory_space<vmem>>, %arg12: memref<64x1xf32, #tpu.memory_space<vmem>>, %arg13: memref<1x1xf32, #tpu.memory_space<vmem>>, %arg14: memref<1x256xf32, #tpu.memory_space<vmem>>) attributes {dimension_semantics = [#tpu.dimension_semantics<parallel>], iteration_bounds = array<i64: 1>, scalar_prefetch = 0 : i64, scratch_operands = 0 : i64, tpu.core_type = #tpu.core_type<tc>, window_params = [{transform_indices = @transform_0, window_bounds = array<i64: 2, 256>}, {pipeline_mode = #tpu.pipeline_mode<synchronous>, transform_indices = @transform_1, window_bounds = array<i64: 256, 2>}, {pipeline_mode = #tpu.pipeline_mode<synchronous>, transform_indices = @transform_2, window_bounds = array<i64: 256, 1>}, {pipeline_mode = #tpu.pipeline_mode<synchronous>, transform_indices = @transform_3, window_bounds = array<i64: 128, 256>}, {pipeline_mode = #tpu.pipeline_mode<synchronous>, transform_indices = @transform_4, window_bounds = array<i64: 128, 1>}, {pipeline_mode = #tpu.pipeline_mode<synchronous>, transform_indices = @transform_5, window_bounds = array<i64: 64, 128>}, {pipeline_mode = #tpu.pipeline_mode<synchronous>, transform_indices = @transform_6, window_bounds = array<i64: 64, 1>}, {pipeline_mode = #tpu.pipeline_mode<synchronous>, transform_indices = @transform_7, window_bounds = array<i64: 64, 64>}, {pipeline_mode = #tpu.pipeline_mode<synchronous>, transform_indices = @transform_8, window_bounds = array<i64: 64, 1>}, {pipeline_mode = #tpu.pipeline_mode<synchronous>, transform_indices = @transform_9, window_bounds = array<i64: 64, 64>}, {pipeline_mode = #tpu.pipeline_mode<synchronous>, transform_indices = @transform_10, window_bounds = array<i64: 64, 1>}, {pipeline_mode = #tpu.pipeline_mode<synchronous>, transform_indices = @transform_11, window_bounds = array<i64: 64, 1>}, {pipeline_mode = #tpu.pipeline_mode<synchronous>, transform_indices = @transform_12, window_bounds = array<i64: 1, 1>}, {transform_indices = @transform_13, window_bounds = array<i64: 1, 256>}]} {
    %c0 = arith.constant 0 : index
    %c0_0 = arith.constant 0 : index
    %0 = vector.load %arg2[%c0, %c0_0] : memref<256x2xf32, #tpu.memory_space<vmem>>, vector<256x2xf32>
    %c0_1 = arith.constant 0 : index
    %c0_2 = arith.constant 0 : index
    %1 = vector.load %arg3[%c0_1, %c0_2] : memref<256x1xf32, #tpu.memory_space<vmem>>, vector<256x1xf32>
    %c0_3 = arith.constant 0 : index
    %c0_4 = arith.constant 0 : index
    %2 = vector.load %arg1[%c0_3, %c0_4] : memref<2x256xf32, #tpu.memory_space<vmem>>, vector<2x128xf32>
    %3 = vector.extract_strided_slice %0 {offsets = [0, 0], sizes = [256, 1], strides = [1, 1]} : vector<256x2xf32> to vector<256x1xf32>
    %4 = vector.extract_strided_slice %2 {offsets = [0, 0], sizes = [1, 128], strides = [1, 1]} : vector<2x128xf32> to vector<1x128xf32>
    %5 = vector.broadcast %3 : vector<256x1xf32> to vector<256x128xf32>
    %6 = vector.broadcast %4 : vector<1x128xf32> to vector<256x128xf32>
    %7 = arith.mulf %5, %6 : vector<256x128xf32>
    %8 = vector.extract_strided_slice %0 {offsets = [0, 1], sizes = [256, 1], strides = [1, 1]} : vector<256x2xf32> to vector<256x1xf32>
    %9 = vector.extract_strided_slice %2 {offsets = [1, 0], sizes = [1, 128], strides = [1, 1]} : vector<2x128xf32> to vector<1x128xf32>
    %10 = vector.broadcast %8 : vector<256x1xf32> to vector<256x128xf32>
    %11 = vector.broadcast %9 : vector<1x128xf32> to vector<256x128xf32>
    %12 = arith.mulf %10, %11 : vector<256x128xf32>
    %13 = arith.addf %7, %12 : vector<256x128xf32>
    %14 = vector.broadcast %1 : vector<256x1xf32> to vector<256x128xf32>
    %15 = arith.addf %13, %14 : vector<256x128xf32>
    %16 = math.absf %15 : vector<256x128xf32>
    %cst = arith.constant -2.000000e+00 : f32
    %17 = vector.broadcast %cst : f32 to vector<256x128xf32>
    %18 = arith.mulf %17, %16 : vector<256x128xf32>
    %19 = math.exp %18 : vector<256x128xf32>
    %cst_5 = arith.constant 1.000000e+00 : f32
    %20 = vector.broadcast %cst_5 : f32 to vector<256x128xf32>
    %21 = arith.subf %20, %19 : vector<256x128xf32>
    %cst_6 = arith.constant 1.000000e+00 : f32
    %22 = vector.broadcast %cst_6 : f32 to vector<256x128xf32>
    %23 = arith.addf %22, %19 : vector<256x128xf32>
    %24 = tpu.reciprocal %23 {approx = true} : vector<256x128xf32> -> vector<256x128xf32>
    %25 = arith.mulf %21, %24 : vector<256x128xf32>
    %cst_7 = arith.constant 0.000000e+00 : f32
    %26 = vector.broadcast %cst_7 : f32 to vector<256x128xf32>
    %27 = arith.cmpf oge, %15, %26 : vector<256x128xf32>
    %cst_8 = arith.constant 0.000000e+00 : f32
    %28 = vector.broadcast %cst_8 : f32 to vector<256x128xf32>
    %29 = arith.subf %28, %25 : vector<256x128xf32>
    %30 = arith.select %27, %25, %29 : vector<256x128xi1>, vector<256x128xf32>
    %c0_9 = arith.constant 0 : index
    %c128 = arith.constant 128 : index
    %31 = vector.load %arg1[%c0_9, %c128] : memref<2x256xf32, #tpu.memory_space<vmem>>, vector<2x128xf32>
    %32 = vector.extract_strided_slice %0 {offsets = [0, 0], sizes = [256, 1], strides = [1, 1]} : vector<256x2xf32> to vector<256x1xf32>
    %33 = vector.extract_strided_slice %31 {offsets = [0, 0], sizes = [1, 128], strides = [1, 1]} : vector<2x128xf32> to vector<1x128xf32>
    %34 = vector.broadcast %32 : vector<256x1xf32> to vector<256x128xf32>
    %35 = vector.broadcast %33 : vector<1x128xf32> to vector<256x128xf32>
    %36 = arith.mulf %34, %35 : vector<256x128xf32>
    %37 = vector.extract_strided_slice %0 {offsets = [0, 1], sizes = [256, 1], strides = [1, 1]} : vector<256x2xf32> to vector<256x1xf32>
    %38 = vector.extract_strided_slice %31 {offsets = [1, 0], sizes = [1, 128], strides = [1, 1]} : vector<2x128xf32> to vector<1x128xf32>
    %39 = vector.broadcast %37 : vector<256x1xf32> to vector<256x128xf32>
    %40 = vector.broadcast %38 : vector<1x128xf32> to vector<256x128xf32>
    %41 = arith.mulf %39, %40 : vector<256x128xf32>
    %42 = arith.addf %36, %41 : vector<256x128xf32>
    %43 = vector.broadcast %1 : vector<256x1xf32> to vector<256x128xf32>
    %44 = arith.addf %42, %43 : vector<256x128xf32>
    %45 = math.absf %44 : vector<256x128xf32>
    %cst_10 = arith.constant -2.000000e+00 : f32
    %46 = vector.broadcast %cst_10 : f32 to vector<256x128xf32>
    %47 = arith.mulf %46, %45 : vector<256x128xf32>
    %48 = math.exp %47 : vector<256x128xf32>
    %cst_11 = arith.constant 1.000000e+00 : f32
    %49 = vector.broadcast %cst_11 : f32 to vector<256x128xf32>
    %50 = arith.subf %49, %48 : vector<256x128xf32>
    %cst_12 = arith.constant 1.000000e+00 : f32
    %51 = vector.broadcast %cst_12 : f32 to vector<256x128xf32>
    %52 = arith.addf %51, %48 : vector<256x128xf32>
    %53 = tpu.reciprocal %52 {approx = true} : vector<256x128xf32> -> vector<256x128xf32>
    %54 = arith.mulf %50, %53 : vector<256x128xf32>
    %cst_13 = arith.constant 0.000000e+00 : f32
    %55 = vector.broadcast %cst_13 : f32 to vector<256x128xf32>
    %56 = arith.cmpf oge, %44, %55 : vector<256x128xf32>
    %cst_14 = arith.constant 0.000000e+00 : f32
    %57 = vector.broadcast %cst_14 : f32 to vector<256x128xf32>
    %58 = arith.subf %57, %54 : vector<256x128xf32>
    %59 = arith.select %56, %54, %58 : vector<256x128xi1>, vector<256x128xf32>
    %c0_15 = arith.constant 0 : index
    %c0_16 = arith.constant 0 : index
    %60 = vector.load %arg4[%c0_15, %c0_16] : memref<128x256xbf16, #tpu.memory_space<vmem>>, vector<128x256xbf16>
    %61 = arith.truncf %30 : vector<256x128xf32> to vector<256x128xbf16>
    %cst_17 = arith.constant dense<0.000000e+00> : vector<128x128xf32>
    %62 = tpu.matmul %60, %61, %cst_17 {dimension_numbers = #tpu.dot_dimension_numbers<[1], [0], [0], [1], [0, 0, 1, 1], [], []>} : vector<128x256xbf16>, vector<256x128xbf16>, vector<128x128xf32> -> vector<128x128xf32>
    %c0_18 = arith.constant 0 : index
    %c0_19 = arith.constant 0 : index
    %63 = vector.load %arg5[%c0_18, %c0_19] : memref<128x1xf32, #tpu.memory_space<vmem>>, vector<128x1xf32>
    %64 = vector.broadcast %63 : vector<128x1xf32> to vector<128x128xf32>
    %65 = arith.addf %62, %64 : vector<128x128xf32>
    %66 = math.absf %65 : vector<128x128xf32>
    %cst_20 = arith.constant -2.000000e+00 : f32
    %67 = vector.broadcast %cst_20 : f32 to vector<128x128xf32>
    %68 = arith.mulf %67, %66 : vector<128x128xf32>
    %69 = math.exp %68 : vector<128x128xf32>
    %cst_21 = arith.constant 1.000000e+00 : f32
    %70 = vector.broadcast %cst_21 : f32 to vector<128x128xf32>
    %71 = arith.subf %70, %69 : vector<128x128xf32>
    %cst_22 = arith.constant 1.000000e+00 : f32
    %72 = vector.broadcast %cst_22 : f32 to vector<128x128xf32>
    %73 = arith.addf %72, %69 : vector<128x128xf32>
    %74 = tpu.reciprocal %73 {approx = true} : vector<128x128xf32> -> vector<128x128xf32>
    %75 = arith.mulf %71, %74 : vector<128x128xf32>
    %cst_23 = arith.constant 0.000000e+00 : f32
    %76 = vector.broadcast %cst_23 : f32 to vector<128x128xf32>
    %77 = arith.cmpf oge, %65, %76 : vector<128x128xf32>
    %cst_24 = arith.constant 0.000000e+00 : f32
    %78 = vector.broadcast %cst_24 : f32 to vector<128x128xf32>
    %79 = arith.subf %78, %75 : vector<128x128xf32>
    %80 = arith.select %77, %75, %79 : vector<128x128xi1>, vector<128x128xf32>
    %c0_25 = arith.constant 0 : index
    %c0_26 = arith.constant 0 : index
    %81 = vector.load %arg4[%c0_25, %c0_26] : memref<128x256xbf16, #tpu.memory_space<vmem>>, vector<128x256xbf16>
    %82 = arith.truncf %59 : vector<256x128xf32> to vector<256x128xbf16>
    %cst_27 = arith.constant dense<0.000000e+00> : vector<128x128xf32>
    %83 = tpu.matmul %81, %82, %cst_27 {dimension_numbers = #tpu.dot_dimension_numbers<[1], [0], [0], [1], [0, 0, 1, 1], [], []>} : vector<128x256xbf16>, vector<256x128xbf16>, vector<128x128xf32> -> vector<128x128xf32>
    %c0_28 = arith.constant 0 : index
    %c0_29 = arith.constant 0 : index
    %84 = vector.load %arg5[%c0_28, %c0_29] : memref<128x1xf32, #tpu.memory_space<vmem>>, vector<128x1xf32>
    %85 = vector.broadcast %84 : vector<128x1xf32> to vector<128x128xf32>
    %86 = arith.addf %83, %85 : vector<128x128xf32>
    %87 = math.absf %86 : vector<128x128xf32>
    %cst_30 = arith.constant -2.000000e+00 : f32
    %88 = vector.broadcast %cst_30 : f32 to vector<128x128xf32>
    %89 = arith.mulf %88, %87 : vector<128x128xf32>
    %90 = math.exp %89 : vector<128x128xf32>
    %cst_31 = arith.constant 1.000000e+00 : f32
    %91 = vector.broadcast %cst_31 : f32 to vector<128x128xf32>
    %92 = arith.subf %91, %90 : vector<128x128xf32>
    %cst_32 = arith.constant 1.000000e+00 : f32
    %93 = vector.broadcast %cst_32 : f32 to vector<128x128xf32>
    %94 = arith.addf %93, %90 : vector<128x128xf32>
    %95 = tpu.reciprocal %94 {approx = true} : vector<128x128xf32> -> vector<128x128xf32>
    %96 = arith.mulf %92, %95 : vector<128x128xf32>
    %cst_33 = arith.constant 0.000000e+00 : f32
    %97 = vector.broadcast %cst_33 : f32 to vector<128x128xf32>
    %98 = arith.cmpf oge, %86, %97 : vector<128x128xf32>
    %cst_34 = arith.constant 0.000000e+00 : f32
    %99 = vector.broadcast %cst_34 : f32 to vector<128x128xf32>
    %100 = arith.subf %99, %96 : vector<128x128xf32>
    %101 = arith.select %98, %96, %100 : vector<128x128xi1>, vector<128x128xf32>
    %c0_35 = arith.constant 0 : index
    %c0_36 = arith.constant 0 : index
    %102 = vector.load %arg6[%c0_35, %c0_36] : memref<64x128xbf16, #tpu.memory_space<vmem>>, vector<64x128xbf16>
    %103 = arith.truncf %80 : vector<128x128xf32> to vector<128x128xbf16>
    %cst_37 = arith.constant dense<0.000000e+00> : vector<64x128xf32>
    %104 = tpu.matmul %102, %103, %cst_37 {dimension_numbers = #tpu.dot_dimension_numbers<[1], [0], [0], [1], [0, 0, 1, 1], [], []>} : vector<64x128xbf16>, vector<128x128xbf16>, vector<64x128xf32> -> vector<64x128xf32>
    %c0_38 = arith.constant 0 : index
    %c0_39 = arith.constant 0 : index
    %105 = vector.load %arg7[%c0_38, %c0_39] : memref<64x1xf32, #tpu.memory_space<vmem>>, vector<64x1xf32>
    %106 = vector.broadcast %105 : vector<64x1xf32> to vector<64x128xf32>
    %107 = arith.addf %104, %106 : vector<64x128xf32>
    %108 = math.absf %107 : vector<64x128xf32>
    %cst_40 = arith.constant -2.000000e+00 : f32
    %109 = vector.broadcast %cst_40 : f32 to vector<64x128xf32>
    %110 = arith.mulf %109, %108 : vector<64x128xf32>
    %111 = math.exp %110 : vector<64x128xf32>
    %cst_41 = arith.constant 1.000000e+00 : f32
    %112 = vector.broadcast %cst_41 : f32 to vector<64x128xf32>
    %113 = arith.subf %112, %111 : vector<64x128xf32>
    %cst_42 = arith.constant 1.000000e+00 : f32
    %114 = vector.broadcast %cst_42 : f32 to vector<64x128xf32>
    %115 = arith.addf %114, %111 : vector<64x128xf32>
    %116 = tpu.reciprocal %115 {approx = true} : vector<64x128xf32> -> vector<64x128xf32>
    %117 = arith.mulf %113, %116 : vector<64x128xf32>
    %cst_43 = arith.constant 0.000000e+00 : f32
    %118 = vector.broadcast %cst_43 : f32 to vector<64x128xf32>
    %119 = arith.cmpf oge, %107, %118 : vector<64x128xf32>
    %cst_44 = arith.constant 0.000000e+00 : f32
    %120 = vector.broadcast %cst_44 : f32 to vector<64x128xf32>
    %121 = arith.subf %120, %117 : vector<64x128xf32>
    %122 = arith.select %119, %117, %121 : vector<64x128xi1>, vector<64x128xf32>
    %c0_45 = arith.constant 0 : index
    %c0_46 = arith.constant 0 : index
    %123 = vector.load %arg6[%c0_45, %c0_46] : memref<64x128xbf16, #tpu.memory_space<vmem>>, vector<64x128xbf16>
    %124 = arith.truncf %101 : vector<128x128xf32> to vector<128x128xbf16>
    %cst_47 = arith.constant dense<0.000000e+00> : vector<64x128xf32>
    %125 = tpu.matmul %123, %124, %cst_47 {dimension_numbers = #tpu.dot_dimension_numbers<[1], [0], [0], [1], [0, 0, 1, 1], [], []>} : vector<64x128xbf16>, vector<128x128xbf16>, vector<64x128xf32> -> vector<64x128xf32>
    %c0_48 = arith.constant 0 : index
    %c0_49 = arith.constant 0 : index
    %126 = vector.load %arg7[%c0_48, %c0_49] : memref<64x1xf32, #tpu.memory_space<vmem>>, vector<64x1xf32>
    %127 = vector.broadcast %126 : vector<64x1xf32> to vector<64x128xf32>
    %128 = arith.addf %125, %127 : vector<64x128xf32>
    %129 = math.absf %128 : vector<64x128xf32>
    %cst_50 = arith.constant -2.000000e+00 : f32
    %130 = vector.broadcast %cst_50 : f32 to vector<64x128xf32>
    %131 = arith.mulf %130, %129 : vector<64x128xf32>
    %132 = math.exp %131 : vector<64x128xf32>
    %cst_51 = arith.constant 1.000000e+00 : f32
    %133 = vector.broadcast %cst_51 : f32 to vector<64x128xf32>
    %134 = arith.subf %133, %132 : vector<64x128xf32>
    %cst_52 = arith.constant 1.000000e+00 : f32
    %135 = vector.broadcast %cst_52 : f32 to vector<64x128xf32>
    %136 = arith.addf %135, %132 : vector<64x128xf32>
    %137 = tpu.reciprocal %136 {approx = true} : vector<64x128xf32> -> vector<64x128xf32>
    %138 = arith.mulf %134, %137 : vector<64x128xf32>
    %cst_53 = arith.constant 0.000000e+00 : f32
    %139 = vector.broadcast %cst_53 : f32 to vector<64x128xf32>
    %140 = arith.cmpf oge, %128, %139 : vector<64x128xf32>
    %cst_54 = arith.constant 0.000000e+00 : f32
    %141 = vector.broadcast %cst_54 : f32 to vector<64x128xf32>
    %142 = arith.subf %141, %138 : vector<64x128xf32>
    %143 = arith.select %140, %138, %142 : vector<64x128xi1>, vector<64x128xf32>
    %c0_55 = arith.constant 0 : index
    %c0_56 = arith.constant 0 : index
    %144 = vector.load %arg8[%c0_55, %c0_56] : memref<64x64xbf16, #tpu.memory_space<vmem>>, vector<64x64xbf16>
    %145 = arith.truncf %122 : vector<64x128xf32> to vector<64x128xbf16>
    %cst_57 = arith.constant dense<0.000000e+00> : vector<64x128xf32>
    %146 = tpu.matmul %144, %145, %cst_57 {dimension_numbers = #tpu.dot_dimension_numbers<[1], [0], [0], [1], [0, 0, 1, 1], [], []>} : vector<64x64xbf16>, vector<64x128xbf16>, vector<64x128xf32> -> vector<64x128xf32>
    %c0_58 = arith.constant 0 : index
    %c0_59 = arith.constant 0 : index
    %147 = vector.load %arg9[%c0_58, %c0_59] : memref<64x1xf32, #tpu.memory_space<vmem>>, vector<64x1xf32>
    %148 = vector.broadcast %147 : vector<64x1xf32> to vector<64x128xf32>
    %149 = arith.addf %146, %148 : vector<64x128xf32>
    %150 = math.absf %149 : vector<64x128xf32>
    %cst_60 = arith.constant -2.000000e+00 : f32
    %151 = vector.broadcast %cst_60 : f32 to vector<64x128xf32>
    %152 = arith.mulf %151, %150 : vector<64x128xf32>
    %153 = math.exp %152 : vector<64x128xf32>
    %cst_61 = arith.constant 1.000000e+00 : f32
    %154 = vector.broadcast %cst_61 : f32 to vector<64x128xf32>
    %155 = arith.subf %154, %153 : vector<64x128xf32>
    %cst_62 = arith.constant 1.000000e+00 : f32
    %156 = vector.broadcast %cst_62 : f32 to vector<64x128xf32>
    %157 = arith.addf %156, %153 : vector<64x128xf32>
    %158 = tpu.reciprocal %157 {approx = true} : vector<64x128xf32> -> vector<64x128xf32>
    %159 = arith.mulf %155, %158 : vector<64x128xf32>
    %cst_63 = arith.constant 0.000000e+00 : f32
    %160 = vector.broadcast %cst_63 : f32 to vector<64x128xf32>
    %161 = arith.cmpf oge, %149, %160 : vector<64x128xf32>
    %cst_64 = arith.constant 0.000000e+00 : f32
    %162 = vector.broadcast %cst_64 : f32 to vector<64x128xf32>
    %163 = arith.subf %162, %159 : vector<64x128xf32>
    %164 = arith.select %161, %159, %163 : vector<64x128xi1>, vector<64x128xf32>
    %c0_65 = arith.constant 0 : index
    %c0_66 = arith.constant 0 : index
    %165 = vector.load %arg8[%c0_65, %c0_66] : memref<64x64xbf16, #tpu.memory_space<vmem>>, vector<64x64xbf16>
    %166 = arith.truncf %143 : vector<64x128xf32> to vector<64x128xbf16>
    %cst_67 = arith.constant dense<0.000000e+00> : vector<64x128xf32>
    %167 = tpu.matmul %165, %166, %cst_67 {dimension_numbers = #tpu.dot_dimension_numbers<[1], [0], [0], [1], [0, 0, 1, 1], [], []>} : vector<64x64xbf16>, vector<64x128xbf16>, vector<64x128xf32> -> vector<64x128xf32>
    %c0_68 = arith.constant 0 : index
    %c0_69 = arith.constant 0 : index
    %168 = vector.load %arg9[%c0_68, %c0_69] : memref<64x1xf32, #tpu.memory_space<vmem>>, vector<64x1xf32>
    %169 = vector.broadcast %168 : vector<64x1xf32> to vector<64x128xf32>
    %170 = arith.addf %167, %169 : vector<64x128xf32>
    %171 = math.absf %170 : vector<64x128xf32>
    %cst_70 = arith.constant -2.000000e+00 : f32
    %172 = vector.broadcast %cst_70 : f32 to vector<64x128xf32>
    %173 = arith.mulf %172, %171 : vector<64x128xf32>
    %174 = math.exp %173 : vector<64x128xf32>
    %cst_71 = arith.constant 1.000000e+00 : f32
    %175 = vector.broadcast %cst_71 : f32 to vector<64x128xf32>
    %176 = arith.subf %175, %174 : vector<64x128xf32>
    %cst_72 = arith.constant 1.000000e+00 : f32
    %177 = vector.broadcast %cst_72 : f32 to vector<64x128xf32>
    %178 = arith.addf %177, %174 : vector<64x128xf32>
    %179 = tpu.reciprocal %178 {approx = true} : vector<64x128xf32> -> vector<64x128xf32>
    %180 = arith.mulf %176, %179 : vector<64x128xf32>
    %cst_73 = arith.constant 0.000000e+00 : f32
    %181 = vector.broadcast %cst_73 : f32 to vector<64x128xf32>
    %182 = arith.cmpf oge, %170, %181 : vector<64x128xf32>
    %cst_74 = arith.constant 0.000000e+00 : f32
    %183 = vector.broadcast %cst_74 : f32 to vector<64x128xf32>
    %184 = arith.subf %183, %180 : vector<64x128xf32>
    %185 = arith.select %182, %180, %184 : vector<64x128xi1>, vector<64x128xf32>
    %c0_75 = arith.constant 0 : index
    %c0_76 = arith.constant 0 : index
    %186 = vector.load %arg10[%c0_75, %c0_76] : memref<64x64xbf16, #tpu.memory_space<vmem>>, vector<64x64xbf16>
    %187 = arith.truncf %164 : vector<64x128xf32> to vector<64x128xbf16>
    %cst_77 = arith.constant dense<0.000000e+00> : vector<64x128xf32>
    %188 = tpu.matmul %186, %187, %cst_77 {dimension_numbers = #tpu.dot_dimension_numbers<[1], [0], [0], [1], [0, 0, 1, 1], [], []>} : vector<64x64xbf16>, vector<64x128xbf16>, vector<64x128xf32> -> vector<64x128xf32>
    %c0_78 = arith.constant 0 : index
    %c0_79 = arith.constant 0 : index
    %189 = vector.load %arg11[%c0_78, %c0_79] : memref<64x1xf32, #tpu.memory_space<vmem>>, vector<64x1xf32>
    %190 = vector.broadcast %189 : vector<64x1xf32> to vector<64x128xf32>
    %191 = arith.addf %188, %190 : vector<64x128xf32>
    %192 = math.absf %191 : vector<64x128xf32>
    %cst_80 = arith.constant -2.000000e+00 : f32
    %193 = vector.broadcast %cst_80 : f32 to vector<64x128xf32>
    %194 = arith.mulf %193, %192 : vector<64x128xf32>
    %195 = math.exp %194 : vector<64x128xf32>
    %cst_81 = arith.constant 1.000000e+00 : f32
    %196 = vector.broadcast %cst_81 : f32 to vector<64x128xf32>
    %197 = arith.subf %196, %195 : vector<64x128xf32>
    %cst_82 = arith.constant 1.000000e+00 : f32
    %198 = vector.broadcast %cst_82 : f32 to vector<64x128xf32>
    %199 = arith.addf %198, %195 : vector<64x128xf32>
    %200 = tpu.reciprocal %199 {approx = true} : vector<64x128xf32> -> vector<64x128xf32>
    %201 = arith.mulf %197, %200 : vector<64x128xf32>
    %cst_83 = arith.constant 0.000000e+00 : f32
    %202 = vector.broadcast %cst_83 : f32 to vector<64x128xf32>
    %203 = arith.cmpf oge, %191, %202 : vector<64x128xf32>
    %cst_84 = arith.constant 0.000000e+00 : f32
    %204 = vector.broadcast %cst_84 : f32 to vector<64x128xf32>
    %205 = arith.subf %204, %201 : vector<64x128xf32>
    %206 = arith.select %203, %201, %205 : vector<64x128xi1>, vector<64x128xf32>
    %c0_85 = arith.constant 0 : index
    %c0_86 = arith.constant 0 : index
    %207 = vector.load %arg10[%c0_85, %c0_86] : memref<64x64xbf16, #tpu.memory_space<vmem>>, vector<64x64xbf16>
    %208 = arith.truncf %185 : vector<64x128xf32> to vector<64x128xbf16>
    %cst_87 = arith.constant dense<0.000000e+00> : vector<64x128xf32>
    %209 = tpu.matmul %207, %208, %cst_87 {dimension_numbers = #tpu.dot_dimension_numbers<[1], [0], [0], [1], [0, 0, 1, 1], [], []>} : vector<64x64xbf16>, vector<64x128xbf16>, vector<64x128xf32> -> vector<64x128xf32>
    %c0_88 = arith.constant 0 : index
    %c0_89 = arith.constant 0 : index
    %210 = vector.load %arg11[%c0_88, %c0_89] : memref<64x1xf32, #tpu.memory_space<vmem>>, vector<64x1xf32>
    %211 = vector.broadcast %210 : vector<64x1xf32> to vector<64x128xf32>
    %212 = arith.addf %209, %211 : vector<64x128xf32>
    %213 = math.absf %212 : vector<64x128xf32>
    %cst_90 = arith.constant -2.000000e+00 : f32
    %214 = vector.broadcast %cst_90 : f32 to vector<64x128xf32>
    %215 = arith.mulf %214, %213 : vector<64x128xf32>
    %216 = math.exp %215 : vector<64x128xf32>
    %cst_91 = arith.constant 1.000000e+00 : f32
    %217 = vector.broadcast %cst_91 : f32 to vector<64x128xf32>
    %218 = arith.subf %217, %216 : vector<64x128xf32>
    %cst_92 = arith.constant 1.000000e+00 : f32
    %219 = vector.broadcast %cst_92 : f32 to vector<64x128xf32>
    %220 = arith.addf %219, %216 : vector<64x128xf32>
    %221 = tpu.reciprocal %220 {approx = true} : vector<64x128xf32> -> vector<64x128xf32>
    %222 = arith.mulf %218, %221 : vector<64x128xf32>
    %cst_93 = arith.constant 0.000000e+00 : f32
    %223 = vector.broadcast %cst_93 : f32 to vector<64x128xf32>
    %224 = arith.cmpf oge, %212, %223 : vector<64x128xf32>
    %cst_94 = arith.constant 0.000000e+00 : f32
    %225 = vector.broadcast %cst_94 : f32 to vector<64x128xf32>
    %226 = arith.subf %225, %222 : vector<64x128xf32>
    %227 = arith.select %224, %222, %226 : vector<64x128xi1>, vector<64x128xf32>
    %c0_95 = arith.constant 0 : index
    %c0_96 = arith.constant 0 : index
    %228 = vector.load %arg12[%c0_95, %c0_96] : memref<64x1xf32, #tpu.memory_space<vmem>>, vector<64x1xf32>
    %229 = vector.broadcast %228 : vector<64x1xf32> to vector<64x128xf32>
    %230 = arith.mulf %229, %206 : vector<64x128xf32>
    %cst_97 = arith.constant dense<0.000000e+00> : vector<128xf32>
    %231 = vector.multi_reduction <add>, %230, %cst_97 [0] : vector<64x128xf32> to vector<128xf32>
    %232 = vector.shape_cast %231 : vector<128xf32> to vector<1x128xf32>
    %c0_98 = arith.constant 0 : index
    %c0_99 = arith.constant 0 : index
    %233 = vector.load %arg13[%c0_98, %c0_99] : memref<1x1xf32, #tpu.memory_space<vmem>>, vector<1x1xf32>
    %234 = vector.broadcast %233 : vector<1x1xf32> to vector<1x128xf32>
    %235 = arith.addf %232, %234 : vector<1x128xf32>
    %236 = math.absf %235 : vector<1x128xf32>
    %cst_100 = arith.constant -2.000000e+00 : f32
    %237 = vector.broadcast %cst_100 : f32 to vector<1x128xf32>
    %238 = arith.mulf %237, %236 : vector<1x128xf32>
    %239 = math.exp %238 : vector<1x128xf32>
    %cst_101 = arith.constant 1.000000e+00 : f32
    %240 = vector.broadcast %cst_101 : f32 to vector<1x128xf32>
    %241 = arith.subf %240, %239 : vector<1x128xf32>
    %cst_102 = arith.constant 1.000000e+00 : f32
    %242 = vector.broadcast %cst_102 : f32 to vector<1x128xf32>
    %243 = arith.addf %242, %239 : vector<1x128xf32>
    %244 = tpu.reciprocal %243 {approx = true} : vector<1x128xf32> -> vector<1x128xf32>
    %245 = arith.mulf %241, %244 : vector<1x128xf32>
    %cst_103 = arith.constant 0.000000e+00 : f32
    %246 = vector.broadcast %cst_103 : f32 to vector<1x128xf32>
    %247 = arith.cmpf oge, %235, %246 : vector<1x128xf32>
    %cst_104 = arith.constant 0.000000e+00 : f32
    %248 = vector.broadcast %cst_104 : f32 to vector<1x128xf32>
    %249 = arith.subf %248, %245 : vector<1x128xf32>
    %250 = arith.select %247, %245, %249 : vector<1x128xi1>, vector<1x128xf32>
    %c0_105 = arith.constant 0 : index
    %c0_106 = arith.constant 0 : index
    %251 = vector.load %arg14[%c0_105, %c0_106] : memref<1x256xf32, #tpu.memory_space<vmem>>, vector<1x128xf32>
    tpu.vector_store %arg14[%c0_105, %c0_106], %250 {strides = array<i32>} : memref<1x256xf32, #tpu.memory_space<vmem>>, vector<1x128xf32>,
    %c0_107 = arith.constant 0 : index
    %c0_108 = arith.constant 0 : index
    %252 = vector.load %arg12[%c0_107, %c0_108] : memref<64x1xf32, #tpu.memory_space<vmem>>, vector<64x1xf32>
    %253 = vector.broadcast %252 : vector<64x1xf32> to vector<64x128xf32>
    %254 = arith.mulf %253, %227 : vector<64x128xf32>
    %cst_109 = arith.constant dense<0.000000e+00> : vector<128xf32>
    %255 = vector.multi_reduction <add>, %254, %cst_109 [0] : vector<64x128xf32> to vector<128xf32>
    %256 = vector.shape_cast %255 : vector<128xf32> to vector<1x128xf32>
    %c0_110 = arith.constant 0 : index
    %c0_111 = arith.constant 0 : index
    %257 = vector.load %arg13[%c0_110, %c0_111] : memref<1x1xf32, #tpu.memory_space<vmem>>, vector<1x1xf32>
    %258 = vector.broadcast %257 : vector<1x1xf32> to vector<1x128xf32>
    %259 = arith.addf %256, %258 : vector<1x128xf32>
    %260 = math.absf %259 : vector<1x128xf32>
    %cst_112 = arith.constant -2.000000e+00 : f32
    %261 = vector.broadcast %cst_112 : f32 to vector<1x128xf32>
    %262 = arith.mulf %261, %260 : vector<1x128xf32>
    %263 = math.exp %262 : vector<1x128xf32>
    %cst_113 = arith.constant 1.000000e+00 : f32
    %264 = vector.broadcast %cst_113 : f32 to vector<1x128xf32>
    %265 = arith.subf %264, %263 : vector<1x128xf32>
    %cst_114 = arith.constant 1.000000e+00 : f32
    %266 = vector.broadcast %cst_114 : f32 to vector<1x128xf32>
    %267 = arith.addf %266, %263 : vector<1x128xf32>
    %268 = tpu.reciprocal %267 {approx = true} : vector<1x128xf32> -> vector<1x128xf32>
    %269 = arith.mulf %265, %268 : vector<1x128xf32>
    %cst_115 = arith.constant 0.000000e+00 : f32
    %270 = vector.broadcast %cst_115 : f32 to vector<1x128xf32>
    %271 = arith.cmpf oge, %259, %270 : vector<1x128xf32>
    %cst_116 = arith.constant 0.000000e+00 : f32
    %272 = vector.broadcast %cst_116 : f32 to vector<1x128xf32>
    %273 = arith.subf %272, %269 : vector<1x128xf32>
    %274 = arith.select %271, %269, %273 : vector<1x128xi1>, vector<1x128xf32>
    %c0_117 = arith.constant 0 : index
    %c128_118 = arith.constant 128 : index
    %275 = vector.load %arg14[%c0_117, %c128_118] : memref<1x256xf32, #tpu.memory_space<vmem>>, vector<1x128xf32>
    tpu.vector_store %arg14[%c0_117, %c128_118], %274 {strides = array<i32>} : memref<1x256xf32, #tpu.memory_space<vmem>>, vector<1x128xf32>,
    return
  }
  func.func @transform_0(%arg0: i32) -> (i32, i32) {
    %c0_i32 = arith.constant 0 : i32
    %c0_i32_0 = arith.constant 0 : i32
    return %c0_i32, %arg0 : i32, i32
  }
  func.func @transform_1(%arg0: i32) -> (i32, i32) {
    %c0_i32 = arith.constant 0 : i32
    %c0_i32_0 = arith.constant 0 : i32
    %c0_i32_1 = arith.constant 0 : i32
    return %c0_i32, %c0_i32_0 : i32, i32
  }
  func.func @transform_2(%arg0: i32) -> (i32, i32) {
    %c0_i32 = arith.constant 0 : i32
    %c0_i32_0 = arith.constant 0 : i32
    %c0_i32_1 = arith.constant 0 : i32
    return %c0_i32, %c0_i32_0 : i32, i32
  }
  func.func @transform_3(%arg0: i32) -> (i32, i32) {
    %c0_i32 = arith.constant 0 : i32
    %c0_i32_0 = arith.constant 0 : i32
    %c0_i32_1 = arith.constant 0 : i32
    return %c0_i32, %c0_i32_0 : i32, i32
  }
  func.func @transform_4(%arg0: i32) -> (i32, i32) {
    %c0_i32 = arith.constant 0 : i32
    %c0_i32_0 = arith.constant 0 : i32
    %c0_i32_1 = arith.constant 0 : i32
    return %c0_i32, %c0_i32_0 : i32, i32
  }
  func.func @transform_5(%arg0: i32) -> (i32, i32) {
    %c0_i32 = arith.constant 0 : i32
    %c0_i32_0 = arith.constant 0 : i32
    %c0_i32_1 = arith.constant 0 : i32
    return %c0_i32, %c0_i32_0 : i32, i32
  }
  func.func @transform_6(%arg0: i32) -> (i32, i32) {
    %c0_i32 = arith.constant 0 : i32
    %c0_i32_0 = arith.constant 0 : i32
    %c0_i32_1 = arith.constant 0 : i32
    return %c0_i32, %c0_i32_0 : i32, i32
  }
  func.func @transform_7(%arg0: i32) -> (i32, i32) {
    %c0_i32 = arith.constant 0 : i32
    %c0_i32_0 = arith.constant 0 : i32
    %c0_i32_1 = arith.constant 0 : i32
    return %c0_i32, %c0_i32_0 : i32, i32
  }
  func.func @transform_8(%arg0: i32) -> (i32, i32) {
    %c0_i32 = arith.constant 0 : i32
    %c0_i32_0 = arith.constant 0 : i32
    %c0_i32_1 = arith.constant 0 : i32
    return %c0_i32, %c0_i32_0 : i32, i32
  }
  func.func @transform_9(%arg0: i32) -> (i32, i32) {
    %c0_i32 = arith.constant 0 : i32
    %c0_i32_0 = arith.constant 0 : i32
    %c0_i32_1 = arith.constant 0 : i32
    return %c0_i32, %c0_i32_0 : i32, i32
  }
  func.func @transform_10(%arg0: i32) -> (i32, i32) {
    %c0_i32 = arith.constant 0 : i32
    %c0_i32_0 = arith.constant 0 : i32
    %c0_i32_1 = arith.constant 0 : i32
    return %c0_i32, %c0_i32_0 : i32, i32
  }
  func.func @transform_11(%arg0: i32) -> (i32, i32) {
    %c0_i32 = arith.constant 0 : i32
    %c0_i32_0 = arith.constant 0 : i32
    %c0_i32_1 = arith.constant 0 : i32
    return %c0_i32, %c0_i32_0 : i32, i32
  }
  func.func @transform_12(%arg0: i32) -> (i32, i32) {
    %c0_i32 = arith.constant 0 : i32
    %c0_i32_0 = arith.constant 0 : i32
    %c0_i32_1 = arith.constant 0 : i32
    return %c0_i32, %c0_i32_0 : i32, i32
  }
  func.func @transform_13(%arg0: i32) -> (i32, i32) {
    %c0_i32 = arith.constant 0 : i32
    %c0_i32_0 = arith.constant 0 : i32
    return %c0_i32, %arg0 : i32, i32
  }
}

</mosaic_0001>

<llo_original>
// kernel: tpu_custom_call.1
$region0: #{tpu_custom_call.1}
  #allocation0 [shape = 'u32[]', space=smem, size = 0x4, offset = 0x4, fixed_abs, tag = 'smem constant byte address 0x4 - core index']
  #allocation1 [shape = 'u32[72,128]{1,0:T(1,128)}', space=vmem, size = 0x9000, scoped, tag = 'internal scratch']
  #allocation2 [shape = 'f32[1,1]{1,0:T(1,128)S(1)}', space=vmem, size = 0x200, scoped, tag = 'scoped memory for tpu_custom_call.1']
  %s0 = inlined_call_operand.vmem [shape: f32[2,256], index: 0, kind: input, shape index: {}]
  %s1 = inlined_call_operand.vmem [shape: f32[256,2], index: 1, kind: input, shape index: {}]
  %s2 = inlined_call_operand.vmem [shape: f32[256,1], index: 2, kind: input, shape index: {}]
  %s3 = inlined_call_operand.vmem [shape: bf16[128,256], index: 3, kind: input, shape index: {}]
  %s4 = inlined_call_operand.vmem [shape: f32[128,1], index: 4, kind: input, shape index: {}]
  %s5 = inlined_call_operand.vmem [shape: bf16[64,128], index: 5, kind: input, shape index: {}]
  %s6 = inlined_call_operand.vmem [shape: f32[64,1], index: 6, kind: input, shape index: {}]
  %s7 = inlined_call_operand.vmem [shape: bf16[64,64], index: 7, kind: input, shape index: {}]
  %s8 = inlined_call_operand.vmem [shape: f32[64,1], index: 8, kind: input, shape index: {}]
  %s9 = inlined_call_operand.vmem [shape: bf16[64,64], index: 9, kind: input, shape index: {}]
  %s10 = inlined_call_operand.vmem [shape: f32[64,1], index: 10, kind: input, shape index: {}]
  %s11 = inlined_call_operand.vmem [shape: f32[64,1], index: 11, kind: input, shape index: {}]
  %s12 = inlined_call_operand.<no memory space> [shape: f32[1,1], index: 12, kind: input, shape index: {}]
  %s13 = inlined_call_operand.hbm [shape: f32[1,256], index: 13, kind: output, shape index: {}]
  %s14 = sld [smem:[#allocation0]]
  $region62: #{tpu_custom_call.1} parent=0
    _
  %s16 = ssub.s32 1, %s14
  %s17 = scalar_select 0, %s16, %s14
  %v18 = vstv %s12
  %19 = vst [vmem:[#allocation2] sm:$0x1] %v18
  $region1: #{tpu_custom_call.1} parent=0
    #allocation3 [shape = 'u8[1024]{0}', space=vmem, size = 0x400, scoped, tag = 'output window, operand 0, single buffered']
    #allocation4 [shape = 's32[1]{0}', space=sflag, size = 0x4, scoped, tag = 'scoped memory for tpu_custom_call.1']
    %20 = vsyncpa [#allocation4], 0
    // Predicated region
    $region2: #{tpu_custom_call.1} parent=1 // pred_check
      _
    $region3: #{tpu_custom_call.1} parent=1 // pred_check_branch
      %22 = sbr.rel (0) target = $region5
    $region4: #{tpu_custom_call.1} parent=1 // pred_region
      _
    $region5: #{tpu_custom_call.1} parent=1 // pred_fallthru
      _
    // Predicated region
    $region6: #{tpu_custom_call.1} parent=1 // pred_check
      _
    $region7: #{tpu_custom_call.1} parent=1 // pred_check_branch
      %24 = sbr.rel (0) target = $region9
    $region8: #{tpu_custom_call.1} parent=1 // pred_region
      _
    $region9: #{tpu_custom_call.1} parent=1 // pred_fallthru
      _
    // Predicated region
    $region10: #{tpu_custom_call.1} parent=1 // pred_check
      _
    $region11: #{tpu_custom_call.1} parent=1 // pred_check_branch
      %26 = sbr.rel (0) target = $region13
    $region12: #{tpu_custom_call.1} parent=1 // pred_region
      _
    $region13: #{tpu_custom_call.1} parent=1 // pred_fallthru
      _
    // Predicated region
    $region14: #{tpu_custom_call.1} parent=1 // pred_check
      _
    $region15: #{tpu_custom_call.1} parent=1 // pred_check_branch
      %28 = sbr.rel (0) target = $region17
    $region16: #{tpu_custom_call.1} parent=1 // pred_region
      _
    $region17: #{tpu_custom_call.1} parent=1 // pred_fallthru
      _
    // Predicated region
    $region18: #{tpu_custom_call.1} parent=1 // pred_check
      _
    $region19: #{tpu_custom_call.1} parent=1 // pred_check_branch
      %30 = sbr.rel (0) target = $region21
    $region20: #{tpu_custom_call.1} parent=1 // pred_region
      _
    $region21: #{tpu_custom_call.1} parent=1 // pred_fallthru
      _
    // Predicated region
    $region22: #{tpu_custom_call.1} parent=1 // pred_check
      _
    $region23: #{tpu_custom_call.1} parent=1 // pred_check_branch
      %32 = sbr.rel (0) target = $region25
    $region24: #{tpu_custom_call.1} parent=1 // pred_region
      _
    $region25: #{tpu_custom_call.1} parent=1 // pred_fallthru
      _
    // Predicated region
    $region26: #{tpu_custom_call.1} parent=1 // pred_check
      _
    $region27: #{tpu_custom_call.1} parent=1 // pred_check_branch
      %34 = sbr.rel (0) target = $region29
    $region28: #{tpu_custom_call.1} parent=1 // pred_region
      _
    $region29: #{tpu_custom_call.1} parent=1 // pred_fallthru
      _
    // Predicated region
    $region30: #{tpu_custom_call.1} parent=1 // pred_check
      _
    $region31: #{tpu_custom_call.1} parent=1 // pred_check_branch
      %36 = sbr.rel (0) target = $region33
    $region32: #{tpu_custom_call.1} parent=1 // pred_region
      _
    $region33: #{tpu_custom_call.1} parent=1 // pred_fallthru
      _
    // Predicated region
    $region34: #{tpu_custom_call.1} parent=1 // pred_check
      _
    $region35: #{tpu_custom_call.1} parent=1 // pred_check_branch
      %38 = sbr.rel (0) target = $region37
    $region36: #{tpu_custom_call.1} parent=1 // pred_region
      _
    $region37: #{tpu_custom_call.1} parent=1 // pred_fallthru
      _
    // Predicated region
    $region38: #{tpu_custom_call.1} parent=1 // pred_check
      _
    $region39: #{tpu_custom_call.1} parent=1 // pred_check_branch
      %40 = sbr.rel (0) target = $region41
    $region40: #{tpu_custom_call.1} parent=1 // pred_region
      _
    $region41: #{tpu_custom_call.1} parent=1 // pred_fallthru
      _
    // Predicated region
    $region42: #{tpu_custom_call.1} parent=1 // pred_check
      _
    $region43: #{tpu_custom_call.1} parent=1 // pred_check_branch
      %42 = sbr.rel (0) target = $region45
    $region44: #{tpu_custom_call.1} parent=1 // pred_region
      _
    $region45: #{tpu_custom_call.1} parent=1 // pred_fallthru
      _
    // Predicated region
    $region46: #{tpu_custom_call.1} parent=1 // pred_check
      _
    $region47: #{tpu_custom_call.1} parent=1 // pred_check_branch
      %44 = sbr.rel (0) target = $region49
    $region48: #{tpu_custom_call.1} parent=1 // pred_region
      _
    $region49: #{tpu_custom_call.1} parent=1 // pred_fallthru
      _
    // Predicated region
    $region50: #{tpu_custom_call.1} parent=1 // pred_check
      _
    $region51: #{tpu_custom_call.1} parent=1 // pred_check_branch
      %46 = sbr.rel (0) target = $region53
    $region52: #{tpu_custom_call.1} parent=1 // pred_region
      _
    $region53: #{tpu_custom_call.1} parent=1 // pred_fallthru
      _
    %v48 = vld [vmem:[%s1] sm:$0xff]
    %v49 = vld [vmem:[%s1 + $0x8] sm:$0xff]
    %v50 = vld [vmem:[%s1 + $0x10] sm:$0xff]
    %v51 = vld [vmem:[%s1 + $0x18] sm:$0xff]
    %v52 = vld [vmem:[%s1 + $0x20] sm:$0xff]
    %v53 = vld [vmem:[%s1 + $0x28] sm:$0xff]
    %v54 = vld [vmem:[%s1 + $0x30] sm:$0xff]
    %v55 = vld [vmem:[%s1 + $0x38] sm:$0xff]
    %v56 = vld [vmem:[%s1 + $0x40] sm:$0xff]
    %v57 = vld [vmem:[%s1 + $0x48] sm:$0xff]
    %v58 = vld [vmem:[%s1 + $0x50] sm:$0xff]
    %v59 = vld [vmem:[%s1 + $0x58] sm:$0xff]
    %v60 = vld [vmem:[%s1 + $0x60] sm:$0xff]
    %v61 = vld [vmem:[%s1 + $0x68] sm:$0xff]
    %v62 = vld [vmem:[%s1 + $0x70] sm:$0xff]
    %v63 = vld [vmem:[%s1 + $0x78] sm:$0xff]
    %v64 = vld [vmem:[%s1 + $0x80] sm:$0xff]
    %v65 = vld [vmem:[%s1 + $0x88] sm:$0xff]
    %v66 = vld [vmem:[%s1 + $0x90] sm:$0xff]
    %v67 = vld [vmem:[%s1 + $0x98] sm:$0xff]
    %v68 = vld [vmem:[%s1 + $0xa0] sm:$0xff]
    %v69 = vld [vmem:[%s1 + $0xa8] sm:$0xff]
    %v70 = vld [vmem:[%s1 + $0xb0] sm:$0xff]
    %v71 = vld [vmem:[%s1 + $0xb8] sm:$0xff]
    %v72 = vld [vmem:[%s1 + $0xc0] sm:$0xff]
    %v73 = vld [vmem:[%s1 + $0xc8] sm:$0xff]
    %v74 = vld [vmem:[%s1 + $0xd0] sm:$0xff]
    %v75 = vld [vmem:[%s1 + $0xd8] sm:$0xff]
    %v76 = vld [vmem:[%s1 + $0xe0] sm:$0xff]
    %v77 = vld [vmem:[%s1 + $0xe8] sm:$0xff]
    %v78 = vld [vmem:[%s1 + $0xf0] sm:$0xff]
    %v79 = vld [vmem:[%s1 + $0xf8] sm:$0xff]
    %v80 = vld [vmem:[%s2] sm:$0xff]
    %v81 = vld [vmem:[%s2 + $0x8] sm:$0xff]
    %v82 = vld [vmem:[%s2 + $0x10] sm:$0xff]
    %v83 = vld [vmem:[%s2 + $0x18] sm:$0xff]
    %v84 = vld [vmem:[%s2 + $0x20] sm:$0xff]
    %v85 = vld [vmem:[%s2 + $0x28] sm:$0xff]
    %v86 = vld [vmem:[%s2 + $0x30] sm:$0xff]
    %v87 = vld [vmem:[%s2 + $0x38] sm:$0xff]
    %v88 = vld [vmem:[%s2 + $0x40] sm:$0xff]
    %v89 = vld [vmem:[%s2 + $0x48] sm:$0xff]
    %v90 = vld [vmem:[%s2 + $0x50] sm:$0xff]
    %v91 = vld [vmem:[%s2 + $0x58] sm:$0xff]
    %v92 = vld [vmem:[%s2 + $0x60] sm:$0xff]
    %v93 = vld [vmem:[%s2 + $0x68] sm:$0xff]
    %v94 = vld [vmem:[%s2 + $0x70] sm:$0xff]
    %v95 = vld [vmem:[%s2 + $0x78] sm:$0xff]
    %v96 = vld [vmem:[%s2 + $0x80] sm:$0xff]
    %v97 = vld [vmem:[%s2 + $0x88] sm:$0xff]
    %v98 = vld [vmem:[%s2 + $0x90] sm:$0xff]
    %v99 = vld [vmem:[%s2 + $0x98] sm:$0xff]
    %v100 = vld [vmem:[%s2 + $0xa0] sm:$0xff]
    %v101 = vld [vmem:[%s2 + $0xa8] sm:$0xff]
    %v102 = vld [vmem:[%s2 + $0xb0] sm:$0xff]
    %v103 = vld [vmem:[%s2 + $0xb8] sm:$0xff]
    %v104 = vld [vmem:[%s2 + $0xc0] sm:$0xff]
    %v105 = vld [vmem:[%s2 + $0xc8] sm:$0xff]
    %v106 = vld [vmem:[%s2 + $0xd0] sm:$0xff]
    %v107 = vld [vmem:[%s2 + $0xd8] sm:$0xff]
    %v108 = vld [vmem:[%s2 + $0xe0] sm:$0xff]
    %v109 = vld [vmem:[%s2 + $0xe8] sm:$0xff]
    %v110 = vld [vmem:[%s2 + $0xf0] sm:$0xff]
    %v111 = vld [vmem:[%s2 + $0xf8] sm:$0xff]
    %v112 = vld [vmem:[%s0] sm:$0x3]
    %114 = vset.pattern.permute.xlu0 0
    %115 = vperm.xlu0 %114, %v48
    %v116 = vpop.permute.xlu0 %115
    %119 = vset.pattern.permute.xlu0 0
    %120 = vperm.xlu0 %119, %v49
    %v121 = vpop.permute.xlu0 %120
    %124 = vset.pattern.permute.xlu0 0
    %125 = vperm.xlu0 %124, %v50
    %v126 = vpop.permute.xlu0 %125
    %129 = vset.pattern.permute.xlu0 0
    %130 = vperm.xlu0 %129, %v51
    %v131 = vpop.permute.xlu0 %130
    %134 = vset.pattern.permute.xlu0 0
    %135 = vperm.xlu0 %134, %v52
    %v136 = vpop.permute.xlu0 %135
    %139 = vset.pattern.permute.xlu0 0
    %140 = vperm.xlu0 %139, %v53
    %v141 = vpop.permute.xlu0 %140
    %144 = vset.pattern.permute.xlu0 0
    %145 = vperm.xlu0 %144, %v54
    %v146 = vpop.permute.xlu0 %145
    %149 = vset.pattern.permute.xlu0 0
    %150 = vperm.xlu0 %149, %v55
    %v151 = vpop.permute.xlu0 %150
    %154 = vset.pattern.permute.xlu0 0
    %155 = vperm.xlu0 %154, %v56
    %v156 = vpop.permute.xlu0 %155
    %159 = vset.pattern.permute.xlu0 0
    %160 = vperm.xlu0 %159, %v57
    %v161 = vpop.permute.xlu0 %160
    %164 = vset.pattern.permute.xlu0 0
    %165 = vperm.xlu0 %164, %v58
    %v166 = vpop.permute.xlu0 %165
    %169 = vset.pattern.permute.xlu0 0
    %170 = vperm.xlu0 %169, %v59
    %v171 = vpop.permute.xlu0 %170
    %174 = vset.pattern.permute.xlu0 0
    %175 = vperm.xlu0 %174, %v60
    %v176 = vpop.permute.xlu0 %175
    %179 = vset.pattern.permute.xlu0 0
    %180 = vperm.xlu0 %179, %v61
    %v181 = vpop.permute.xlu0 %180
    %184 = vset.pattern.permute.xlu0 0
    %185 = vperm.xlu0 %184, %v62
    %v186 = vpop.permute.xlu0 %185
    %189 = vset.pattern.permute.xlu0 0
    %190 = vperm.xlu0 %189, %v63
    %v191 = vpop.permute.xlu0 %190
    %194 = vset.pattern.permute.xlu0 0
    %195 = vperm.xlu0 %194, %v64
    %v196 = vpop.permute.xlu0 %195
    %199 = vset.pattern.permute.xlu0 0
    %200 = vperm.xlu0 %199, %v65
    %v201 = vpop.permute.xlu0 %200
    %204 = vset.pattern.permute.xlu0 0
    %205 = vperm.xlu0 %204, %v66
    %v206 = vpop.permute.xlu0 %205
    %209 = vset.pattern.permute.xlu0 0
    %210 = vperm.xlu0 %209, %v67
    %v211 = vpop.permute.xlu0 %210
    %214 = vset.pattern.permute.xlu0 0
    %215 = vperm.xlu0 %214, %v68
    %v216 = vpop.permute.xlu0 %215
    %219 = vset.pattern.permute.xlu0 0
    %220 = vperm.xlu0 %219, %v69
    %v221 = vpop.permute.xlu0 %220
    %224 = vset.pattern.permute.xlu0 0
    %225 = vperm.xlu0 %224, %v70
    %v226 = vpop.permute.xlu0 %225
    %229 = vset.pattern.permute.xlu0 0
    %230 = vperm.xlu0 %229, %v71
    %v231 = vpop.permute.xlu0 %230
    %234 = vset.pattern.permute.xlu0 0
    %235 = vperm.xlu0 %234, %v72
    %v236 = vpop.permute.xlu0 %235
    %239 = vset.pattern.permute.xlu0 0
    %240 = vperm.xlu0 %239, %v73
    %v241 = vpop.permute.xlu0 %240
    %244 = vset.pattern.permute.xlu0 0
    %245 = vperm.xlu0 %244, %v74
    %v246 = vpop.permute.xlu0 %245
    %249 = vset.pattern.permute.xlu0 0
    %250 = vperm.xlu0 %249, %v75
    %v251 = vpop.permute.xlu0 %250
    %254 = vset.pattern.permute.xlu0 0
    %255 = vperm.xlu0 %254, %v76
    %v256 = vpop.permute.xlu0 %255
    %259 = vset.pattern.permute.xlu0 0
    %260 = vperm.xlu0 %259, %v77
    %v261 = vpop.permute.xlu0 %260
    %264 = vset.pattern.permute.xlu0 0
    %265 = vperm.xlu0 %264, %v78
    %v266 = vpop.permute.xlu0 %265
    %269 = vset.pattern.permute.xlu0 0
    %270 = vperm.xlu0 %269, %v79
    %v271 = vpop.permute.xlu0 %270
    %v273 = vperm.slane %v112, 0
    %v274 = vmul.f32 %v116, %v273
    %v275 = vmul.f32 %v121, %v273
    %v276 = vmul.f32 %v126, %v273
    %v277 = vmul.f32 %v131, %v273
    %v278 = vmul.f32 %v136, %v273
    %v279 = vmul.f32 %v141, %v273
    %v280 = vmul.f32 %v146, %v273
    %v281 = vmul.f32 %v151, %v273
    %v282 = vmul.f32 %v156, %v273
    %v283 = vmul.f32 %v161, %v273
    %v284 = vmul.f32 %v166, %v273
    %v285 = vmul.f32 %v171, %v273
    %v286 = vmul.f32 %v176, %v273
    %v287 = vmul.f32 %v181, %v273
    %v288 = vmul.f32 %v186, %v273
    %v289 = vmul.f32 %v191, %v273
    %v290 = vmul.f32 %v196, %v273
    %v291 = vmul.f32 %v201, %v273
    %v292 = vmul.f32 %v206, %v273
    %v293 = vmul.f32 %v211, %v273
    %v294 = vmul.f32 %v216, %v273
    %v295 = vmul.f32 %v221, %v273
    %v296 = vmul.f32 %v226, %v273
    %v297 = vmul.f32 %v231, %v273
    %v298 = vmul.f32 %v236, %v273
    %v299 = vmul.f32 %v241, %v273
    %v300 = vmul.f32 %v246, %v273
    %v301 = vmul.f32 %v251, %v273
    %v302 = vmul.f32 %v256, %v273
    %v303 = vmul.f32 %v261, %v273
    %v304 = vmul.f32 %v266, %v273
    %v305 = vmul.f32 %v271, %v273
    %306 = vset.pattern.permute.xlu0 1
    %307 = vperm.xlu0 %306, %v48
    %v308 = vpop.permute.xlu0 %307
    %310 = vset.pattern.permute.xlu0 1
    %311 = vperm.xlu0 %310, %v49
    %v312 = vpop.permute.xlu0 %311
    %314 = vset.pattern.permute.xlu0 1
    %315 = vperm.xlu0 %314, %v50
    %v316 = vpop.permute.xlu0 %315
    %318 = vset.pattern.permute.xlu0 1
    %319 = vperm.xlu0 %318, %v51
    %v320 = vpop.permute.xlu0 %319
    %322 = vset.pattern.permute.xlu0 1
    %323 = vperm.xlu0 %322, %v52
    %v324 = vpop.permute.xlu0 %323
    %326 = vset.pattern.permute.xlu0 1
    %327 = vperm.xlu0 %326, %v53
    %v328 = vpop.permute.xlu0 %327
    %330 = vset.pattern.permute.xlu0 1
    %331 = vperm.xlu0 %330, %v54
    %v332 = vpop.permute.xlu0 %331
    %334 = vset.pattern.permute.xlu0 1
    %335 = vperm.xlu0 %334, %v55
    %v336 = vpop.permute.xlu0 %335
    %338 = vset.pattern.permute.xlu0 1
    %339 = vperm.xlu0 %338, %v56
    %v340 = vpop.permute.xlu0 %339
    %342 = vset.pattern.permute.xlu0 1
    %343 = vperm.xlu0 %342, %v57
    %v344 = vpop.permute.xlu0 %343
    %346 = vset.pattern.permute.xlu0 1
    %347 = vperm.xlu0 %346, %v58
    %v348 = vpop.permute.xlu0 %347
    %350 = vset.pattern.permute.xlu0 1
    %351 = vperm.xlu0 %350, %v59
    %v352 = vpop.permute.xlu0 %351
    %354 = vset.pattern.permute.xlu0 1
    %355 = vperm.xlu0 %354, %v60
    %v356 = vpop.permute.xlu0 %355
    %358 = vset.pattern.permute.xlu0 1
    %359 = vperm.xlu0 %358, %v61
    %v360 = vpop.permute.xlu0 %359
    %362 = vset.pattern.permute.xlu0 1
    %363 = vperm.xlu0 %362, %v62
    %v364 = vpop.permute.xlu0 %363
    %366 = vset.pattern.permute.xlu0 1
    %367 = vperm.xlu0 %366, %v63
    %v368 = vpop.permute.xlu0 %367
    %370 = vset.pattern.permute.xlu0 1
    %371 = vperm.xlu0 %370, %v64
    %v372 = vpop.permute.xlu0 %371
    %374 = vset.pattern.permute.xlu0 1
    %375 = vperm.xlu0 %374, %v65
    %v376 = vpop.permute.xlu0 %375
    %378 = vset.pattern.permute.xlu0 1
    %379 = vperm.xlu0 %378, %v66
    %v380 = vpop.permute.xlu0 %379
    %382 = vset.pattern.permute.xlu0 1
    %383 = vperm.xlu0 %382, %v67
    %v384 = vpop.permute.xlu0 %383
    %386 = vset.pattern.permute.xlu0 1
    %387 = vperm.xlu0 %386, %v68
    %v388 = vpop.permute.xlu0 %387
    %390 = vset.pattern.permute.xlu0 1
    %391 = vperm.xlu0 %390, %v69
    %v392 = vpop.permute.xlu0 %391
    %394 = vset.pattern.permute.xlu0 1
    %395 = vperm.xlu0 %394, %v70
    %v396 = vpop.permute.xlu0 %395
    %398 = vset.pattern.permute.xlu0 1
    %399 = vperm.xlu0 %398, %v71
    %v400 = vpop.permute.xlu0 %399
    %402 = vset.pattern.permute.xlu0 1
    %403 = vperm.xlu0 %402, %v72
    %v404 = vpop.permute.xlu0 %403
    %406 = vset.pattern.permute.xlu0 1
    %407 = vperm.xlu0 %406, %v73
    %v408 = vpop.permute.xlu0 %407
    %410 = vset.pattern.permute.xlu0 1
    %411 = vperm.xlu0 %410, %v74
    %v412 = vpop.permute.xlu0 %411
    %414 = vset.pattern.permute.xlu0 1
    %415 = vperm.xlu0 %414, %v75
    %v416 = vpop.permute.xlu0 %415
    %418 = vset.pattern.permute.xlu0 1
    %419 = vperm.xlu0 %418, %v76
    %v420 = vpop.permute.xlu0 %419
    %422 = vset.pattern.permute.xlu0 1
    %423 = vperm.xlu0 %422, %v77
    %v424 = vpop.permute.xlu0 %423
    %426 = vset.pattern.permute.xlu0 1
    %427 = vperm.xlu0 %426, %v78
    %v428 = vpop.permute.xlu0 %427
    %430 = vset.pattern.permute.xlu0 1
    %431 = vperm.xlu0 %430, %v79
    %v432 = vpop.permute.xlu0 %431
    %v434 = vperm.slane %v112, 1
    %v435 = vmul.f32 %v308, %v434
    %v436 = vmul.f32 %v312, %v434
    %v437 = vmul.f32 %v316, %v434
    %v438 = vmul.f32 %v320, %v434
    %v439 = vmul.f32 %v324, %v434
    %v440 = vmul.f32 %v328, %v434
    %v441 = vmul.f32 %v332, %v434
    %v442 = vmul.f32 %v336, %v434
    %v443 = vmul.f32 %v340, %v434
    %v444 = vmul.f32 %v344, %v434
    %v445 = vmul.f32 %v348, %v434
    %v446 = vmul.f32 %v352, %v434
    %v447 = vmul.f32 %v356, %v434
    %v448 = vmul.f32 %v360, %v434
    %v449 = vmul.f32 %v364, %v434
    %v450 = vmul.f32 %v368, %v434
    %v451 = vmul.f32 %v372, %v434
    %v452 = vmul.f32 %v376, %v434
    %v453 = vmul.f32 %v380, %v434
    %v454 = vmul.f32 %v384, %v434
    %v455 = vmul.f32 %v388, %v434
    %v456 = vmul.f32 %v392, %v434
    %v457 = vmul.f32 %v396, %v434
    %v458 = vmul.f32 %v400, %v434
    %v459 = vmul.f32 %v404, %v434
    %v460 = vmul.f32 %v408, %v434
    %v461 = vmul.f32 %v412, %v434
    %v462 = vmul.f32 %v416, %v434
    %v463 = vmul.f32 %v420, %v434
    %v464 = vmul.f32 %v424, %v434
    %v465 = vmul.f32 %v428, %v434
    %v466 = vmul.f32 %v432, %v434
    %v467 = vadd.f32 %v274, %v435
    %v468 = vadd.f32 %v275, %v436
    %v469 = vadd.f32 %v276, %v437
    %v470 = vadd.f32 %v277, %v438
    %v471 = vadd.f32 %v278, %v439
    %v472 = vadd.f32 %v279, %v440
    %v473 = vadd.f32 %v280, %v441
    %v474 = vadd.f32 %v281, %v442
    %v475 = vadd.f32 %v282, %v443
    %v476 = vadd.f32 %v283, %v444
    %v477 = vadd.f32 %v284, %v445
    %v478 = vadd.f32 %v285, %v446
    %v479 = vadd.f32 %v286, %v447
    %v480 = vadd.f32 %v287, %v448
    %v481 = vadd.f32 %v288, %v449
    %v482 = vadd.f32 %v289, %v450
    %v483 = vadd.f32 %v290, %v451
    %v484 = vadd.f32 %v291, %v452
    %v485 = vadd.f32 %v292, %v453
    %v486 = vadd.f32 %v293, %v454
    %v487 = vadd.f32 %v294, %v455
    %v488 = vadd.f32 %v295, %v456
    %v489 = vadd.f32 %v296, %v457
    %v490 = vadd.f32 %v297, %v458
    %v491 = vadd.f32 %v298, %v459
    %v492 = vadd.f32 %v299, %v460
    %v493 = vadd.f32 %v300, %v461
    %v494 = vadd.f32 %v301, %v462
    %v495 = vadd.f32 %v302, %v463
    %v496 = vadd.f32 %v303, %v464
    %v497 = vadd.f32 %v304, %v465
    %v498 = vadd.f32 %v305, %v466
    %500 = vset.pattern.permute.xlu0 0
    %501 = vperm.xlu0 %500, %v80
    %v502 = vpop.permute.xlu0 %501
    %505 = vset.pattern.permute.xlu0 0
    %506 = vperm.xlu0 %505, %v81
    %v507 = vpop.permute.xlu0 %506
    %510 = vset.pattern.permute.xlu0 0
    %511 = vperm.xlu0 %510, %v82
    %v512 = vpop.permute.xlu0 %511
    %515 = vset.pattern.permute.xlu0 0
    %516 = vperm.xlu0 %515, %v83
    %v517 = vpop.permute.xlu0 %516
    %520 = vset.pattern.permute.xlu0 0
    %521 = vperm.xlu0 %520, %v84
    %v522 = vpop.permute.xlu0 %521
    %525 = vset.pattern.permute.xlu0 0
    %526 = vperm.xlu0 %525, %v85
    %v527 = vpop.permute.xlu0 %526
    %530 = vset.pattern.permute.xlu0 0
    %531 = vperm.xlu0 %530, %v86
    %v532 = vpop.permute.xlu0 %531
    %535 = vset.pattern.permute.xlu0 0
    %536 = vperm.xlu0 %535, %v87
    %v537 = vpop.permute.xlu0 %536
    %540 = vset.pattern.permute.xlu0 0
    %541 = vperm.xlu0 %540, %v88
    %v542 = vpop.permute.xlu0 %541
    %545 = vset.pattern.permute.xlu0 0
    %546 = vperm.xlu0 %545, %v89
    %v547 = vpop.permute.xlu0 %546
    %550 = vset.pattern.permute.xlu0 0
    %551 = vperm.xlu0 %550, %v90
    %v552 = vpop.permute.xlu0 %551
    %555 = vset.pattern.permute.xlu0 0
    %556 = vperm.xlu0 %555, %v91
    %v557 = vpop.permute.xlu0 %556
    %560 = vset.pattern.permute.xlu0 0
    %561 = vperm.xlu0 %560, %v92
    %v562 = vpop.permute.xlu0 %561
    %565 = vset.pattern.permute.xlu0 0
    %566 = vperm.xlu0 %565, %v93
    %v567 = vpop.permute.xlu0 %566
    %570 = vset.pattern.permute.xlu0 0
    %571 = vperm.xlu0 %570, %v94
    %v572 = vpop.permute.xlu0 %571
    %575 = vset.pattern.permute.xlu0 0
    %576 = vperm.xlu0 %575, %v95
    %v577 = vpop.permute.xlu0 %576
    %580 = vset.pattern.permute.xlu0 0
    %581 = vperm.xlu0 %580, %v96
    %v582 = vpop.permute.xlu0 %581
    %585 = vset.pattern.permute.xlu0 0
    %586 = vperm.xlu0 %585, %v97
    %v587 = vpop.permute.xlu0 %586
    %590 = vset.pattern.permute.xlu0 0
    %591 = vperm.xlu0 %590, %v98
    %v592 = vpop.permute.xlu0 %591
    %595 = vset.pattern.permute.xlu0 0
    %596 = vperm.xlu0 %595, %v99
    %v597 = vpop.permute.xlu0 %596
    %600 = vset.pattern.permute.xlu0 0
    %601 = vperm.xlu0 %600, %v100
    %v602 = vpop.permute.xlu0 %601
    %605 = vset.pattern.permute.xlu0 0
    %606 = vperm.xlu0 %605, %v101
    %v607 = vpop.permute.xlu0 %606
    %610 = vset.pattern.permute.xlu0 0
    %611 = vperm.xlu0 %610, %v102
    %v612 = vpop.permute.xlu0 %611
    %615 = vset.pattern.permute.xlu0 0
    %616 = vperm.xlu0 %615, %v103
    %v617 = vpop.permute.xlu0 %616
    %620 = vset.pattern.permute.xlu0 0
    %621 = vperm.xlu0 %620, %v104
    %v622 = vpop.permute.xlu0 %621
    %625 = vset.pattern.permute.xlu0 0
    %626 = vperm.xlu0 %625, %v105
    %v627 = vpop.permute.xlu0 %626
    %630 = vset.pattern.permute.xlu0 0
    %631 = vperm.xlu0 %630, %v106
    %v632 = vpop.permute.xlu0 %631
    %635 = vset.pattern.permute.xlu0 0
    %636 = vperm.xlu0 %635, %v107
    %v637 = vpop.permute.xlu0 %636
    %640 = vset.pattern.permute.xlu0 0
    %641 = vperm.xlu0 %640, %v108
    %v642 = vpop.permute.xlu0 %641
    %645 = vset.pattern.permute.xlu0 0
    %646 = vperm.xlu0 %645, %v109
    %v647 = vpop.permute.xlu0 %646
    %650 = vset.pattern.permute.xlu0 0
    %651 = vperm.xlu0 %650, %v110
    %v652 = vpop.permute.xlu0 %651
    %655 = vset.pattern.permute.xlu0 0
    %656 = vperm.xlu0 %655, %v111
    %v657 = vpop.permute.xlu0 %656
    %v659 = vadd.f32 %v467, %v502
    %v660 = vadd.f32 %v468, %v507
    %v661 = vadd.f32 %v469, %v512
    %v662 = vadd.f32 %v470, %v517
    %v663 = vadd.f32 %v471, %v522
    %v664 = vadd.f32 %v472, %v527
    %v665 = vadd.f32 %v473, %v532
    %v666 = vadd.f32 %v474, %v537
    %v667 = vadd.f32 %v475, %v542
    %v668 = vadd.f32 %v476, %v547
    %v669 = vadd.f32 %v477, %v552
    %v670 = vadd.f32 %v478, %v557
    %v671 = vadd.f32 %v479, %v562
    %v672 = vadd.f32 %v480, %v567
    %v673 = vadd.f32 %v481, %v572
    %v674 = vadd.f32 %v482, %v577
    %v675 = vadd.f32 %v483, %v582
    %v676 = vadd.f32 %v484, %v587
    %v677 = vadd.f32 %v485, %v592
    %v678 = vadd.f32 %v486, %v597
    %v679 = vadd.f32 %v487, %v602
    %v680 = vadd.f32 %v488, %v607
    %v681 = vadd.f32 %v489, %v612
    %v682 = vadd.f32 %v490, %v617
    %v683 = vadd.f32 %v491, %v622
    %v684 = vadd.f32 %v492, %v627
    %v685 = vadd.f32 %v493, %v632
    %v686 = vadd.f32 %v494, %v637
    %v687 = vadd.f32 %v495, %v642
    %v688 = vadd.f32 %v496, %v647
    %v689 = vadd.f32 %v497, %v652
    %v690 = vadd.f32 %v498, %v657
    %v691 = vand.u32 2147483647, %v659
    %v692 = vand.u32 2147483647, %v660
    %v693 = vand.u32 2147483647, %v661
    %v694 = vand.u32 2147483647, %v662
    %v695 = vand.u32 2147483647, %v663
    %v696 = vand.u32 2147483647, %v664
    %v697 = vand.u32 2147483647, %v665
    %v698 = vand.u32 2147483647, %v666
    %v699 = vand.u32 2147483647, %v667
    %v700 = vand.u32 2147483647, %v668
    %v701 = vand.u32 2147483647, %v669
    %v702 = vand.u32 2147483647, %v670
    %v703 = vand.u32 2147483647, %v671
    %v704 = vand.u32 2147483647, %v672
    %v705 = vand.u32 2147483647, %v673
    %v706 = vand.u32 2147483647, %v674
    %v707 = vand.u32 2147483647, %v675
    %v708 = vand.u32 2147483647, %v676
    %v709 = vand.u32 2147483647, %v677
    %v710 = vand.u32 2147483647, %v678
    %v711 = vand.u32 2147483647, %v679
    %v712 = vand.u32 2147483647, %v680
    %v713 = vand.u32 2147483647, %v681
    %v714 = vand.u32 2147483647, %v682
    %v715 = vand.u32 2147483647, %v683
    %v716 = vand.u32 2147483647, %v684
    %v717 = vand.u32 2147483647, %v685
    %v718 = vand.u32 2147483647, %v686
    %v719 = vand.u32 2147483647, %v687
    %v720 = vand.u32 2147483647, %v688
    %v721 = vand.u32 2147483647, %v689
    %v722 = vand.u32 2147483647, %v690
    %v723 = vmul.f32 %v691, -2.0
    %v724 = vmul.f32 %v692, -2.0
    %v725 = vmul.f32 %v693, -2.0
    %v726 = vmul.f32 %v694, -2.0
    %v727 = vmul.f32 %v695, -2.0
    %v728 = vmul.f32 %v696, -2.0
    %v729 = vmul.f32 %v697, -2.0
    %v730 = vmul.f32 %v698, -2.0
    %v731 = vmul.f32 %v699, -2.0
    %v732 = vmul.f32 %v700, -2.0
    %v733 = vmul.f32 %v701, -2.0
    %v734 = vmul.f32 %v702, -2.0
    %v735 = vmul.f32 %v703, -2.0
    %v736 = vmul.f32 %v704, -2.0
    %v737 = vmul.f32 %v705, -2.0
    %v738 = vmul.f32 %v706, -2.0
    %v739 = vmul.f32 %v707, -2.0
    %v740 = vmul.f32 %v708, -2.0
    %v741 = vmul.f32 %v709, -2.0
    %v742 = vmul.f32 %v710, -2.0
    %v743 = vmul.f32 %v711, -2.0
    %v744 = vmul.f32 %v712, -2.0
    %v745 = vmul.f32 %v713, -2.0
    %v746 = vmul.f32 %v714, -2.0
    %v747 = vmul.f32 %v715, -2.0
    %v748 = vmul.f32 %v716, -2.0
    %v749 = vmul.f32 %v717, -2.0
    %v750 = vmul.f32 %v718, -2.0
    %v751 = vmul.f32 %v719, -2.0
    %v752 = vmul.f32 %v720, -2.0
    %v753 = vmul.f32 %v721, -2.0
    %v754 = vmul.f32 %v722, -2.0
    %v755 = vmul.f32 %v723, 1.442695
    %v756 = vpow.pop %v755
    %v757 = vmul.f32 %v724, 1.442695
    %v758 = vpow.pop %v757
    %v759 = vmul.f32 %v725, 1.442695
    %v760 = vpow.pop %v759
    %v761 = vmul.f32 %v726, 1.442695
    %v762 = vpow.pop %v761
    %v763 = vmul.f32 %v727, 1.442695
    %v764 = vpow.pop %v763
    %v765 = vmul.f32 %v728, 1.442695
    %v766 = vpow.pop %v765
    %v767 = vmul.f32 %v729, 1.442695
    %v768 = vpow.pop %v767
    %v769 = vmul.f32 %v730, 1.442695
    %v770 = vpow.pop %v769
    %v771 = vmul.f32 %v731, 1.442695
    %v772 = vpow.pop %v771
    %v773 = vmul.f32 %v732, 1.442695
    %v774 = vpow.pop %v773
    %v775 = vmul.f32 %v733, 1.442695
    %v776 = vpow.pop %v775
    %v777 = vmul.f32 %v734, 1.442695
    %v778 = vpow.pop %v777
    %v779 = vmul.f32 %v735, 1.442695
    %v780 = vpow.pop %v779
    %v781 = vmul.f32 %v736, 1.442695
    %v782 = vpow.pop %v781
    %v783 = vmul.f32 %v737, 1.442695
    %v784 = vpow.pop %v783
    %v785 = vmul.f32 %v738, 1.442695
    %v786 = vpow.pop %v785
    %v787 = vmul.f32 %v739, 1.442695
    %v788 = vpow.pop %v787
    %v789 = vmul.f32 %v740, 1.442695
    %v790 = vpow.pop %v789
    %v791 = vmul.f32 %v741, 1.442695
    %v792 = vpow.pop %v791
    %v793 = vmul.f32 %v742, 1.442695
    %v794 = vpow.pop %v793
    %v795 = vmul.f32 %v743, 1.442695
    %v796 = vpow.pop %v795
    %v797 = vmul.f32 %v744, 1.442695
    %v798 = vpow.pop %v797
    %v799 = vmul.f32 %v745, 1.442695
    %v800 = vpow.pop %v799
    %v801 = vmul.f32 %v746, 1.442695
    %v802 = vpow.pop %v801
    %v803 = vmul.f32 %v747, 1.442695
    %v804 = vpow.pop %v803
    %v805 = vmul.f32 %v748, 1.442695
    %v806 = vpow.pop %v805
    %v807 = vmul.f32 %v749, 1.442695
    %v808 = vpow.pop %v807
    %v809 = vmul.f32 %v750, 1.442695
    %v810 = vpow.pop %v809
    %v811 = vmul.f32 %v751, 1.442695
    %v812 = vpow.pop %v811
    %v813 = vmul.f32 %v752, 1.442695
    %v814 = vpow.pop %v813
    %v815 = vmul.f32 %v753, 1.442695
    %v816 = vpow.pop %v815
    %v817 = vmul.f32 %v754, 1.442695
    %v818 = vpow.pop %v817
    %v819 = vsub.f32 1.0, %v756
    %v820 = vsub.f32 1.0, %v758
    %v821 = vsub.f32 1.0, %v760
    %v822 = vsub.f32 1.0, %v762
    %v823 = vsub.f32 1.0, %v764
    %v824 = vsub.f32 1.0, %v766
    %v825 = vsub.f32 1.0, %v768
    %v826 = vsub.f32 1.0, %v770
    %v827 = vsub.f32 1.0, %v772
    %v828 = vsub.f32 1.0, %v774
    %v829 = vsub.f32 1.0, %v776
    %v830 = vsub.f32 1.0, %v778
    %v831 = vsub.f32 1.0, %v780
    %v832 = vsub.f32 1.0, %v782
    %v833 = vsub.f32 1.0, %v784
    %v834 = vsub.f32 1.0, %v786
    %v835 = vsub.f32 1.0, %v788
    %v836 = vsub.f32 1.0, %v790
    %v837 = vsub.f32 1.0, %v792
    %v838 = vsub.f32 1.0, %v794
    %v839 = vsub.f32 1.0, %v796
    %v840 = vsub.f32 1.0, %v798
    %v841 = vsub.f32 1.0, %v800
    %v842 = vsub.f32 1.0, %v802
    %v843 = vsub.f32 1.0, %v804
    %v844 = vsub.f32 1.0, %v806
    %v845 = vsub.f32 1.0, %v808
    %v846 = vsub.f32 1.0, %v810
    %v847 = vsub.f32 1.0, %v812
    %v848 = vsub.f32 1.0, %v814
    %v849 = vsub.f32 1.0, %v816
    %v850 = vsub.f32 1.0, %v818
    %v851 = vadd.f32 %v756, 1.0
    %v852 = vadd.f32 %v758, 1.0
    %v853 = vadd.f32 %v760, 1.0
    %v854 = vadd.f32 %v762, 1.0
    %v855 = vadd.f32 %v764, 1.0
    %v856 = vadd.f32 %v766, 1.0
    %v857 = vadd.f32 %v768, 1.0
    %v858 = vadd.f32 %v770, 1.0
    %v859 = vadd.f32 %v772, 1.0
    %v860 = vadd.f32 %v774, 1.0
    %v861 = vadd.f32 %v776, 1.0
    %v862 = vadd.f32 %v778, 1.0
    %v863 = vadd.f32 %v780, 1.0
    %v864 = vadd.f32 %v782, 1.0
    %v865 = vadd.f32 %v784, 1.0
    %v866 = vadd.f32 %v786, 1.0
    %v867 = vadd.f32 %v788, 1.0
    %v868 = vadd.f32 %v790, 1.0
    %v869 = vadd.f32 %v792, 1.0
    %v870 = vadd.f32 %v794, 1.0
    %v871 = vadd.f32 %v796, 1.0
    %v872 = vadd.f32 %v798, 1.0
    %v873 = vadd.f32 %v800, 1.0
    %v874 = vadd.f32 %v802, 1.0
    %v875 = vadd.f32 %v804, 1.0
    %v876 = vadd.f32 %v806, 1.0
    %v877 = vadd.f32 %v808, 1.0
    %v878 = vadd.f32 %v810, 1.0
    %v879 = vadd.f32 %v812, 1.0
    %v880 = vadd.f32 %v814, 1.0
    %v881 = vadd.f32 %v816, 1.0
    %v882 = vadd.f32 %v818, 1.0
    %v883 = vrcp.pop %v851
    %v884 = vrcp.pop %v852
    %v885 = vrcp.pop %v853
    %v886 = vrcp.pop %v854
    %v887 = vrcp.pop %v855
    %v888 = vrcp.pop %v856
    %v889 = vrcp.pop %v857
    %v890 = vrcp.pop %v858
    %v891 = vrcp.pop %v859
    %v892 = vrcp.pop %v860
    %v893 = vrcp.pop %v861
    %v894 = vrcp.pop %v862
    %v895 = vrcp.pop %v863
    %v896 = vrcp.pop %v864
    %v897 = vrcp.pop %v865
    %v898 = vrcp.pop %v866
    %v899 = vrcp.pop %v867
    %v900 = vrcp.pop %v868
    %v901 = vrcp.pop %v869
    %v902 = vrcp.pop %v870
    %v903 = vrcp.pop %v871
    %v904 = vrcp.pop %v872
    %v905 = vrcp.pop %v873
    %v906 = vrcp.pop %v874
    %v907 = vrcp.pop %v875
    %v908 = vrcp.pop %v876
    %v909 = vrcp.pop %v877
    %v910 = vrcp.pop %v878
    %v911 = vrcp.pop %v879
    %v912 = vrcp.pop %v880
    %v913 = vrcp.pop %v881
    %v914 = vrcp.pop %v882
    %v915 = vmul.f32 %v819, %v883
    %v916 = vmul.f32 %v820, %v884
    %v917 = vmul.f32 %v821, %v885
    %v918 = vmul.f32 %v822, %v886
    %v919 = vmul.f32 %v823, %v887
    %v920 = vmul.f32 %v824, %v888
    %v921 = vmul.f32 %v825, %v889
    %v922 = vmul.f32 %v826, %v890
    %v923 = vmul.f32 %v827, %v891
    %v924 = vmul.f32 %v828, %v892
    %v925 = vmul.f32 %v829, %v893
    %v926 = vmul.f32 %v830, %v894
    %v927 = vmul.f32 %v831, %v895
    %v928 = vmul.f32 %v832, %v896
    %v929 = vmul.f32 %v833, %v897
    %v930 = vmul.f32 %v834, %v898
    %v931 = vmul.f32 %v835, %v899
    %v932 = vmul.f32 %v836, %v900
    %v933 = vmul.f32 %v837, %v901
    %v934 = vmul.f32 %v838, %v902
    %v935 = vmul.f32 %v839, %v903
    %v936 = vmul.f32 %v840, %v904
    %v937 = vmul.f32 %v841, %v905
    %v938 = vmul.f32 %v842, %v906
    %v939 = vmul.f32 %v843, %v907
    %v940 = vmul.f32 %v844, %v908
    %v941 = vmul.f32 %v845, %v909
    %v942 = vmul.f32 %v846, %v910
    %v943 = vmul.f32 %v847, %v911
    %v944 = vmul.f32 %v848, %v912
    %v945 = vmul.f32 %v849, %v913
    %v946 = vmul.f32 %v850, %v914
    %vm947 = vcmp.ge.f32.partialorder %v659, 0.0
    %vm948 = vcmp.ge.f32.partialorder %v660, 0.0
    %vm949 = vcmp.ge.f32.partialorder %v661, 0.0
    %vm950 = vcmp.ge.f32.partialorder %v662, 0.0
    %vm951 = vcmp.ge.f32.partialorder %v663, 0.0
    %vm952 = vcmp.ge.f32.partialorder %v664, 0.0
    %vm953 = vcmp.ge.f32.partialorder %v665, 0.0
    %vm954 = vcmp.ge.f32.partialorder %v666, 0.0
    %vm955 = vcmp.ge.f32.partialorder %v667, 0.0
    %vm956 = vcmp.ge.f32.partialorder %v668, 0.0
    %vm957 = vcmp.ge.f32.partialorder %v669, 0.0
    %vm958 = vcmp.ge.f32.partialorder %v670, 0.0
    %vm959 = vcmp.ge.f32.partialorder %v671, 0.0
    %vm960 = vcmp.ge.f32.partialorder %v672, 0.0
    %vm961 = vcmp.ge.f32.partialorder %v673, 0.0
    %vm962 = vcmp.ge.f32.partialorder %v674, 0.0
    %vm963 = vcmp.ge.f32.partialorder %v675, 0.0
    %vm964 = vcmp.ge.f32.partialorder %v676, 0.0
    %vm965 = vcmp.ge.f32.partialorder %v677, 0.0
    %vm966 = vcmp.ge.f32.partialorder %v678, 0.0
    %vm967 = vcmp.ge.f32.partialorder %v679, 0.0
    %vm968 = vcmp.ge.f32.partialorder %v680, 0.0
    %vm969 = vcmp.ge.f32.partialorder %v681, 0.0
    %vm970 = vcmp.ge.f32.partialorder %v682, 0.0
    %vm971 = vcmp.ge.f32.partialorder %v683, 0.0
    %vm972 = vcmp.ge.f32.partialorder %v684, 0.0
    %vm973 = vcmp.ge.f32.partialorder %v685, 0.0
    %vm974 = vcmp.ge.f32.partialorder %v686, 0.0
    %vm975 = vcmp.ge.f32.partialorder %v687, 0.0
    %vm976 = vcmp.ge.f32.partialorder %v688, 0.0
    %vm977 = vcmp.ge.f32.partialorder %v689, 0.0
    %vm978 = vcmp.ge.f32.partialorder %v690, 0.0
    %v979 = vsub.f32 0.0, %v915
    %v980 = vsub.f32 0.0, %v916
    %v981 = vsub.f32 0.0, %v917
    %v982 = vsub.f32 0.0, %v918
    %v983 = vsub.f32 0.0, %v919
    %v984 = vsub.f32 0.0, %v920
    %v985 = vsub.f32 0.0, %v921
    %v986 = vsub.f32 0.0, %v922
    %v987 = vsub.f32 0.0, %v923
    %v988 = vsub.f32 0.0, %v924
    %v989 = vsub.f32 0.0, %v925
    %v990 = vsub.f32 0.0, %v926
    %v991 = vsub.f32 0.0, %v927
    %v992 = vsub.f32 0.0, %v928
    %v993 = vsub.f32 0.0, %v929
    %v994 = vsub.f32 0.0, %v930
    %v995 = vsub.f32 0.0, %v931
    %v996 = vsub.f32 0.0, %v932
    %v997 = vsub.f32 0.0, %v933
    %v998 = vsub.f32 0.0, %v934
    %v999 = vsub.f32 0.0, %v935
    %v1000 = vsub.f32 0.0, %v936
    %v1001 = vsub.f32 0.0, %v937
    %v1002 = vsub.f32 0.0, %v938
    %v1003 = vsub.f32 0.0, %v939
    %v1004 = vsub.f32 0.0, %v940
    %v1005 = vsub.f32 0.0, %v941
    %v1006 = vsub.f32 0.0, %v942
    %v1007 = vsub.f32 0.0, %v943
    %v1008 = vsub.f32 0.0, %v944
    %v1009 = vsub.f32 0.0, %v945
    %v1010 = vsub.f32 0.0, %v946
    %v1011 = vsel %vm947, %v915, %v979
    %v1012 = vsel %vm948, %v916, %v980
    %v1013 = vsel %vm949, %v917, %v981
    %v1014 = vsel %vm950, %v918, %v982
    %v1015 = vsel %vm951, %v919, %v983
    %v1016 = vsel %vm952, %v920, %v984
    %v1017 = vsel %vm953, %v921, %v985
    %v1018 = vsel %vm954, %v922, %v986
    %v1019 = vsel %vm955, %v923, %v987
    %v1020 = vsel %vm956, %v924, %v988
    %v1021 = vsel %vm957, %v925, %v989
    %v1022 = vsel %vm958, %v926, %v990
    %v1023 = vsel %vm959, %v927, %v991
    %v1024 = vsel %vm960, %v928, %v992
    %v1025 = vsel %vm961, %v929, %v993
    %v1026 = vsel %vm962, %v930, %v994
    %v1027 = vsel %vm963, %v931, %v995
    %v1028 = vsel %vm964, %v932, %v996
    %v1029 = vsel %vm965, %v933, %v997
    %v1030 = vsel %vm966, %v934, %v998
    %v1031 = vsel %vm967, %v935, %v999
    %v1032 = vsel %vm968, %v936, %v1000
    %v1033 = vsel %vm969, %v937, %v1001
    %v1034 = vsel %vm970, %v938, %v1002
    %v1035 = vsel %vm971, %v939, %v1003
    %v1036 = vsel %vm972, %v940, %v1004
    %v1037 = vsel %vm973, %v941, %v1005
    %v1038 = vsel %vm974, %v942, %v1006
    %v1039 = vsel %vm975, %v943, %v1007
    %v1040 = vsel %vm976, %v944, %v1008
    %v1041 = vsel %vm977, %v945, %v1009
    %v1042 = vsel %vm978, %v946, %v1010
    %v1043 = vld [vmem:[%s0 + $0x2] sm:$0x3]
    %v1044 = vperm.slane %v1043, 0
    %v1045 = vmul.f32 %v116, %v1044
    %v1046 = vmul.f32 %v121, %v1044
    %v1047 = vmul.f32 %v126, %v1044
    %v1048 = vmul.f32 %v131, %v1044
    %v1049 = vmul.f32 %v136, %v1044
    %v1050 = vmul.f32 %v141, %v1044
    %v1051 = vmul.f32 %v146, %v1044
    %v1052 = vmul.f32 %v151, %v1044
    %v1053 = vmul.f32 %v156, %v1044
    %v1054 = vmul.f32 %v161, %v1044
    %v1055 = vmul.f32 %v166, %v1044
    %v1056 = vmul.f32 %v171, %v1044
    %v1057 = vmul.f32 %v176, %v1044
    %v1058 = vmul.f32 %v181, %v1044
    %v1059 = vmul.f32 %v186, %v1044
    %v1060 = vmul.f32 %v191, %v1044
    %v1061 = vmul.f32 %v196, %v1044
    %v1062 = vmul.f32 %v201, %v1044
    %v1063 = vmul.f32 %v206, %v1044
    %v1064 = vmul.f32 %v211, %v1044
    %v1065 = vmul.f32 %v216, %v1044
    %v1066 = vmul.f32 %v221, %v1044
    %v1067 = vmul.f32 %v226, %v1044
    %v1068 = vmul.f32 %v231, %v1044
    %v1069 = vmul.f32 %v236, %v1044
    %v1070 = vmul.f32 %v241, %v1044
    %v1071 = vmul.f32 %v246, %v1044
    %v1072 = vmul.f32 %v251, %v1044
    %v1073 = vmul.f32 %v256, %v1044
    %v1074 = vmul.f32 %v261, %v1044
    %v1075 = vmul.f32 %v266, %v1044
    %v1076 = vmul.f32 %v271, %v1044
    %v1077 = vperm.slane %v1043, 1
    %v1078 = vmul.f32 %v308, %v1077
    %v1079 = vmul.f32 %v312, %v1077
    %v1080 = vmul.f32 %v316, %v1077
    %v1081 = vmul.f32 %v320, %v1077
    %v1082 = vmul.f32 %v324, %v1077
    %v1083 = vmul.f32 %v328, %v1077
    %v1084 = vmul.f32 %v332, %v1077
    %v1085 = vmul.f32 %v336, %v1077
    %v1086 = vmul.f32 %v340, %v1077
    %v1087 = vmul.f32 %v344, %v1077
    %v1088 = vmul.f32 %v348, %v1077
    %v1089 = vmul.f32 %v352, %v1077
    %v1090 = vmul.f32 %v356, %v1077
    %v1091 = vmul.f32 %v360, %v1077
    %v1092 = vmul.f32 %v364, %v1077
    %v1093 = vmul.f32 %v368, %v1077
    %v1094 = vmul.f32 %v372, %v1077
    %v1095 = vmul.f32 %v376, %v1077
    %v1096 = vmul.f32 %v380, %v1077
    %v1097 = vmul.f32 %v384, %v1077
    %v1098 = vmul.f32 %v388, %v1077
    %v1099 = vmul.f32 %v392, %v1077
    %v1100 = vmul.f32 %v396, %v1077
    %v1101 = vmul.f32 %v400, %v1077
    %v1102 = vmul.f32 %v404, %v1077
    %v1103 = vmul.f32 %v408, %v1077
    %v1104 = vmul.f32 %v412, %v1077
    %v1105 = vmul.f32 %v416, %v1077
    %v1106 = vmul.f32 %v420, %v1077
    %v1107 = vmul.f32 %v424, %v1077
    %v1108 = vmul.f32 %v428, %v1077
    %v1109 = vmul.f32 %v432, %v1077
    %v1110 = vadd.f32 %v1045, %v1078
    %v1111 = vadd.f32 %v1046, %v1079
    %v1112 = vadd.f32 %v1047, %v1080
    %v1113 = vadd.f32 %v1048, %v1081
    %v1114 = vadd.f32 %v1049, %v1082
    %v1115 = vadd.f32 %v1050, %v1083
    %v1116 = vadd.f32 %v1051, %v1084
    %v1117 = vadd.f32 %v1052, %v1085
    %v1118 = vadd.f32 %v1053, %v1086
    %v1119 = vadd.f32 %v1054, %v1087
    %v1120 = vadd.f32 %v1055, %v1088
    %v1121 = vadd.f32 %v1056, %v1089
    %v1122 = vadd.f32 %v1057, %v1090
    %v1123 = vadd.f32 %v1058, %v1091
    %v1124 = vadd.f32 %v1059, %v1092
    %v1125 = vadd.f32 %v1060, %v1093
    %v1126 = vadd.f32 %v1061, %v1094
    %v1127 = vadd.f32 %v1062, %v1095
    %v1128 = vadd.f32 %v1063, %v1096
    %v1129 = vadd.f32 %v1064, %v1097
    %v1130 = vadd.f32 %v1065, %v1098
    %v1131 = vadd.f32 %v1066, %v1099
    %v1132 = vadd.f32 %v1067, %v1100
    %v1133 = vadd.f32 %v1068, %v1101
    %v1134 = vadd.f32 %v1069, %v1102
    %v1135 = vadd.f32 %v1070, %v1103
    %v1136 = vadd.f32 %v1071, %v1104
    %v1137 = vadd.f32 %v1072, %v1105
    %v1138 = vadd.f32 %v1073, %v1106
    %v1139 = vadd.f32 %v1074, %v1107
    %v1140 = vadd.f32 %v1075, %v1108
    %v1141 = vadd.f32 %v1076, %v1109
    %v1142 = vadd.f32 %v1110, %v502
    %v1143 = vadd.f32 %v1111, %v507
    %v1144 = vadd.f32 %v1112, %v512
    %v1145 = vadd.f32 %v1113, %v517
    %v1146 = vadd.f32 %v1114, %v522
    %v1147 = vadd.f32 %v1115, %v527
    %v1148 = vadd.f32 %v1116, %v532
    %v1149 = vadd.f32 %v1117, %v537
    %v1150 = vadd.f32 %v1118, %v542
    %v1151 = vadd.f32 %v1119, %v547
    %v1152 = vadd.f32 %v1120, %v552
    %v1153 = vadd.f32 %v1121, %v557
    %v1154 = vadd.f32 %v1122, %v562
    %v1155 = vadd.f32 %v1123, %v567
    %v1156 = vadd.f32 %v1124, %v572
    %v1157 = vadd.f32 %v1125, %v577
    %v1158 = vadd.f32 %v1126, %v582
    %v1159 = vadd.f32 %v1127, %v587
    %v1160 = vadd.f32 %v1128, %v592
    %v1161 = vadd.f32 %v1129, %v597
    %v1162 = vadd.f32 %v1130, %v602
    %v1163 = vadd.f32 %v1131, %v607
    %v1164 = vadd.f32 %v1132, %v612
    %v1165 = vadd.f32 %v1133, %v617
    %v1166 = vadd.f32 %v1134, %v622
    %v1167 = vadd.f32 %v1135, %v627
    %v1168 = vadd.f32 %v1136, %v632
    %v1169 = vadd.f32 %v1137, %v637
    %v1170 = vadd.f32 %v1138, %v642
    %v1171 = vadd.f32 %v1139, %v647
    %v1172 = vadd.f32 %v1140, %v652
    %v1173 = vadd.f32 %v1141, %v657
    %v1174 = vand.u32 2147483647, %v1142
    %v1175 = vand.u32 2147483647, %v1143
    %v1176 = vand.u32 2147483647, %v1144
    %v1177 = vand.u32 2147483647, %v1145
    %v1178 = vand.u32 2147483647, %v1146
    %v1179 = vand.u32 2147483647, %v1147
    %v1180 = vand.u32 2147483647, %v1148
    %v1181 = vand.u32 2147483647, %v1149
    %v1182 = vand.u32 2147483647, %v1150
    %v1183 = vand.u32 2147483647, %v1151
    %v1184 = vand.u32 2147483647, %v1152
    %v1185 = vand.u32 2147483647, %v1153
    %v1186 = vand.u32 2147483647, %v1154
    %v1187 = vand.u32 2147483647, %v1155
    %v1188 = vand.u32 2147483647, %v1156
    %v1189 = vand.u32 2147483647, %v1157
    %v1190 = vand.u32 2147483647, %v1158
    %v1191 = vand.u32 2147483647, %v1159
    %v1192 = vand.u32 2147483647, %v1160
    %v1193 = vand.u32 2147483647, %v1161
    %v1194 = vand.u32 2147483647, %v1162
    %v1195 = vand.u32 2147483647, %v1163
    %v1196 = vand.u32 2147483647, %v1164
    %v1197 = vand.u32 2147483647, %v1165
    %v1198 = vand.u32 2147483647, %v1166
    %v1199 = vand.u32 2147483647, %v1167
    %v1200 = vand.u32 2147483647, %v1168
    %v1201 = vand.u32 2147483647, %v1169
    %v1202 = vand.u32 2147483647, %v1170
    %v1203 = vand.u32 2147483647, %v1171
    %v1204 = vand.u32 2147483647, %v1172
    %v1205 = vand.u32 2147483647, %v1173
    %v1206 = vmul.f32 %v1174, -2.0
    %v1207 = vmul.f32 %v1175, -2.0
    %v1208 = vmul.f32 %v1176, -2.0
    %v1209 = vmul.f32 %v1177, -2.0
    %v1210 = vmul.f32 %v1178, -2.0
    %v1211 = vmul.f32 %v1179, -2.0
    %v1212 = vmul.f32 %v1180, -2.0
    %v1213 = vmul.f32 %v1181, -2.0
    %v1214 = vmul.f32 %v1182, -2.0
    %v1215 = vmul.f32 %v1183, -2.0
    %v1216 = vmul.f32 %v1184, -2.0
    %v1217 = vmul.f32 %v1185, -2.0
    %v1218 = vmul.f32 %v1186, -2.0
    %v1219 = vmul.f32 %v1187, -2.0
    %v1220 = vmul.f32 %v1188, -2.0
    %v1221 = vmul.f32 %v1189, -2.0
    %v1222 = vmul.f32 %v1190, -2.0
    %v1223 = vmul.f32 %v1191, -2.0
    %v1224 = vmul.f32 %v1192, -2.0
    %v1225 = vmul.f32 %v1193, -2.0
    %v1226 = vmul.f32 %v1194, -2.0
    %v1227 = vmul.f32 %v1195, -2.0
    %v1228 = vmul.f32 %v1196, -2.0
    %v1229 = vmul.f32 %v1197, -2.0
    %v1230 = vmul.f32 %v1198, -2.0
    %v1231 = vmul.f32 %v1199, -2.0
    %v1232 = vmul.f32 %v1200, -2.0
    %v1233 = vmul.f32 %v1201, -2.0
    %v1234 = vmul.f32 %v1202, -2.0
    %v1235 = vmul.f32 %v1203, -2.0
    %v1236 = vmul.f32 %v1204, -2.0
    %v1237 = vmul.f32 %v1205, -2.0
    %v1238 = vmul.f32 %v1206, 1.442695
    %v1239 = vpow.pop %v1238
    %v1240 = vmul.f32 %v1207, 1.442695
    %v1241 = vpow.pop %v1240
    %v1242 = vmul.f32 %v1208, 1.442695
    %v1243 = vpow.pop %v1242
    %v1244 = vmul.f32 %v1209, 1.442695
    %v1245 = vpow.pop %v1244
    %v1246 = vmul.f32 %v1210, 1.442695
    %v1247 = vpow.pop %v1246
    %v1248 = vmul.f32 %v1211, 1.442695
    %v1249 = vpow.pop %v1248
    %v1250 = vmul.f32 %v1212, 1.442695
    %v1251 = vpow.pop %v1250
    %v1252 = vmul.f32 %v1213, 1.442695
    %v1253 = vpow.pop %v1252
    %v1254 = vmul.f32 %v1214, 1.442695
    %v1255 = vpow.pop %v1254
    %v1256 = vmul.f32 %v1215, 1.442695
    %v1257 = vpow.pop %v1256
    %v1258 = vmul.f32 %v1216, 1.442695
    %v1259 = vpow.pop %v1258
    %v1260 = vmul.f32 %v1217, 1.442695
    %v1261 = vpow.pop %v1260
    %v1262 = vmul.f32 %v1218, 1.442695
    %v1263 = vpow.pop %v1262
    %v1264 = vmul.f32 %v1219, 1.442695
    %v1265 = vpow.pop %v1264
    %v1266 = vmul.f32 %v1220, 1.442695
    %v1267 = vpow.pop %v1266
    %v1268 = vmul.f32 %v1221, 1.442695
    %v1269 = vpow.pop %v1268
    %v1270 = vmul.f32 %v1222, 1.442695
    %v1271 = vpow.pop %v1270
    %v1272 = vmul.f32 %v1223, 1.442695
    %v1273 = vpow.pop %v1272
    %v1274 = vmul.f32 %v1224, 1.442695
    %v1275 = vpow.pop %v1274
    %v1276 = vmul.f32 %v1225, 1.442695
    %v1277 = vpow.pop %v1276
    %v1278 = vmul.f32 %v1226, 1.442695
    %v1279 = vpow.pop %v1278
    %v1280 = vmul.f32 %v1227, 1.442695
    %v1281 = vpow.pop %v1280
    %v1282 = vmul.f32 %v1228, 1.442695
    %v1283 = vpow.pop %v1282
    %v1284 = vmul.f32 %v1229, 1.442695
    %v1285 = vpow.pop %v1284
    %v1286 = vmul.f32 %v1230, 1.442695
    %v1287 = vpow.pop %v1286
    %v1288 = vmul.f32 %v1231, 1.442695
    %v1289 = vpow.pop %v1288
    %v1290 = vmul.f32 %v1232, 1.442695
    %v1291 = vpow.pop %v1290
    %v1292 = vmul.f32 %v1233, 1.442695
    %v1293 = vpow.pop %v1292
    %v1294 = vmul.f32 %v1234, 1.442695
    %v1295 = vpow.pop %v1294
    %v1296 = vmul.f32 %v1235, 1.442695
    %v1297 = vpow.pop %v1296
    %v1298 = vmul.f32 %v1236, 1.442695
    %v1299 = vpow.pop %v1298
    %v1300 = vmul.f32 %v1237, 1.442695
    %v1301 = vpow.pop %v1300
    %v1302 = vsub.f32 1.0, %v1239
    %v1303 = vsub.f32 1.0, %v1241
    %v1304 = vsub.f32 1.0, %v1243
    %v1305 = vsub.f32 1.0, %v1245
    %v1306 = vsub.f32 1.0, %v1247
    %v1307 = vsub.f32 1.0, %v1249
    %v1308 = vsub.f32 1.0, %v1251
    %v1309 = vsub.f32 1.0, %v1253
    %v1310 = vsub.f32 1.0, %v1255
    %v1311 = vsub.f32 1.0, %v1257
    %v1312 = vsub.f32 1.0, %v1259
    %v1313 = vsub.f32 1.0, %v1261
    %v1314 = vsub.f32 1.0, %v1263
    %v1315 = vsub.f32 1.0, %v1265
    %v1316 = vsub.f32 1.0, %v1267
    %v1317 = vsub.f32 1.0, %v1269
    %v1318 = vsub.f32 1.0, %v1271
    %v1319 = vsub.f32 1.0, %v1273
    %v1320 = vsub.f32 1.0, %v1275
    %v1321 = vsub.f32 1.0, %v1277
    %v1322 = vsub.f32 1.0, %v1279
    %v1323 = vsub.f32 1.0, %v1281
    %v1324 = vsub.f32 1.0, %v1283
    %v1325 = vsub.f32 1.0, %v1285
    %v1326 = vsub.f32 1.0, %v1287
    %v1327 = vsub.f32 1.0, %v1289
    %v1328 = vsub.f32 1.0, %v1291
    %v1329 = vsub.f32 1.0, %v1293
    %v1330 = vsub.f32 1.0, %v1295
    %v1331 = vsub.f32 1.0, %v1297
    %v1332 = vsub.f32 1.0, %v1299
    %v1333 = vsub.f32 1.0, %v1301
    %v1334 = vadd.f32 %v1239, 1.0
    %v1335 = vadd.f32 %v1241, 1.0
    %v1336 = vadd.f32 %v1243, 1.0
    %v1337 = vadd.f32 %v1245, 1.0
    %v1338 = vadd.f32 %v1247, 1.0
    %v1339 = vadd.f32 %v1249, 1.0
    %v1340 = vadd.f32 %v1251, 1.0
    %v1341 = vadd.f32 %v1253, 1.0
    %v1342 = vadd.f32 %v1255, 1.0
    %v1343 = vadd.f32 %v1257, 1.0
    %v1344 = vadd.f32 %v1259, 1.0
    %v1345 = vadd.f32 %v1261, 1.0
    %v1346 = vadd.f32 %v1263, 1.0
    %v1347 = vadd.f32 %v1265, 1.0
    %v1348 = vadd.f32 %v1267, 1.0
    %v1349 = vadd.f32 %v1269, 1.0
    %v1350 = vadd.f32 %v1271, 1.0
    %v1351 = vadd.f32 %v1273, 1.0
    %v1352 = vadd.f32 %v1275, 1.0
    %v1353 = vadd.f32 %v1277, 1.0
    %v1354 = vadd.f32 %v1279, 1.0
    %v1355 = vadd.f32 %v1281, 1.0
    %v1356 = vadd.f32 %v1283, 1.0
    %v1357 = vadd.f32 %v1285, 1.0
    %v1358 = vadd.f32 %v1287, 1.0
    %v1359 = vadd.f32 %v1289, 1.0
    %v1360 = vadd.f32 %v1291, 1.0
    %v1361 = vadd.f32 %v1293, 1.0
    %v1362 = vadd.f32 %v1295, 1.0
    %v1363 = vadd.f32 %v1297, 1.0
    %v1364 = vadd.f32 %v1299, 1.0
    %v1365 = vadd.f32 %v1301, 1.0
    %v1366 = vrcp.pop %v1334
    %v1367 = vrcp.pop %v1335
    %v1368 = vrcp.pop %v1336
    %v1369 = vrcp.pop %v1337
    %v1370 = vrcp.pop %v1338
    %v1371 = vrcp.pop %v1339
    %v1372 = vrcp.pop %v1340
    %v1373 = vrcp.pop %v1341
    %v1374 = vrcp.pop %v1342
    %v1375 = vrcp.pop %v1343
    %v1376 = vrcp.pop %v1344
    %v1377 = vrcp.pop %v1345
    %v1378 = vrcp.pop %v1346
    %v1379 = vrcp.pop %v1347
    %v1380 = vrcp.pop %v1348
    %v1381 = vrcp.pop %v1349
    %v1382 = vrcp.pop %v1350
    %v1383 = vrcp.pop %v1351
    %v1384 = vrcp.pop %v1352
    %v1385 = vrcp.pop %v1353
    %v1386 = vrcp.pop %v1354
    %v1387 = vrcp.pop %v1355
    %v1388 = vrcp.pop %v1356
    %v1389 = vrcp.pop %v1357
    %v1390 = vrcp.pop %v1358
    %v1391 = vrcp.pop %v1359
    %v1392 = vrcp.pop %v1360
    %v1393 = vrcp.pop %v1361
    %v1394 = vrcp.pop %v1362
    %v1395 = vrcp.pop %v1363
    %v1396 = vrcp.pop %v1364
    %v1397 = vrcp.pop %v1365
    %v1398 = vmul.f32 %v1302, %v1366
    %v1399 = vmul.f32 %v1303, %v1367
    %v1400 = vmul.f32 %v1304, %v1368
    %v1401 = vmul.f32 %v1305, %v1369
    %v1402 = vmul.f32 %v1306, %v1370
    %v1403 = vmul.f32 %v1307, %v1371
    %v1404 = vmul.f32 %v1308, %v1372
    %v1405 = vmul.f32 %v1309, %v1373
    %v1406 = vmul.f32 %v1310, %v1374
    %v1407 = vmul.f32 %v1311, %v1375
    %v1408 = vmul.f32 %v1312, %v1376
    %v1409 = vmul.f32 %v1313, %v1377
    %v1410 = vmul.f32 %v1314, %v1378
    %v1411 = vmul.f32 %v1315, %v1379
    %v1412 = vmul.f32 %v1316, %v1380
    %v1413 = vmul.f32 %v1317, %v1381
    %v1414 = vmul.f32 %v1318, %v1382
    %v1415 = vmul.f32 %v1319, %v1383
    %v1416 = vmul.f32 %v1320, %v1384
    %v1417 = vmul.f32 %v1321, %v1385
    %v1418 = vmul.f32 %v1322, %v1386
    %v1419 = vmul.f32 %v1323, %v1387
    %v1420 = vmul.f32 %v1324, %v1388
    %v1421 = vmul.f32 %v1325, %v1389
    %v1422 = vmul.f32 %v1326, %v1390
    %v1423 = vmul.f32 %v1327, %v1391
    %v1424 = vmul.f32 %v1328, %v1392
    %v1425 = vmul.f32 %v1329, %v1393
    %v1426 = vmul.f32 %v1330, %v1394
    %v1427 = vmul.f32 %v1331, %v1395
    %v1428 = vmul.f32 %v1332, %v1396
    %v1429 = vmul.f32 %v1333, %v1397
    %vm1430 = vcmp.ge.f32.partialorder %v1142, 0.0
    %vm1431 = vcmp.ge.f32.partialorder %v1143, 0.0
    %vm1432 = vcmp.ge.f32.partialorder %v1144, 0.0
    %vm1433 = vcmp.ge.f32.partialorder %v1145, 0.0
    %vm1434 = vcmp.ge.f32.partialorder %v1146, 0.0
    %vm1435 = vcmp.ge.f32.partialorder %v1147, 0.0
    %vm1436 = vcmp.ge.f32.partialorder %v1148, 0.0
    %vm1437 = vcmp.ge.f32.partialorder %v1149, 0.0
    %vm1438 = vcmp.ge.f32.partialorder %v1150, 0.0
    %vm1439 = vcmp.ge.f32.partialorder %v1151, 0.0
    %vm1440 = vcmp.ge.f32.partialorder %v1152, 0.0
    %vm1441 = vcmp.ge.f32.partialorder %v1153, 0.0
    %vm1442 = vcmp.ge.f32.partialorder %v1154, 0.0
    %vm1443 = vcmp.ge.f32.partialorder %v1155, 0.0
    %vm1444 = vcmp.ge.f32.partialorder %v1156, 0.0
    %vm1445 = vcmp.ge.f32.partialorder %v1157, 0.0
    %vm1446 = vcmp.ge.f32.partialorder %v1158, 0.0
    %vm1447 = vcmp.ge.f32.partialorder %v1159, 0.0
    %vm1448 = vcmp.ge.f32.partialorder %v1160, 0.0
    %vm1449 = vcmp.ge.f32.partialorder %v1161, 0.0
    %vm1450 = vcmp.ge.f32.partialorder %v1162, 0.0
    %vm1451 = vcmp.ge.f32.partialorder %v1163, 0.0
    %vm1452 = vcmp.ge.f32.partialorder %v1164, 0.0
    %vm1453 = vcmp.ge.f32.partialorder %v1165, 0.0
    %vm1454 = vcmp.ge.f32.partialorder %v1166, 0.0
    %vm1455 = vcmp.ge.f32.partialorder %v1167, 0.0
    %vm1456 = vcmp.ge.f32.partialorder %v1168, 0.0
    %vm1457 = vcmp.ge.f32.partialorder %v1169, 0.0
    %vm1458 = vcmp.ge.f32.partialorder %v1170, 0.0
    %vm1459 = vcmp.ge.f32.partialorder %v1171, 0.0
    %vm1460 = vcmp.ge.f32.partialorder %v1172, 0.0
    %vm1461 = vcmp.ge.f32.partialorder %v1173, 0.0
    %v1462 = vsub.f32 0.0, %v1398
    %v1463 = vsub.f32 0.0, %v1399
    %v1464 = vsub.f32 0.0, %v1400
    %v1465 = vsub.f32 0.0, %v1401
    %v1466 = vsub.f32 0.0, %v1402
    %v1467 = vsub.f32 0.0, %v1403
    %v1468 = vsub.f32 0.0, %v1404
    %v1469 = vsub.f32 0.0, %v1405
    %v1470 = vsub.f32 0.0, %v1406
    %v1471 = vsub.f32 0.0, %v1407
    %v1472 = vsub.f32 0.0, %v1408
    %v1473 = vsub.f32 0.0, %v1409
    %v1474 = vsub.f32 0.0, %v1410
    %v1475 = vsub.f32 0.0, %v1411
    %v1476 = vsub.f32 0.0, %v1412
    %v1477 = vsub.f32 0.0, %v1413
    %v1478 = vsub.f32 0.0, %v1414
    %v1479 = vsub.f32 0.0, %v1415
    %v1480 = vsub.f32 0.0, %v1416
    %v1481 = vsub.f32 0.0, %v1417
    %v1482 = vsub.f32 0.0, %v1418
    %v1483 = vsub.f32 0.0, %v1419
    %v1484 = vsub.f32 0.0, %v1420
    %v1485 = vsub.f32 0.0, %v1421
    %v1486 = vsub.f32 0.0, %v1422
    %v1487 = vsub.f32 0.0, %v1423
    %v1488 = vsub.f32 0.0, %v1424
    %v1489 = vsub.f32 0.0, %v1425
    %v1490 = vsub.f32 0.0, %v1426
    %v1491 = vsub.f32 0.0, %v1427
    %v1492 = vsub.f32 0.0, %v1428
    %v1493 = vsub.f32 0.0, %v1429
    %v1494 = vsel %vm1430, %v1398, %v1462
    %v1495 = vsel %vm1431, %v1399, %v1463
    %v1496 = vsel %vm1432, %v1400, %v1464
    %v1497 = vsel %vm1433, %v1401, %v1465
    %v1498 = vsel %vm1434, %v1402, %v1466
    %v1499 = vsel %vm1435, %v1403, %v1467
    %v1500 = vsel %vm1436, %v1404, %v1468
    %v1501 = vsel %vm1437, %v1405, %v1469
    %v1502 = vsel %vm1438, %v1406, %v1470
    %v1503 = vsel %vm1439, %v1407, %v1471
    %v1504 = vsel %vm1440, %v1408, %v1472
    %v1505 = vsel %vm1441, %v1409, %v1473
    %v1506 = vsel %vm1442, %v1410, %v1474
    %v1507 = vsel %vm1443, %v1411, %v1475
    %v1508 = vsel %vm1444, %v1412, %v1476
    %v1509 = vsel %vm1445, %v1413, %v1477
    %v1510 = vsel %vm1446, %v1414, %v1478
    %v1511 = vsel %vm1447, %v1415, %v1479
    %v1512 = vsel %vm1448, %v1416, %v1480
    %v1513 = vsel %vm1449, %v1417, %v1481
    %v1514 = vsel %vm1450, %v1418, %v1482
    %v1515 = vsel %vm1451, %v1419, %v1483
    %v1516 = vsel %vm1452, %v1420, %v1484
    %v1517 = vsel %vm1453, %v1421, %v1485
    %v1518 = vsel %vm1454, %v1422, %v1486
    %v1519 = vsel %vm1455, %v1423, %v1487
    %v1520 = vsel %vm1456, %v1424, %v1488
    %v1521 = vsel %vm1457, %v1425, %v1489
    %v1522 = vsel %vm1458, %v1426, %v1490
    %v1523 = vsel %vm1459, %v1427, %v1491
    %v1524 = vsel %vm1460, %v1428, %v1492
    %v1525 = vsel %vm1461, %v1429, %v1493
    %v1526 = vld [vmem:[%s3] sm:$0xff]
    %v1527 = vld [vmem:[%s3 + $0x8] sm:$0xff]
    %v1528 = vld [vmem:[%s3 + $0x10] sm:$0xff]
    %v1529 = vld [vmem:[%s3 + $0x18] sm:$0xff]
    %v1530 = vld [vmem:[%s3 + $0x20] sm:$0xff]
    %v1531 = vld [vmem:[%s3 + $0x28] sm:$0xff]
    %v1532 = vld [vmem:[%s3 + $0x30] sm:$0xff]
    %v1533 = vld [vmem:[%s3 + $0x38] sm:$0xff]
    %v1534 = vld [vmem:[%s3 + $0x40] sm:$0xff]
    %v1535 = vld [vmem:[%s3 + $0x48] sm:$0xff]
    %v1536 = vld [vmem:[%s3 + $0x50] sm:$0xff]
    %v1537 = vld [vmem:[%s3 + $0x58] sm:$0xff]
    %v1538 = vld [vmem:[%s3 + $0x60] sm:$0xff]
    %v1539 = vld [vmem:[%s3 + $0x68] sm:$0xff]
    %v1540 = vld [vmem:[%s3 + $0x70] sm:$0xff]
    %v1541 = vld [vmem:[%s3 + $0x78] sm:$0xff]
    %v1542 = vpack.c.bf16 %v1012, %v1011
    %v1543 = vpack.c.bf16 %v1014, %v1013
    %v1544 = vpack.c.bf16 %v1016, %v1015
    %v1545 = vpack.c.bf16 %v1018, %v1017
    %v1546 = vpack.c.bf16 %v1020, %v1019
    %v1547 = vpack.c.bf16 %v1022, %v1021
    %v1548 = vpack.c.bf16 %v1024, %v1023
    %v1549 = vpack.c.bf16 %v1026, %v1025
    %v1550 = vpack.c.bf16 %v1028, %v1027
    %v1551 = vpack.c.bf16 %v1030, %v1029
    %v1552 = vpack.c.bf16 %v1032, %v1031
    %v1553 = vpack.c.bf16 %v1034, %v1033
    %v1554 = vpack.c.bf16 %v1036, %v1035
    %v1555 = vpack.c.bf16 %v1038, %v1037
    %v1556 = vpack.c.bf16 %v1040, %v1039
    %v1557 = vpack.c.bf16 %v1042, %v1041
    %v1558 = vld [vmem:[%s4] sm:$0xff]
    %v1559 = vld [vmem:[%s4 + $0x8] sm:$0xff]
    %v1560 = vld [vmem:[%s4 + $0x10] sm:$0xff]
    %v1561 = vld [vmem:[%s4 + $0x18] sm:$0xff]
    %v1562 = vld [vmem:[%s4 + $0x20] sm:$0xff]
    %v1563 = vld [vmem:[%s4 + $0x28] sm:$0xff]
    %v1564 = vld [vmem:[%s4 + $0x30] sm:$0xff]
    %v1565 = vld [vmem:[%s4 + $0x38] sm:$0xff]
    %v1566 = vld [vmem:[%s4 + $0x40] sm:$0xff]
    %v1567 = vld [vmem:[%s4 + $0x48] sm:$0xff]
    %v1568 = vld [vmem:[%s4 + $0x50] sm:$0xff]
    %v1569 = vld [vmem:[%s4 + $0x58] sm:$0xff]
    %v1570 = vld [vmem:[%s4 + $0x60] sm:$0xff]
    %v1571 = vld [vmem:[%s4 + $0x68] sm:$0xff]
    %v1572 = vld [vmem:[%s4 + $0x70] sm:$0xff]
    %v1573 = vld [vmem:[%s4 + $0x78] sm:$0xff]
    %1575 = vset.pattern.permute.xlu0 0
    %1576 = vperm.xlu0 %1575, %v1558
    %v1577 = vpop.permute.xlu0 %1576
    %1580 = vset.pattern.permute.xlu0 0
    %1581 = vperm.xlu0 %1580, %v1559
    %v1582 = vpop.permute.xlu0 %1581
    %1585 = vset.pattern.permute.xlu0 0
    %1586 = vperm.xlu0 %1585, %v1560
    %v1587 = vpop.permute.xlu0 %1586
    %1590 = vset.pattern.permute.xlu0 0
    %1591 = vperm.xlu0 %1590, %v1561
    %v1592 = vpop.permute.xlu0 %1591
    %1595 = vset.pattern.permute.xlu0 0
    %1596 = vperm.xlu0 %1595, %v1562
    %v1597 = vpop.permute.xlu0 %1596
    %1600 = vset.pattern.permute.xlu0 0
    %1601 = vperm.xlu0 %1600, %v1563
    %v1602 = vpop.permute.xlu0 %1601
    %1605 = vset.pattern.permute.xlu0 0
    %1606 = vperm.xlu0 %1605, %v1564
    %v1607 = vpop.permute.xlu0 %1606
    %1610 = vset.pattern.permute.xlu0 0
    %1611 = vperm.xlu0 %1610, %v1565
    %v1612 = vpop.permute.xlu0 %1611
    %1615 = vset.pattern.permute.xlu0 0
    %1616 = vperm.xlu0 %1615, %v1566
    %v1617 = vpop.permute.xlu0 %1616
    %1620 = vset.pattern.permute.xlu0 0
    %1621 = vperm.xlu0 %1620, %v1567
    %v1622 = vpop.permute.xlu0 %1621
    %1625 = vset.pattern.permute.xlu0 0
    %1626 = vperm.xlu0 %1625, %v1568
    %v1627 = vpop.permute.xlu0 %1626
    %1630 = vset.pattern.permute.xlu0 0
    %1631 = vperm.xlu0 %1630, %v1569
    %v1632 = vpop.permute.xlu0 %1631
    %1635 = vset.pattern.permute.xlu0 0
    %1636 = vperm.xlu0 %1635, %v1570
    %v1637 = vpop.permute.xlu0 %1636
    %1640 = vset.pattern.permute.xlu0 0
    %1641 = vperm.xlu0 %1640, %v1571
    %v1642 = vpop.permute.xlu0 %1641
    %1645 = vset.pattern.permute.xlu0 0
    %1646 = vperm.xlu0 %1645, %v1572
    %v1647 = vpop.permute.xlu0 %1646
    %1650 = vset.pattern.permute.xlu0 0
    %1651 = vperm.xlu0 %1650, %v1573
    %v1652 = vpop.permute.xlu0 %1651
    %v1670 = vunpack.c.l.b16 %v1526
    %v1671 = vunpack.c.h.b16 %v1526
    %v1672 = vunpack.c.l.b16 %v1527
    %v1673 = vunpack.c.h.b16 %v1527
    %v1674 = vunpack.c.l.b16 %v1528
    %v1675 = vunpack.c.h.b16 %v1528
    %v1676 = vunpack.c.l.b16 %v1529
    %v1677 = vunpack.c.h.b16 %v1529
    %v1678 = vunpack.c.l.b16 %v1530
    %v1679 = vunpack.c.h.b16 %v1530
    %v1680 = vunpack.c.l.b16 %v1531
    %v1681 = vunpack.c.h.b16 %v1531
    %v1682 = vunpack.c.l.b16 %v1532
    %v1683 = vunpack.c.h.b16 %v1532
    %v1684 = vunpack.c.l.b16 %v1533
    %v1685 = vunpack.c.h.b16 %v1533
    %v1686 = vunpack.c.l.b16 %v1534
    %v1687 = vunpack.c.h.b16 %v1534
    %v1688 = vunpack.c.l.b16 %v1535
    %v1689 = vunpack.c.h.b16 %v1535
    %v1690 = vunpack.c.l.b16 %v1536
    %v1691 = vunpack.c.h.b16 %v1536
    %v1692 = vunpack.c.l.b16 %v1537
    %v1693 = vunpack.c.h.b16 %v1537
    %v1694 = vunpack.c.l.b16 %v1538
    %v1695 = vunpack.c.h.b16 %v1538
    %v1696 = vunpack.c.l.b16 %v1539
    %v1697 = vunpack.c.h.b16 %v1539
    %v1698 = vunpack.c.l.b16 %v1540
    %v1699 = vunpack.c.h.b16 %v1540
    %v1700 = vunpack.c.l.b16 %v1541
    %v1701 = vunpack.c.h.b16 %v1541
    %v1702 = vpack.c.b16 %v1672, %v1670
    %v1703 = vpack.c.b16 %v1673, %v1671
    %v1704 = vpack.c.b16 %v1676, %v1674
    %v1705 = vpack.c.b16 %v1677, %v1675
    %v1706 = vpack.c.b16 %v1680, %v1678
    %v1707 = vpack.c.b16 %v1681, %v1679
    %v1708 = vpack.c.b16 %v1684, %v1682
    %v1709 = vpack.c.b16 %v1685, %v1683
    %v1710 = vpack.c.b16 %v1688, %v1686
    %v1711 = vpack.c.b16 %v1689, %v1687
    %v1712 = vpack.c.b16 %v1692, %v1690
    %v1713 = vpack.c.b16 %v1693, %v1691
    %v1714 = vpack.c.b16 %v1696, %v1694
    %v1715 = vpack.c.b16 %v1697, %v1695
    %v1716 = vpack.c.b16 %v1700, %v1698
    %v1717 = vpack.c.b16 %v1701, %v1699
    %1734 = vmatpush.bf16.msra.mxu0 %v1549
    %1735 = vmatpush.bf16.msra.mxu0 %v1548
    %1736 = vmatpush.bf16.msra.mxu0 %v1547
    %1737 = vmatpush.bf16.msra.mxu0 %v1546
    %1738 = vmatpush.bf16.msra.mxu0 %v1545
    %1739 = vmatpush.bf16.msra.mxu0 %v1544
    %1740 = vmatpush.bf16.msra.mxu0 %v1543
    %1741 = vmatpush.bf16.msra.mxu0 %v1542
    %1742 = vmatmul.bf16.gmra.mxu0 %v1702
    %v1743 = vpop.f32.mrf.mxu0
    %v1744 = vadd.f32 %v1577, %v1743
    %v1745 = vpop.f32.mrf.mxu0
    %v1746 = vadd.f32 %v1582, %v1745
    %1747 = vmatmul.bf16.gmra.mxu0 %v1704
    %v1748 = vpop.f32.mrf.mxu0
    %v1749 = vadd.f32 %v1587, %v1748
    %v1750 = vpop.f32.mrf.mxu0
    %v1751 = vadd.f32 %v1592, %v1750
    %1752 = vmatmul.bf16.gmra.mxu0 %v1706
    %v1753 = vpop.f32.mrf.mxu0
    %v1754 = vadd.f32 %v1597, %v1753
    %v1755 = vpop.f32.mrf.mxu0
    %v1756 = vadd.f32 %v1602, %v1755
    %1757 = vmatmul.bf16.gmra.mxu0 %v1708
    %v1758 = vpop.f32.mrf.mxu0
    %v1759 = vadd.f32 %v1607, %v1758
    %v1760 = vpop.f32.mrf.mxu0
    %v1761 = vadd.f32 %v1612, %v1760
    %1762 = vmatmul.bf16.gmra.mxu0 %v1710
    %v1763 = vpop.f32.mrf.mxu0
    %v1764 = vadd.f32 %v1617, %v1763
    %v1765 = vpop.f32.mrf.mxu0
    %v1766 = vadd.f32 %v1622, %v1765
    %1767 = vmatmul.bf16.gmra.mxu0 %v1712
    %v1768 = vpop.f32.mrf.mxu0
    %v1769 = vadd.f32 %v1627, %v1768
    %v1770 = vpop.f32.mrf.mxu0
    %v1771 = vadd.f32 %v1632, %v1770
    %1772 = vmatmul.bf16.gmra.mxu0 %v1714
    %v1773 = vpop.f32.mrf.mxu0
    %v1774 = vadd.f32 %v1637, %v1773
    %v1775 = vpop.f32.mrf.mxu0
    %v1776 = vadd.f32 %v1642, %v1775
    %1777 = vmatmul.bf16.gmra.mxu0 %v1716
    %v1778 = vpop.f32.mrf.mxu0
    %v1779 = vadd.f32 %v1647, %v1778
    %v1780 = vpop.f32.mrf.mxu0
    %v1781 = vadd.f32 %v1652, %v1780
    %1782 = vdwg.mxu0
    %1783 = vmatpush.bf16.msra.mxu0 %v1557
    %1784 = vmatpush.bf16.msra.mxu0 %v1556
    %1785 = vmatpush.bf16.msra.mxu0 %v1555
    %1786 = vmatpush.bf16.msra.mxu0 %v1554
    %1787 = vmatpush.bf16.msra.mxu0 %v1553
    %1788 = vmatpush.bf16.msra.mxu0 %v1552
    %1789 = vmatpush.bf16.msra.mxu0 %v1551
    %1790 = vmatpush.bf16.msra.mxu0 %v1550
    %1791 = vmatmul.bf16.gmra.mxu0 %v1703
    %v1792 = vpop.f32.mrf.mxu0
    %v1793 = vadd.f32 %v1744, %v1792
    %v1794 = vpop.f32.mrf.mxu0
    %v1795 = vadd.f32 %v1746, %v1794
    %1796 = vmatmul.bf16.gmra.mxu0 %v1705
    %v1797 = vpop.f32.mrf.mxu0
    %v1798 = vadd.f32 %v1749, %v1797
    %v1799 = vpop.f32.mrf.mxu0
    %v1800 = vadd.f32 %v1751, %v1799
    %1801 = vmatmul.bf16.gmra.mxu0 %v1707
    %v1802 = vpop.f32.mrf.mxu0
    %v1803 = vadd.f32 %v1754, %v1802
    %v1804 = vpop.f32.mrf.mxu0
    %v1805 = vadd.f32 %v1756, %v1804
    %1806 = vmatmul.bf16.gmra.mxu0 %v1709
    %v1807 = vpop.f32.mrf.mxu0
    %v1808 = vadd.f32 %v1759, %v1807
    %v1809 = vpop.f32.mrf.mxu0
    %v1810 = vadd.f32 %v1761, %v1809
    %1811 = vmatmul.bf16.gmra.mxu0 %v1711
    %v1812 = vpop.f32.mrf.mxu0
    %v1813 = vadd.f32 %v1764, %v1812
    %v1814 = vpop.f32.mrf.mxu0
    %v1815 = vadd.f32 %v1766, %v1814
    %1816 = vmatmul.bf16.gmra.mxu0 %v1713
    %v1817 = vpop.f32.mrf.mxu0
    %v1818 = vadd.f32 %v1769, %v1817
    %v1819 = vpop.f32.mrf.mxu0
    %v1820 = vadd.f32 %v1771, %v1819
    %1821 = vmatmul.bf16.gmra.mxu0 %v1715
    %v1822 = vpop.f32.mrf.mxu0
    %v1823 = vadd.f32 %v1774, %v1822
    %v1824 = vpop.f32.mrf.mxu0
    %v1825 = vadd.f32 %v1776, %v1824
    %1826 = vmatmul.bf16.gmra.mxu0 %v1717
    %v1827 = vpop.f32.mrf.mxu0
    %v1828 = vadd.f32 %v1779, %v1827
    %v1829 = vpop.f32.mrf.mxu0
    %v1830 = vadd.f32 %v1781, %v1829
    %1831 = vdwg.mxu0
    %v1832 = vand.u32 2147483647, %v1793
    %v1833 = vand.u32 2147483647, %v1795
    %v1834 = vand.u32 2147483647, %v1798
    %v1835 = vand.u32 2147483647, %v1800
    %v1836 = vand.u32 2147483647, %v1803
    %v1837 = vand.u32 2147483647, %v1805
    %v1838 = vand.u32 2147483647, %v1808
    %v1839 = vand.u32 2147483647, %v1810
    %v1840 = vand.u32 2147483647, %v1813
    %v1841 = vand.u32 2147483647, %v1815
    %v1842 = vand.u32 2147483647, %v1818
    %v1843 = vand.u32 2147483647, %v1820
    %v1844 = vand.u32 2147483647, %v1823
    %v1845 = vand.u32 2147483647, %v1825
    %v1846 = vand.u32 2147483647, %v1828
    %v1847 = vand.u32 2147483647, %v1830
    %v1848 = vmul.f32 %v1832, -2.0
    %v1849 = vmul.f32 %v1833, -2.0
    %v1850 = vmul.f32 %v1834, -2.0
    %v1851 = vmul.f32 %v1835, -2.0
    %v1852 = vmul.f32 %v1836, -2.0
    %v1853 = vmul.f32 %v1837, -2.0
    %v1854 = vmul.f32 %v1838, -2.0
    %v1855 = vmul.f32 %v1839, -2.0
    %v1856 = vmul.f32 %v1840, -2.0
    %v1857 = vmul.f32 %v1841, -2.0
    %v1858 = vmul.f32 %v1842, -2.0
    %v1859 = vmul.f32 %v1843, -2.0
    %v1860 = vmul.f32 %v1844, -2.0
    %v1861 = vmul.f32 %v1845, -2.0
    %v1862 = vmul.f32 %v1846, -2.0
    %v1863 = vmul.f32 %v1847, -2.0
    %v1864 = vmul.f32 %v1848, 1.442695
    %v1865 = vpow.pop %v1864
    %v1866 = vmul.f32 %v1849, 1.442695
    %v1867 = vpow.pop %v1866
    %v1868 = vmul.f32 %v1850, 1.442695
    %v1869 = vpow.pop %v1868
    %v1870 = vmul.f32 %v1851, 1.442695
    %v1871 = vpow.pop %v1870
    %v1872 = vmul.f32 %v1852, 1.442695
    %v1873 = vpow.pop %v1872
    %v1874 = vmul.f32 %v1853, 1.442695
    %v1875 = vpow.pop %v1874
    %v1876 = vmul.f32 %v1854, 1.442695
    %v1877 = vpow.pop %v1876
    %v1878 = vmul.f32 %v1855, 1.442695
    %v1879 = vpow.pop %v1878
    %v1880 = vmul.f32 %v1856, 1.442695
    %v1881 = vpow.pop %v1880
    %v1882 = vmul.f32 %v1857, 1.442695
    %v1883 = vpow.pop %v1882
    %v1884 = vmul.f32 %v1858, 1.442695
    %v1885 = vpow.pop %v1884
    %v1886 = vmul.f32 %v1859, 1.442695
    %v1887 = vpow.pop %v1886
    %v1888 = vmul.f32 %v1860, 1.442695
    %v1889 = vpow.pop %v1888
    %v1890 = vmul.f32 %v1861, 1.442695
    %v1891 = vpow.pop %v1890
    %v1892 = vmul.f32 %v1862, 1.442695
    %v1893 = vpow.pop %v1892
    %v1894 = vmul.f32 %v1863, 1.442695
    %v1895 = vpow.pop %v1894
    %v1896 = vsub.f32 1.0, %v1865
    %v1897 = vsub.f32 1.0, %v1867
    %v1898 = vsub.f32 1.0, %v1869
    %v1899 = vsub.f32 1.0, %v1871
    %v1900 = vsub.f32 1.0, %v1873
    %v1901 = vsub.f32 1.0, %v1875
    %v1902 = vsub.f32 1.0, %v1877
    %v1903 = vsub.f32 1.0, %v1879
    %v1904 = vsub.f32 1.0, %v1881
    %v1905 = vsub.f32 1.0, %v1883
    %v1906 = vsub.f32 1.0, %v1885
    %v1907 = vsub.f32 1.0, %v1887
    %v1908 = vsub.f32 1.0, %v1889
    %v1909 = vsub.f32 1.0, %v1891
    %v1910 = vsub.f32 1.0, %v1893
    %v1911 = vsub.f32 1.0, %v1895
    %v1912 = vadd.f32 %v1865, 1.0
    %v1913 = vadd.f32 %v1867, 1.0
    %v1914 = vadd.f32 %v1869, 1.0
    %v1915 = vadd.f32 %v1871, 1.0
    %v1916 = vadd.f32 %v1873, 1.0
    %v1917 = vadd.f32 %v1875, 1.0
    %v1918 = vadd.f32 %v1877, 1.0
    %v1919 = vadd.f32 %v1879, 1.0
    %v1920 = vadd.f32 %v1881, 1.0
    %v1921 = vadd.f32 %v1883, 1.0
    %v1922 = vadd.f32 %v1885, 1.0
    %v1923 = vadd.f32 %v1887, 1.0
    %v1924 = vadd.f32 %v1889, 1.0
    %v1925 = vadd.f32 %v1891, 1.0
    %v1926 = vadd.f32 %v1893, 1.0
    %v1927 = vadd.f32 %v1895, 1.0
    %v1928 = vrcp.pop %v1912
    %v1929 = vrcp.pop %v1913
    %v1930 = vrcp.pop %v1914
    %v1931 = vrcp.pop %v1915
    %v1932 = vrcp.pop %v1916
    %v1933 = vrcp.pop %v1917
    %v1934 = vrcp.pop %v1918
    %v1935 = vrcp.pop %v1919
    %v1936 = vrcp.pop %v1920
    %v1937 = vrcp.pop %v1921
    %v1938 = vrcp.pop %v1922
    %v1939 = vrcp.pop %v1923
    %v1940 = vrcp.pop %v1924
    %v1941 = vrcp.pop %v1925
    %v1942 = vrcp.pop %v1926
    %v1943 = vrcp.pop %v1927
    %v1944 = vmul.f32 %v1896, %v1928
    %v1945 = vmul.f32 %v1897, %v1929
    %v1946 = vmul.f32 %v1898, %v1930
    %v1947 = vmul.f32 %v1899, %v1931
    %v1948 = vmul.f32 %v1900, %v1932
    %v1949 = vmul.f32 %v1901, %v1933
    %v1950 = vmul.f32 %v1902, %v1934
    %v1951 = vmul.f32 %v1903, %v1935
    %v1952 = vmul.f32 %v1904, %v1936
    %v1953 = vmul.f32 %v1905, %v1937
    %v1954 = vmul.f32 %v1906, %v1938
    %v1955 = vmul.f32 %v1907, %v1939
    %v1956 = vmul.f32 %v1908, %v1940
    %v1957 = vmul.f32 %v1909, %v1941
    %v1958 = vmul.f32 %v1910, %v1942
    %v1959 = vmul.f32 %v1911, %v1943
    %vm1960 = vcmp.ge.f32.partialorder %v1793, 0.0
    %vm1961 = vcmp.ge.f32.partialorder %v1795, 0.0
    %vm1962 = vcmp.ge.f32.partialorder %v1798, 0.0
    %vm1963 = vcmp.ge.f32.partialorder %v1800, 0.0
    %vm1964 = vcmp.ge.f32.partialorder %v1803, 0.0
    %vm1965 = vcmp.ge.f32.partialorder %v1805, 0.0
    %vm1966 = vcmp.ge.f32.partialorder %v1808, 0.0
    %vm1967 = vcmp.ge.f32.partialorder %v1810, 0.0
    %vm1968 = vcmp.ge.f32.partialorder %v1813, 0.0
    %vm1969 = vcmp.ge.f32.partialorder %v1815, 0.0
    %vm1970 = vcmp.ge.f32.partialorder %v1818, 0.0
    %vm1971 = vcmp.ge.f32.partialorder %v1820, 0.0
    %vm1972 = vcmp.ge.f32.partialorder %v1823, 0.0
    %vm1973 = vcmp.ge.f32.partialorder %v1825, 0.0
    %vm1974 = vcmp.ge.f32.partialorder %v1828, 0.0
    %vm1975 = vcmp.ge.f32.partialorder %v1830, 0.0
    %v1976 = vsub.f32 0.0, %v1944
    %v1977 = vsub.f32 0.0, %v1945
    %v1978 = vsub.f32 0.0, %v1946
    %v1979 = vsub.f32 0.0, %v1947
    %v1980 = vsub.f32 0.0, %v1948
    %v1981 = vsub.f32 0.0, %v1949
    %v1982 = vsub.f32 0.0, %v1950
    %v1983 = vsub.f32 0.0, %v1951
    %v1984 = vsub.f32 0.0, %v1952
    %v1985 = vsub.f32 0.0, %v1953
    %v1986 = vsub.f32 0.0, %v1954
    %v1987 = vsub.f32 0.0, %v1955
    %v1988 = vsub.f32 0.0, %v1956
    %v1989 = vsub.f32 0.0, %v1957
    %v1990 = vsub.f32 0.0, %v1958
    %v1991 = vsub.f32 0.0, %v1959
    %v1992 = vsel %vm1960, %v1944, %v1976
    %v1993 = vsel %vm1961, %v1945, %v1977
    %v1994 = vsel %vm1962, %v1946, %v1978
    %v1995 = vsel %vm1963, %v1947, %v1979
    %v1996 = vsel %vm1964, %v1948, %v1980
    %v1997 = vsel %vm1965, %v1949, %v1981
    %v1998 = vsel %vm1966, %v1950, %v1982
    %v1999 = vsel %vm1967, %v1951, %v1983
    %v2000 = vsel %vm1968, %v1952, %v1984
    %v2001 = vsel %vm1969, %v1953, %v1985
    %v2002 = vsel %vm1970, %v1954, %v1986
    %v2003 = vsel %vm1971, %v1955, %v1987
    %v2004 = vsel %vm1972, %v1956, %v1988
    %v2005 = vsel %vm1973, %v1957, %v1989
    %v2006 = vsel %vm1974, %v1958, %v1990
    %v2007 = vsel %vm1975, %v1959, %v1991
    %v2008 = vpack.c.bf16 %v1495, %v1494
    %v2009 = vpack.c.bf16 %v1497, %v1496
    %v2010 = vpack.c.bf16 %v1499, %v1498
    %v2011 = vpack.c.bf16 %v1501, %v1500
    %v2012 = vpack.c.bf16 %v1503, %v1502
    %v2013 = vpack.c.bf16 %v1505, %v1504
    %v2014 = vpack.c.bf16 %v1507, %v1506
    %v2015 = vpack.c.bf16 %v1509, %v1508
    %v2016 = vpack.c.bf16 %v1511, %v1510
    %v2017 = vpack.c.bf16 %v1513, %v1512
    %v2018 = vpack.c.bf16 %v1515, %v1514
    %v2019 = vpack.c.bf16 %v1517, %v1516
    %v2020 = vpack.c.bf16 %v1519, %v1518
    %v2021 = vpack.c.bf16 %v1521, %v1520
    %v2022 = vpack.c.bf16 %v1523, %v1522
    %v2023 = vpack.c.bf16 %v1525, %v1524
    %2024 = vmatpush.bf16.msra.mxu0 %v2015
    %2025 = vmatpush.bf16.msra.mxu0 %v2014
    %2026 = vmatpush.bf16.msra.mxu0 %v2013
    %2027 = vmatpush.bf16.msra.mxu0 %v2012
    %2028 = vmatpush.bf16.msra.mxu0 %v2011
    %2029 = vmatpush.bf16.msra.mxu0 %v2010
    %2030 = vmatpush.bf16.msra.mxu0 %v2009
    %2031 = vmatpush.bf16.msra.mxu0 %v2008
    %2032 = vmatmul.bf16.gmra.mxu0 %v1702
    %v2033 = vpop.f32.mrf.mxu0
    %v2034 = vadd.f32 %v1577, %v2033
    %v2035 = vpop.f32.mrf.mxu0
    %v2036 = vadd.f32 %v1582, %v2035
    %2037 = vmatmul.bf16.gmra.mxu0 %v1704
    %v2038 = vpop.f32.mrf.mxu0
    %v2039 = vadd.f32 %v1587, %v2038
    %v2040 = vpop.f32.mrf.mxu0
    %v2041 = vadd.f32 %v1592, %v2040
    %2042 = vmatmul.bf16.gmra.mxu0 %v1706
    %v2043 = vpop.f32.mrf.mxu0
    %v2044 = vadd.f32 %v1597, %v2043
    %v2045 = vpop.f32.mrf.mxu0
    %v2046 = vadd.f32 %v1602, %v2045
    %2047 = vmatmul.bf16.gmra.mxu0 %v1708
    %v2048 = vpop.f32.mrf.mxu0
    %v2049 = vadd.f32 %v1607, %v2048
    %v2050 = vpop.f32.mrf.mxu0
    %v2051 = vadd.f32 %v1612, %v2050
    %2052 = vmatmul.bf16.gmra.mxu0 %v1710
    %v2053 = vpop.f32.mrf.mxu0
    %v2054 = vadd.f32 %v1617, %v2053
    %v2055 = vpop.f32.mrf.mxu0
    %v2056 = vadd.f32 %v1622, %v2055
    %2057 = vmatmul.bf16.gmra.mxu0 %v1712
    %v2058 = vpop.f32.mrf.mxu0
    %v2059 = vadd.f32 %v1627, %v2058
    %v2060 = vpop.f32.mrf.mxu0
    %v2061 = vadd.f32 %v1632, %v2060
    %2062 = vmatmul.bf16.gmra.mxu0 %v1714
    %v2063 = vpop.f32.mrf.mxu0
    %v2064 = vadd.f32 %v1637, %v2063
    %v2065 = vpop.f32.mrf.mxu0
    %v2066 = vadd.f32 %v1642, %v2065
    %2067 = vmatmul.bf16.gmra.mxu0 %v1716
    %v2068 = vpop.f32.mrf.mxu0
    %v2069 = vadd.f32 %v1647, %v2068
    %v2070 = vpop.f32.mrf.mxu0
    %v2071 = vadd.f32 %v1652, %v2070
    %2072 = vdwg.mxu0
    %2073 = vmatpush.bf16.msra.mxu0 %v2023
    %2074 = vmatpush.bf16.msra.mxu0 %v2022
    %2075 = vmatpush.bf16.msra.mxu0 %v2021
    %2076 = vmatpush.bf16.msra.mxu0 %v2020
    %2077 = vmatpush.bf16.msra.mxu0 %v2019
    %2078 = vmatpush.bf16.msra.mxu0 %v2018
    %2079 = vmatpush.bf16.msra.mxu0 %v2017
    %2080 = vmatpush.bf16.msra.mxu0 %v2016
    %2081 = vmatmul.bf16.gmra.mxu0 %v1703
    %v2082 = vpop.f32.mrf.mxu0
    %v2083 = vadd.f32 %v2034, %v2082
    %v2084 = vpop.f32.mrf.mxu0
    %v2085 = vadd.f32 %v2036, %v2084
    %2086 = vmatmul.bf16.gmra.mxu0 %v1705
    %v2087 = vpop.f32.mrf.mxu0
    %v2088 = vadd.f32 %v2039, %v2087
    %v2089 = vpop.f32.mrf.mxu0
    %v2090 = vadd.f32 %v2041, %v2089
    %2091 = vmatmul.bf16.gmra.mxu0 %v1707
    %v2092 = vpop.f32.mrf.mxu0
    %v2093 = vadd.f32 %v2044, %v2092
    %v2094 = vpop.f32.mrf.mxu0
    %v2095 = vadd.f32 %v2046, %v2094
    %2096 = vmatmul.bf16.gmra.mxu0 %v1709
    %v2097 = vpop.f32.mrf.mxu0
    %v2098 = vadd.f32 %v2049, %v2097
    %v2099 = vpop.f32.mrf.mxu0
    %v2100 = vadd.f32 %v2051, %v2099
    %2101 = vmatmul.bf16.gmra.mxu0 %v1711
    %v2102 = vpop.f32.mrf.mxu0
    %v2103 = vadd.f32 %v2054, %v2102
    %v2104 = vpop.f32.mrf.mxu0
    %v2105 = vadd.f32 %v2056, %v2104
    %2106 = vmatmul.bf16.gmra.mxu0 %v1713
    %v2107 = vpop.f32.mrf.mxu0
    %v2108 = vadd.f32 %v2059, %v2107
    %v2109 = vpop.f32.mrf.mxu0
    %v2110 = vadd.f32 %v2061, %v2109
    %2111 = vmatmul.bf16.gmra.mxu0 %v1715
    %v2112 = vpop.f32.mrf.mxu0
    %v2113 = vadd.f32 %v2064, %v2112
    %v2114 = vpop.f32.mrf.mxu0
    %v2115 = vadd.f32 %v2066, %v2114
    %2116 = vmatmul.bf16.gmra.mxu0 %v1717
    %v2117 = vpop.f32.mrf.mxu0
    %v2118 = vadd.f32 %v2069, %v2117
    %v2119 = vpop.f32.mrf.mxu0
    %v2120 = vadd.f32 %v2071, %v2119
    %2121 = vdwg.mxu0
    %v2122 = vand.u32 2147483647, %v2083
    %v2123 = vand.u32 2147483647, %v2085
    %v2124 = vand.u32 2147483647, %v2088
    %v2125 = vand.u32 2147483647, %v2090
    %v2126 = vand.u32 2147483647, %v2093
    %v2127 = vand.u32 2147483647, %v2095
    %v2128 = vand.u32 2147483647, %v2098
    %v2129 = vand.u32 2147483647, %v2100
    %v2130 = vand.u32 2147483647, %v2103
    %v2131 = vand.u32 2147483647, %v2105
    %v2132 = vand.u32 2147483647, %v2108
    %v2133 = vand.u32 2147483647, %v2110
    %v2134 = vand.u32 2147483647, %v2113
    %v2135 = vand.u32 2147483647, %v2115
    %v2136 = vand.u32 2147483647, %v2118
    %v2137 = vand.u32 2147483647, %v2120
    %v2138 = vmul.f32 %v2122, -2.0
    %v2139 = vmul.f32 %v2123, -2.0
    %v2140 = vmul.f32 %v2124, -2.0
    %v2141 = vmul.f32 %v2125, -2.0
    %v2142 = vmul.f32 %v2126, -2.0
    %v2143 = vmul.f32 %v2127, -2.0
    %v2144 = vmul.f32 %v2128, -2.0
    %v2145 = vmul.f32 %v2129, -2.0
    %v2146 = vmul.f32 %v2130, -2.0
    %v2147 = vmul.f32 %v2131, -2.0
    %v2148 = vmul.f32 %v2132, -2.0
    %v2149 = vmul.f32 %v2133, -2.0
    %v2150 = vmul.f32 %v2134, -2.0
    %v2151 = vmul.f32 %v2135, -2.0
    %v2152 = vmul.f32 %v2136, -2.0
    %v2153 = vmul.f32 %v2137, -2.0
    %v2154 = vmul.f32 %v2138, 1.442695
    %v2155 = vpow.pop %v2154
    %v2156 = vmul.f32 %v2139, 1.442695
    %v2157 = vpow.pop %v2156
    %v2158 = vmul.f32 %v2140, 1.442695
    %v2159 = vpow.pop %v2158
    %v2160 = vmul.f32 %v2141, 1.442695
    %v2161 = vpow.pop %v2160
    %v2162 = vmul.f32 %v2142, 1.442695
    %v2163 = vpow.pop %v2162
    %v2164 = vmul.f32 %v2143, 1.442695
    %v2165 = vpow.pop %v2164
    %v2166 = vmul.f32 %v2144, 1.442695
    %v2167 = vpow.pop %v2166
    %v2168 = vmul.f32 %v2145, 1.442695
    %v2169 = vpow.pop %v2168
    %v2170 = vmul.f32 %v2146, 1.442695
    %v2171 = vpow.pop %v2170
    %v2172 = vmul.f32 %v2147, 1.442695
    %v2173 = vpow.pop %v2172
    %v2174 = vmul.f32 %v2148, 1.442695
    %v2175 = vpow.pop %v2174
    %v2176 = vmul.f32 %v2149, 1.442695
    %v2177 = vpow.pop %v2176
    %v2178 = vmul.f32 %v2150, 1.442695
    %v2179 = vpow.pop %v2178
    %v2180 = vmul.f32 %v2151, 1.442695
    %v2181 = vpow.pop %v2180
    %v2182 = vmul.f32 %v2152, 1.442695
    %v2183 = vpow.pop %v2182
    %v2184 = vmul.f32 %v2153, 1.442695
    %v2185 = vpow.pop %v2184
    %v2186 = vsub.f32 1.0, %v2155
    %v2187 = vsub.f32 1.0, %v2157
    %v2188 = vsub.f32 1.0, %v2159
    %v2189 = vsub.f32 1.0, %v2161
    %v2190 = vsub.f32 1.0, %v2163
    %v2191 = vsub.f32 1.0, %v2165
    %v2192 = vsub.f32 1.0, %v2167
    %v2193 = vsub.f32 1.0, %v2169
    %v2194 = vsub.f32 1.0, %v2171
    %v2195 = vsub.f32 1.0, %v2173
    %v2196 = vsub.f32 1.0, %v2175
    %v2197 = vsub.f32 1.0, %v2177
    %v2198 = vsub.f32 1.0, %v2179
    %v2199 = vsub.f32 1.0, %v2181
    %v2200 = vsub.f32 1.0, %v2183
    %v2201 = vsub.f32 1.0, %v2185
    %v2202 = vadd.f32 %v2155, 1.0
    %v2203 = vadd.f32 %v2157, 1.0
    %v2204 = vadd.f32 %v2159, 1.0
    %v2205 = vadd.f32 %v2161, 1.0
    %v2206 = vadd.f32 %v2163, 1.0
    %v2207 = vadd.f32 %v2165, 1.0
    %v2208 = vadd.f32 %v2167, 1.0
    %v2209 = vadd.f32 %v2169, 1.0
    %v2210 = vadd.f32 %v2171, 1.0
    %v2211 = vadd.f32 %v2173, 1.0
    %v2212 = vadd.f32 %v2175, 1.0
    %v2213 = vadd.f32 %v2177, 1.0
    %v2214 = vadd.f32 %v2179, 1.0
    %v2215 = vadd.f32 %v2181, 1.0
    %v2216 = vadd.f32 %v2183, 1.0
    %v2217 = vadd.f32 %v2185, 1.0
    %v2218 = vrcp.pop %v2202
    %v2219 = vrcp.pop %v2203
    %v2220 = vrcp.pop %v2204
    %v2221 = vrcp.pop %v2205
    %v2222 = vrcp.pop %v2206
    %v2223 = vrcp.pop %v2207
    %v2224 = vrcp.pop %v2208
    %v2225 = vrcp.pop %v2209
    %v2226 = vrcp.pop %v2210
    %v2227 = vrcp.pop %v2211
    %v2228 = vrcp.pop %v2212
    %v2229 = vrcp.pop %v2213
    %v2230 = vrcp.pop %v2214
    %v2231 = vrcp.pop %v2215
    %v2232 = vrcp.pop %v2216
    %v2233 = vrcp.pop %v2217
    %v2234 = vmul.f32 %v2186, %v2218
    %v2235 = vmul.f32 %v2187, %v2219
    %v2236 = vmul.f32 %v2188, %v2220
    %v2237 = vmul.f32 %v2189, %v2221
    %v2238 = vmul.f32 %v2190, %v2222
    %v2239 = vmul.f32 %v2191, %v2223
    %v2240 = vmul.f32 %v2192, %v2224
    %v2241 = vmul.f32 %v2193, %v2225
    %v2242 = vmul.f32 %v2194, %v2226
    %v2243 = vmul.f32 %v2195, %v2227
    %v2244 = vmul.f32 %v2196, %v2228
    %v2245 = vmul.f32 %v2197, %v2229
    %v2246 = vmul.f32 %v2198, %v2230
    %v2247 = vmul.f32 %v2199, %v2231
    %v2248 = vmul.f32 %v2200, %v2232
    %v2249 = vmul.f32 %v2201, %v2233
    %vm2250 = vcmp.ge.f32.partialorder %v2083, 0.0
    %vm2251 = vcmp.ge.f32.partialorder %v2085, 0.0
    %vm2252 = vcmp.ge.f32.partialorder %v2088, 0.0
    %vm2253 = vcmp.ge.f32.partialorder %v2090, 0.0
    %vm2254 = vcmp.ge.f32.partialorder %v2093, 0.0
    %vm2255 = vcmp.ge.f32.partialorder %v2095, 0.0
    %vm2256 = vcmp.ge.f32.partialorder %v2098, 0.0
    %vm2257 = vcmp.ge.f32.partialorder %v2100, 0.0
    %vm2258 = vcmp.ge.f32.partialorder %v2103, 0.0
    %vm2259 = vcmp.ge.f32.partialorder %v2105, 0.0
    %vm2260 = vcmp.ge.f32.partialorder %v2108, 0.0
    %vm2261 = vcmp.ge.f32.partialorder %v2110, 0.0
    %vm2262 = vcmp.ge.f32.partialorder %v2113, 0.0
    %vm2263 = vcmp.ge.f32.partialorder %v2115, 0.0
    %vm2264 = vcmp.ge.f32.partialorder %v2118, 0.0
    %vm2265 = vcmp.ge.f32.partialorder %v2120, 0.0
    %v2266 = vsub.f32 0.0, %v2234
    %v2267 = vsub.f32 0.0, %v2235
    %v2268 = vsub.f32 0.0, %v2236
    %v2269 = vsub.f32 0.0, %v2237
    %v2270 = vsub.f32 0.0, %v2238
    %v2271 = vsub.f32 0.0, %v2239
    %v2272 = vsub.f32 0.0, %v2240
    %v2273 = vsub.f32 0.0, %v2241
    %v2274 = vsub.f32 0.0, %v2242
    %v2275 = vsub.f32 0.0, %v2243
    %v2276 = vsub.f32 0.0, %v2244
    %v2277 = vsub.f32 0.0, %v2245
    %v2278 = vsub.f32 0.0, %v2246
    %v2279 = vsub.f32 0.0, %v2247
    %v2280 = vsub.f32 0.0, %v2248
    %v2281 = vsub.f32 0.0, %v2249
    %v2282 = vsel %vm2250, %v2234, %v2266
    %v2283 = vsel %vm2251, %v2235, %v2267
    %v2284 = vsel %vm2252, %v2236, %v2268
    %v2285 = vsel %vm2253, %v2237, %v2269
    %v2286 = vsel %vm2254, %v2238, %v2270
    %v2287 = vsel %vm2255, %v2239, %v2271
    %v2288 = vsel %vm2256, %v2240, %v2272
    %v2289 = vsel %vm2257, %v2241, %v2273
    %v2290 = vsel %vm2258, %v2242, %v2274
    %v2291 = vsel %vm2259, %v2243, %v2275
    %v2292 = vsel %vm2260, %v2244, %v2276
    %v2293 = vsel %vm2261, %v2245, %v2277
    %v2294 = vsel %vm2262, %v2246, %v2278
    %v2295 = vsel %vm2263, %v2247, %v2279
    %v2296 = vsel %vm2264, %v2248, %v2280
    %v2297 = vsel %vm2265, %v2249, %v2281
    %v2298 = vld [vmem:[%s5] sm:$0xf]
    %v2299 = vld [vmem:[%s5 + $0x4] sm:$0xf]
    %v2300 = vld [vmem:[%s5 + $0x8] sm:$0xf]
    %v2301 = vld [vmem:[%s5 + $0xc] sm:$0xf]
    %v2302 = vld [vmem:[%s5 + $0x10] sm:$0xf]
    %v2303 = vld [vmem:[%s5 + $0x14] sm:$0xf]
    %v2304 = vld [vmem:[%s5 + $0x18] sm:$0xf]
    %v2305 = vld [vmem:[%s5 + $0x1c] sm:$0xf]
    %v2306 = vpack.c.bf16 %v1993, %v1992
    %v2307 = vpack.c.bf16 %v1995, %v1994
    %v2308 = vpack.c.bf16 %v1997, %v1996
    %v2309 = vpack.c.bf16 %v1999, %v1998
    %v2310 = vpack.c.bf16 %v2001, %v2000
    %v2311 = vpack.c.bf16 %v2003, %v2002
    %v2312 = vpack.c.bf16 %v2005, %v2004
    %v2313 = vpack.c.bf16 %v2007, %v2006
    %v2314 = vld [vmem:[%s6] sm:$0xff]
    %v2315 = vld [vmem:[%s6 + $0x8] sm:$0xff]
    %v2316 = vld [vmem:[%s6 + $0x10] sm:$0xff]
    %v2317 = vld [vmem:[%s6 + $0x18] sm:$0xff]
    %v2318 = vld [vmem:[%s6 + $0x20] sm:$0xff]
    %v2319 = vld [vmem:[%s6 + $0x28] sm:$0xff]
    %v2320 = vld [vmem:[%s6 + $0x30] sm:$0xff]
    %v2321 = vld [vmem:[%s6 + $0x38] sm:$0xff]
    %2323 = vset.pattern.permute.xlu0 0
    %2324 = vperm.xlu0 %2323, %v2314
    %v2325 = vpop.permute.xlu0 %2324
    %2328 = vset.pattern.permute.xlu0 0
    %2329 = vperm.xlu0 %2328, %v2315
    %v2330 = vpop.permute.xlu0 %2329
    %2333 = vset.pattern.permute.xlu0 0
    %2334 = vperm.xlu0 %2333, %v2316
    %v2335 = vpop.permute.xlu0 %2334
    %2338 = vset.pattern.permute.xlu0 0
    %2339 = vperm.xlu0 %2338, %v2317
    %v2340 = vpop.permute.xlu0 %2339
    %2343 = vset.pattern.permute.xlu0 0
    %2344 = vperm.xlu0 %2343, %v2318
    %v2345 = vpop.permute.xlu0 %2344
    %2348 = vset.pattern.permute.xlu0 0
    %2349 = vperm.xlu0 %2348, %v2319
    %v2350 = vpop.permute.xlu0 %2349
    %2353 = vset.pattern.permute.xlu0 0
    %2354 = vperm.xlu0 %2353, %v2320
    %v2355 = vpop.permute.xlu0 %2354
    %2358 = vset.pattern.permute.xlu0 0
    %2359 = vperm.xlu0 %2358, %v2321
    %v2360 = vpop.permute.xlu0 %2359
    %v2370 = vunpack.c.l.b16 %v2298
    %v2371 = vunpack.c.l.b16 %v2299
    %v2372 = vunpack.c.l.b16 %v2300
    %v2373 = vunpack.c.l.b16 %v2301
    %v2374 = vunpack.c.l.b16 %v2302
    %v2375 = vunpack.c.l.b16 %v2303
    %v2376 = vunpack.c.l.b16 %v2304
    %v2377 = vunpack.c.l.b16 %v2305
    %v2378 = vpack.c.b16 %v2371, %v2370
    %v2379 = vpack.c.b16 %v2373, %v2372
    %v2380 = vpack.c.b16 %v2375, %v2374
    %v2381 = vpack.c.b16 %v2377, %v2376
    %2386 = vmatpush.bf16.msra.mxu0 %v2313
    %2387 = vmatpush.bf16.msra.mxu0 %v2312
    %2388 = vmatpush.bf16.msra.mxu0 %v2311
    %2389 = vmatpush.bf16.msra.mxu0 %v2310
    %2390 = vmatpush.bf16.msra.mxu0 %v2309
    %2391 = vmatpush.bf16.msra.mxu0 %v2308
    %2392 = vmatpush.bf16.msra.mxu0 %v2307
    %2393 = vmatpush.bf16.msra.mxu0 %v2306
    %2394 = vmatmul.bf16.gmra.mxu0 %v2378
    %v2395 = vpop.f32.mrf.mxu0
    %v2396 = vadd.f32 %v2325, %v2395
    %v2397 = vpop.f32.mrf.mxu0
    %v2398 = vadd.f32 %v2330, %v2397
    %2399 = vmatmul.bf16.gmra.mxu0 %v2379
    %v2400 = vpop.f32.mrf.mxu0
    %v2401 = vadd.f32 %v2335, %v2400
    %v2402 = vpop.f32.mrf.mxu0
    %v2403 = vadd.f32 %v2340, %v2402
    %2404 = vmatmul.bf16.gmra.mxu0 %v2380
    %v2405 = vpop.f32.mrf.mxu0
    %v2406 = vadd.f32 %v2345, %v2405
    %v2407 = vpop.f32.mrf.mxu0
    %v2408 = vadd.f32 %v2350, %v2407
    %2409 = vmatmul.bf16.gmra.mxu0 %v2381
    %v2410 = vpop.f32.mrf.mxu0
    %v2411 = vadd.f32 %v2355, %v2410
    %v2412 = vpop.f32.mrf.mxu0
    %v2413 = vadd.f32 %v2360, %v2412
    %2414 = vdwg.mxu0
    %v2415 = vand.u32 2147483647, %v2396
    %v2416 = vand.u32 2147483647, %v2398
    %v2417 = vand.u32 2147483647, %v2401
    %v2418 = vand.u32 2147483647, %v2403
    %v2419 = vand.u32 2147483647, %v2406
    %v2420 = vand.u32 2147483647, %v2408
    %v2421 = vand.u32 2147483647, %v2411
    %v2422 = vand.u32 2147483647, %v2413
    %v2423 = vmul.f32 %v2415, -2.0
    %v2424 = vmul.f32 %v2416, -2.0
    %v2425 = vmul.f32 %v2417, -2.0
    %v2426 = vmul.f32 %v2418, -2.0
    %v2427 = vmul.f32 %v2419, -2.0
    %v2428 = vmul.f32 %v2420, -2.0
    %v2429 = vmul.f32 %v2421, -2.0
    %v2430 = vmul.f32 %v2422, -2.0
    %v2431 = vmul.f32 %v2423, 1.442695
    %v2432 = vpow.pop %v2431
    %v2433 = vmul.f32 %v2424, 1.442695
    %v2434 = vpow.pop %v2433
    %v2435 = vmul.f32 %v2425, 1.442695
    %v2436 = vpow.pop %v2435
    %v2437 = vmul.f32 %v2426, 1.442695
    %v2438 = vpow.pop %v2437
    %v2439 = vmul.f32 %v2427, 1.442695
    %v2440 = vpow.pop %v2439
    %v2441 = vmul.f32 %v2428, 1.442695
    %v2442 = vpow.pop %v2441
    %v2443 = vmul.f32 %v2429, 1.442695
    %v2444 = vpow.pop %v2443
    %v2445 = vmul.f32 %v2430, 1.442695
    %v2446 = vpow.pop %v2445
    %v2447 = vsub.f32 1.0, %v2432
    %v2448 = vsub.f32 1.0, %v2434
    %v2449 = vsub.f32 1.0, %v2436
    %v2450 = vsub.f32 1.0, %v2438
    %v2451 = vsub.f32 1.0, %v2440
    %v2452 = vsub.f32 1.0, %v2442
    %v2453 = vsub.f32 1.0, %v2444
    %v2454 = vsub.f32 1.0, %v2446
    %v2455 = vadd.f32 %v2432, 1.0
    %v2456 = vadd.f32 %v2434, 1.0
    %v2457 = vadd.f32 %v2436, 1.0
    %v2458 = vadd.f32 %v2438, 1.0
    %v2459 = vadd.f32 %v2440, 1.0
    %v2460 = vadd.f32 %v2442, 1.0
    %v2461 = vadd.f32 %v2444, 1.0
    %v2462 = vadd.f32 %v2446, 1.0
    %v2463 = vrcp.pop %v2455
    %v2464 = vrcp.pop %v2456
    %v2465 = vrcp.pop %v2457
    %v2466 = vrcp.pop %v2458
    %v2467 = vrcp.pop %v2459
    %v2468 = vrcp.pop %v2460
    %v2469 = vrcp.pop %v2461
    %v2470 = vrcp.pop %v2462
    %v2471 = vmul.f32 %v2447, %v2463
    %v2472 = vmul.f32 %v2448, %v2464
    %v2473 = vmul.f32 %v2449, %v2465
    %v2474 = vmul.f32 %v2450, %v2466
    %v2475 = vmul.f32 %v2451, %v2467
    %v2476 = vmul.f32 %v2452, %v2468
    %v2477 = vmul.f32 %v2453, %v2469
    %v2478 = vmul.f32 %v2454, %v2470
    %vm2479 = vcmp.ge.f32.partialorder %v2396, 0.0
    %vm2480 = vcmp.ge.f32.partialorder %v2398, 0.0
    %vm2481 = vcmp.ge.f32.partialorder %v2401, 0.0
    %vm2482 = vcmp.ge.f32.partialorder %v2403, 0.0
    %vm2483 = vcmp.ge.f32.partialorder %v2406, 0.0
    %vm2484 = vcmp.ge.f32.partialorder %v2408, 0.0
    %vm2485 = vcmp.ge.f32.partialorder %v2411, 0.0
    %vm2486 = vcmp.ge.f32.partialorder %v2413, 0.0
    %v2487 = vsub.f32 0.0, %v2471
    %v2488 = vsub.f32 0.0, %v2472
    %v2489 = vsub.f32 0.0, %v2473
    %v2490 = vsub.f32 0.0, %v2474
    %v2491 = vsub.f32 0.0, %v2475
    %v2492 = vsub.f32 0.0, %v2476
    %v2493 = vsub.f32 0.0, %v2477
    %v2494 = vsub.f32 0.0, %v2478
    %v2495 = vsel %vm2479, %v2471, %v2487
    %v2496 = vsel %vm2480, %v2472, %v2488
    %v2497 = vsel %vm2481, %v2473, %v2489
    %v2498 = vsel %vm2482, %v2474, %v2490
    %v2499 = vsel %vm2483, %v2475, %v2491
    %v2500 = vsel %vm2484, %v2476, %v2492
    %v2501 = vsel %vm2485, %v2477, %v2493
    %v2502 = vsel %vm2486, %v2478, %v2494
    %v2503 = vpack.c.bf16 %v2283, %v2282
    %v2504 = vpack.c.bf16 %v2285, %v2284
    %v2505 = vpack.c.bf16 %v2287, %v2286
    %v2506 = vpack.c.bf16 %v2289, %v2288
    %v2507 = vpack.c.bf16 %v2291, %v2290
    %v2508 = vpack.c.bf16 %v2293, %v2292
    %v2509 = vpack.c.bf16 %v2295, %v2294
    %v2510 = vpack.c.bf16 %v2297, %v2296
    %2511 = vmatpush.bf16.msra.mxu0 %v2510
    %2512 = vmatpush.bf16.msra.mxu0 %v2509
    %2513 = vmatpush.bf16.msra.mxu0 %v2508
    %2514 = vmatpush.bf16.msra.mxu0 %v2507
    %2515 = vmatpush.bf16.msra.mxu0 %v2506
    %2516 = vmatpush.bf16.msra.mxu0 %v2505
    %2517 = vmatpush.bf16.msra.mxu0 %v2504
    %2518 = vmatpush.bf16.msra.mxu0 %v2503
    %2519 = vmatmul.bf16.gmra.mxu0 %v2378
    %v2520 = vpop.f32.mrf.mxu0
    %v2521 = vadd.f32 %v2325, %v2520
    %v2522 = vpop.f32.mrf.mxu0
    %v2523 = vadd.f32 %v2330, %v2522
    %2524 = vmatmul.bf16.gmra.mxu0 %v2379
    %v2525 = vpop.f32.mrf.mxu0
    %v2526 = vadd.f32 %v2335, %v2525
    %v2527 = vpop.f32.mrf.mxu0
    %v2528 = vadd.f32 %v2340, %v2527
    %2529 = vmatmul.bf16.gmra.mxu0 %v2380
    %v2530 = vpop.f32.mrf.mxu0
    %v2531 = vadd.f32 %v2345, %v2530
    %v2532 = vpop.f32.mrf.mxu0
    %v2533 = vadd.f32 %v2350, %v2532
    %2534 = vmatmul.bf16.gmra.mxu0 %v2381
    %v2535 = vpop.f32.mrf.mxu0
    %v2536 = vadd.f32 %v2355, %v2535
    %v2537 = vpop.f32.mrf.mxu0
    %v2538 = vadd.f32 %v2360, %v2537
    %2539 = vdwg.mxu0
    %v2540 = vand.u32 2147483647, %v2521
    %v2541 = vand.u32 2147483647, %v2523
    %v2542 = vand.u32 2147483647, %v2526
    %v2543 = vand.u32 2147483647, %v2528
    %v2544 = vand.u32 2147483647, %v2531
    %v2545 = vand.u32 2147483647, %v2533
    %v2546 = vand.u32 2147483647, %v2536
    %v2547 = vand.u32 2147483647, %v2538
    %v2548 = vmul.f32 %v2540, -2.0
    %v2549 = vmul.f32 %v2541, -2.0
    %v2550 = vmul.f32 %v2542, -2.0
    %v2551 = vmul.f32 %v2543, -2.0
    %v2552 = vmul.f32 %v2544, -2.0
    %v2553 = vmul.f32 %v2545, -2.0
    %v2554 = vmul.f32 %v2546, -2.0
    %v2555 = vmul.f32 %v2547, -2.0
    %v2556 = vmul.f32 %v2548, 1.442695
    %v2557 = vpow.pop %v2556
    %v2558 = vmul.f32 %v2549, 1.442695
    %v2559 = vpow.pop %v2558
    %v2560 = vmul.f32 %v2550, 1.442695
    %v2561 = vpow.pop %v2560
    %v2562 = vmul.f32 %v2551, 1.442695
    %v2563 = vpow.pop %v2562
    %v2564 = vmul.f32 %v2552, 1.442695
    %v2565 = vpow.pop %v2564
    %v2566 = vmul.f32 %v2553, 1.442695
    %v2567 = vpow.pop %v2566
    %v2568 = vmul.f32 %v2554, 1.442695
    %v2569 = vpow.pop %v2568
    %v2570 = vmul.f32 %v2555, 1.442695
    %v2571 = vpow.pop %v2570
    %v2572 = vsub.f32 1.0, %v2557
    %v2573 = vsub.f32 1.0, %v2559
    %v2574 = vsub.f32 1.0, %v2561
    %v2575 = vsub.f32 1.0, %v2563
    %v2576 = vsub.f32 1.0, %v2565
    %v2577 = vsub.f32 1.0, %v2567
    %v2578 = vsub.f32 1.0, %v2569
    %v2579 = vsub.f32 1.0, %v2571
    %v2580 = vadd.f32 %v2557, 1.0
    %v2581 = vadd.f32 %v2559, 1.0
    %v2582 = vadd.f32 %v2561, 1.0
    %v2583 = vadd.f32 %v2563, 1.0
    %v2584 = vadd.f32 %v2565, 1.0
    %v2585 = vadd.f32 %v2567, 1.0
    %v2586 = vadd.f32 %v2569, 1.0
    %v2587 = vadd.f32 %v2571, 1.0
    %v2588 = vrcp.pop %v2580
    %v2589 = vrcp.pop %v2581
    %v2590 = vrcp.pop %v2582
    %v2591 = vrcp.pop %v2583
    %v2592 = vrcp.pop %v2584
    %v2593 = vrcp.pop %v2585
    %v2594 = vrcp.pop %v2586
    %v2595 = vrcp.pop %v2587
    %v2596 = vmul.f32 %v2572, %v2588
    %v2597 = vmul.f32 %v2573, %v2589
    %v2598 = vmul.f32 %v2574, %v2590
    %v2599 = vmul.f32 %v2575, %v2591
    %v2600 = vmul.f32 %v2576, %v2592
    %v2601 = vmul.f32 %v2577, %v2593
    %v2602 = vmul.f32 %v2578, %v2594
    %v2603 = vmul.f32 %v2579, %v2595
    %vm2604 = vcmp.ge.f32.partialorder %v2521, 0.0
    %vm2605 = vcmp.ge.f32.partialorder %v2523, 0.0
    %vm2606 = vcmp.ge.f32.partialorder %v2526, 0.0
    %vm2607 = vcmp.ge.f32.partialorder %v2528, 0.0
    %vm2608 = vcmp.ge.f32.partialorder %v2531, 0.0
    %vm2609 = vcmp.ge.f32.partialorder %v2533, 0.0
    %vm2610 = vcmp.ge.f32.partialorder %v2536, 0.0
    %vm2611 = vcmp.ge.f32.partialorder %v2538, 0.0
    %v2612 = vsub.f32 0.0, %v2596
    %v2613 = vsub.f32 0.0, %v2597
    %v2614 = vsub.f32 0.0, %v2598
    %v2615 = vsub.f32 0.0, %v2599
    %v2616 = vsub.f32 0.0, %v2600
    %v2617 = vsub.f32 0.0, %v2601
    %v2618 = vsub.f32 0.0, %v2602
    %v2619 = vsub.f32 0.0, %v2603
    %v2620 = vsel %vm2604, %v2596, %v2612
    %v2621 = vsel %vm2605, %v2597, %v2613
    %v2622 = vsel %vm2606, %v2598, %v2614
    %v2623 = vsel %vm2607, %v2599, %v2615
    %v2624 = vsel %vm2608, %v2600, %v2616
    %v2625 = vsel %vm2609, %v2601, %v2617
    %v2626 = vsel %vm2610, %v2602, %v2618
    %v2627 = vsel %vm2611, %v2603, %v2619
    %v2628 = vld [vmem:[%s7] sm:$0xf]
    %v2629 = vld [vmem:[%s7 + $0x4] sm:$0xf]
    %v2630 = vld [vmem:[%s7 + $0x8] sm:$0xf]
    %v2631 = vld [vmem:[%s7 + $0xc] sm:$0xf]
    %v2632 = vld [vmem:[%s7 + $0x10] sm:$0xf]
    %v2633 = vld [vmem:[%s7 + $0x14] sm:$0xf]
    %v2634 = vld [vmem:[%s7 + $0x18] sm:$0xf]
    %v2635 = vld [vmem:[%s7 + $0x1c] sm:$0xf]
    %v2636 = vpack.c.bf16 %v2496, %v2495
    %v2637 = vpack.c.bf16 %v2498, %v2497
    %v2638 = vpack.c.bf16 %v2500, %v2499
    %v2639 = vpack.c.bf16 %v2502, %v2501
    %v2640 = vld [vmem:[%s8] sm:$0xff]
    %v2641 = vld [vmem:[%s8 + $0x8] sm:$0xff]
    %v2642 = vld [vmem:[%s8 + $0x10] sm:$0xff]
    %v2643 = vld [vmem:[%s8 + $0x18] sm:$0xff]
    %v2644 = vld [vmem:[%s8 + $0x20] sm:$0xff]
    %v2645 = vld [vmem:[%s8 + $0x28] sm:$0xff]
    %v2646 = vld [vmem:[%s8 + $0x30] sm:$0xff]
    %v2647 = vld [vmem:[%s8 + $0x38] sm:$0xff]
    %2649 = vset.pattern.permute.xlu0 0
    %2650 = vperm.xlu0 %2649, %v2640
    %v2651 = vpop.permute.xlu0 %2650
    %2654 = vset.pattern.permute.xlu0 0
    %2655 = vperm.xlu0 %2654, %v2641
    %v2656 = vpop.permute.xlu0 %2655
    %2659 = vset.pattern.permute.xlu0 0
    %2660 = vperm.xlu0 %2659, %v2642
    %v2661 = vpop.permute.xlu0 %2660
    %2664 = vset.pattern.permute.xlu0 0
    %2665 = vperm.xlu0 %2664, %v2643
    %v2666 = vpop.permute.xlu0 %2665
    %2669 = vset.pattern.permute.xlu0 0
    %2670 = vperm.xlu0 %2669, %v2644
    %v2671 = vpop.permute.xlu0 %2670
    %2674 = vset.pattern.permute.xlu0 0
    %2675 = vperm.xlu0 %2674, %v2645
    %v2676 = vpop.permute.xlu0 %2675
    %2679 = vset.pattern.permute.xlu0 0
    %2680 = vperm.xlu0 %2679, %v2646
    %v2681 = vpop.permute.xlu0 %2680
    %2684 = vset.pattern.permute.xlu0 0
    %2685 = vperm.xlu0 %2684, %v2647
    %v2686 = vpop.permute.xlu0 %2685
    %v2696 = vunpack.c.l.b16 %v2628
    %v2697 = vunpack.c.l.b16 %v2629
    %v2698 = vunpack.c.l.b16 %v2630
    %v2699 = vunpack.c.l.b16 %v2631
    %v2700 = vunpack.c.l.b16 %v2632
    %v2701 = vunpack.c.l.b16 %v2633
    %v2702 = vunpack.c.l.b16 %v2634
    %v2703 = vunpack.c.l.b16 %v2635
    %v2704 = vpack.c.b16 %v2697, %v2696
    %v2705 = vpack.c.b16 %v2699, %v2698
    %v2706 = vpack.c.b16 %v2701, %v2700
    %v2707 = vpack.c.b16 %v2703, %v2702
    %vm2708 = vcmask 523264
    %v2710 = vsel %vm2708, %v2704, 0
    %v2713 = vsel %vm2708, %v2705, 0
    %v2716 = vsel %vm2708, %v2706, 0
    %v2719 = vsel %vm2708, %v2707, 0
    %2721 = vmatpush.bf16.msra.mxu0 0
    %2722 = vmatpush.bf16.msra.mxu0 0
    %2723 = vmatpush.bf16.msra.mxu0 0
    %2724 = vmatpush.bf16.msra.mxu0 0
    %2725 = vmatpush.bf16.msra.mxu0 %v2639
    %2726 = vmatpush.bf16.msra.mxu0 %v2638
    %2727 = vmatpush.bf16.msra.mxu0 %v2637
    %2728 = vmatpush.bf16.msra.mxu0 %v2636
    %2729 = vmatmul.bf16.gmra.mxu0 %v2710
    %v2730 = vpop.f32.mrf.mxu0
    %v2731 = vadd.f32 %v2651, %v2730
    %v2732 = vpop.f32.mrf.mxu0
    %v2733 = vadd.f32 %v2656, %v2732
    %2734 = vmatmul.bf16.gmra.mxu0 %v2713
    %v2735 = vpop.f32.mrf.mxu0
    %v2736 = vadd.f32 %v2661, %v2735
    %v2737 = vpop.f32.mrf.mxu0
    %v2738 = vadd.f32 %v2666, %v2737
    %2739 = vmatmul.bf16.gmra.mxu0 %v2716
    %v2740 = vpop.f32.mrf.mxu0
    %v2741 = vadd.f32 %v2671, %v2740
    %v2742 = vpop.f32.mrf.mxu0
    %v2743 = vadd.f32 %v2676, %v2742
    %2744 = vmatmul.bf16.gmra.mxu0 %v2719
    %v2745 = vpop.f32.mrf.mxu0
    %v2746 = vadd.f32 %v2681, %v2745
    %v2747 = vpop.f32.mrf.mxu0
    %v2748 = vadd.f32 %v2686, %v2747
    %2749 = vdwg.mxu0
    %v2750 = vand.u32 2147483647, %v2731
    %v2751 = vand.u32 2147483647, %v2733
    %v2752 = vand.u32 2147483647, %v2736
    %v2753 = vand.u32 2147483647, %v2738
    %v2754 = vand.u32 2147483647, %v2741
    %v2755 = vand.u32 2147483647, %v2743
    %v2756 = vand.u32 2147483647, %v2746
    %v2757 = vand.u32 2147483647, %v2748
    %v2758 = vmul.f32 %v2750, -2.0
    %v2759 = vmul.f32 %v2751, -2.0
    %v2760 = vmul.f32 %v2752, -2.0
    %v2761 = vmul.f32 %v2753, -2.0
    %v2762 = vmul.f32 %v2754, -2.0
    %v2763 = vmul.f32 %v2755, -2.0
    %v2764 = vmul.f32 %v2756, -2.0
    %v2765 = vmul.f32 %v2757, -2.0
    %v2766 = vmul.f32 %v2758, 1.442695
    %v2767 = vpow.pop %v2766
    %v2768 = vmul.f32 %v2759, 1.442695
    %v2769 = vpow.pop %v2768
    %v2770 = vmul.f32 %v2760, 1.442695
    %v2771 = vpow.pop %v2770
    %v2772 = vmul.f32 %v2761, 1.442695
    %v2773 = vpow.pop %v2772
    %v2774 = vmul.f32 %v2762, 1.442695
    %v2775 = vpow.pop %v2774
    %v2776 = vmul.f32 %v2763, 1.442695
    %v2777 = vpow.pop %v2776
    %v2778 = vmul.f32 %v2764, 1.442695
    %v2779 = vpow.pop %v2778
    %v2780 = vmul.f32 %v2765, 1.442695
    %v2781 = vpow.pop %v2780
    %v2782 = vsub.f32 1.0, %v2767
    %v2783 = vsub.f32 1.0, %v2769
    %v2784 = vsub.f32 1.0, %v2771
    %v2785 = vsub.f32 1.0, %v2773
    %v2786 = vsub.f32 1.0, %v2775
    %v2787 = vsub.f32 1.0, %v2777
    %v2788 = vsub.f32 1.0, %v2779
    %v2789 = vsub.f32 1.0, %v2781
    %v2790 = vadd.f32 %v2767, 1.0
    %v2791 = vadd.f32 %v2769, 1.0
    %v2792 = vadd.f32 %v2771, 1.0
    %v2793 = vadd.f32 %v2773, 1.0
    %v2794 = vadd.f32 %v2775, 1.0
    %v2795 = vadd.f32 %v2777, 1.0
    %v2796 = vadd.f32 %v2779, 1.0
    %v2797 = vadd.f32 %v2781, 1.0
    %v2798 = vrcp.pop %v2790
    %v2799 = vrcp.pop %v2791
    %v2800 = vrcp.pop %v2792
    %v2801 = vrcp.pop %v2793
    %v2802 = vrcp.pop %v2794
    %v2803 = vrcp.pop %v2795
    %v2804 = vrcp.pop %v2796
    %v2805 = vrcp.pop %v2797
    %v2806 = vmul.f32 %v2782, %v2798
    %v2807 = vmul.f32 %v2783, %v2799
    %v2808 = vmul.f32 %v2784, %v2800
    %v2809 = vmul.f32 %v2785, %v2801
    %v2810 = vmul.f32 %v2786, %v2802
    %v2811 = vmul.f32 %v2787, %v2803
    %v2812 = vmul.f32 %v2788, %v2804
    %v2813 = vmul.f32 %v2789, %v2805
    %vm2814 = vcmp.ge.f32.partialorder %v2731, 0.0
    %vm2815 = vcmp.ge.f32.partialorder %v2733, 0.0
    %vm2816 = vcmp.ge.f32.partialorder %v2736, 0.0
    %vm2817 = vcmp.ge.f32.partialorder %v2738, 0.0
    %vm2818 = vcmp.ge.f32.partialorder %v2741, 0.0
    %vm2819 = vcmp.ge.f32.partialorder %v2743, 0.0
    %vm2820 = vcmp.ge.f32.partialorder %v2746, 0.0
    %vm2821 = vcmp.ge.f32.partialorder %v2748, 0.0
    %v2822 = vsub.f32 0.0, %v2806
    %v2823 = vsub.f32 0.0, %v2807
    %v2824 = vsub.f32 0.0, %v2808
    %v2825 = vsub.f32 0.0, %v2809
    %v2826 = vsub.f32 0.0, %v2810
    %v2827 = vsub.f32 0.0, %v2811
    %v2828 = vsub.f32 0.0, %v2812
    %v2829 = vsub.f32 0.0, %v2813
    %v2830 = vsel %vm2814, %v2806, %v2822
    %v2831 = vsel %vm2815, %v2807, %v2823
    %v2832 = vsel %vm2816, %v2808, %v2824
    %v2833 = vsel %vm2817, %v2809, %v2825
    %v2834 = vsel %vm2818, %v2810, %v2826
    %v2835 = vsel %vm2819, %v2811, %v2827
    %v2836 = vsel %vm2820, %v2812, %v2828
    %v2837 = vsel %vm2821, %v2813, %v2829
    %v2838 = vpack.c.bf16 %v2621, %v2620
    %v2839 = vpack.c.bf16 %v2623, %v2622
    %v2840 = vpack.c.bf16 %v2625, %v2624
    %v2841 = vpack.c.bf16 %v2627, %v2626
    %2842 = vmatpush.bf16.msra.mxu0 0
    %2843 = vmatpush.bf16.msra.mxu0 0
    %2844 = vmatpush.bf16.msra.mxu0 0
    %2845 = vmatpush.bf16.msra.mxu0 0
    %2846 = vmatpush.bf16.msra.mxu0 %v2841
    %2847 = vmatpush.bf16.msra.mxu0 %v2840
    %2848 = vmatpush.bf16.msra.mxu0 %v2839
    %2849 = vmatpush.bf16.msra.mxu0 %v2838
    %2850 = vmatmul.bf16.gmra.mxu0 %v2710
    %v2851 = vpop.f32.mrf.mxu0
    %v2852 = vadd.f32 %v2651, %v2851
    %v2853 = vpop.f32.mrf.mxu0
    %v2854 = vadd.f32 %v2656, %v2853
    %2855 = vmatmul.bf16.gmra.mxu0 %v2713
    %v2856 = vpop.f32.mrf.mxu0
    %v2857 = vadd.f32 %v2661, %v2856
    %v2858 = vpop.f32.mrf.mxu0
    %v2859 = vadd.f32 %v2666, %v2858
    %2860 = vmatmul.bf16.gmra.mxu0 %v2716
    %v2861 = vpop.f32.mrf.mxu0
    %v2862 = vadd.f32 %v2671, %v2861
    %v2863 = vpop.f32.mrf.mxu0
    %v2864 = vadd.f32 %v2676, %v2863
    %2865 = vmatmul.bf16.gmra.mxu0 %v2719
    %v2866 = vpop.f32.mrf.mxu0
    %v2867 = vadd.f32 %v2681, %v2866
    %v2868 = vpop.f32.mrf.mxu0
    %v2869 = vadd.f32 %v2686, %v2868
    %2870 = vdwg.mxu0
    %v2871 = vand.u32 2147483647, %v2852
    %v2872 = vand.u32 2147483647, %v2854
    %v2873 = vand.u32 2147483647, %v2857
    %v2874 = vand.u32 2147483647, %v2859
    %v2875 = vand.u32 2147483647, %v2862
    %v2876 = vand.u32 2147483647, %v2864
    %v2877 = vand.u32 2147483647, %v2867
    %v2878 = vand.u32 2147483647, %v2869
    %v2879 = vmul.f32 %v2871, -2.0
    %v2880 = vmul.f32 %v2872, -2.0
    %v2881 = vmul.f32 %v2873, -2.0
    %v2882 = vmul.f32 %v2874, -2.0
    %v2883 = vmul.f32 %v2875, -2.0
    %v2884 = vmul.f32 %v2876, -2.0
    %v2885 = vmul.f32 %v2877, -2.0
    %v2886 = vmul.f32 %v2878, -2.0
    %v2887 = vmul.f32 %v2879, 1.442695
    %v2888 = vpow.pop %v2887
    %v2889 = vmul.f32 %v2880, 1.442695
    %v2890 = vpow.pop %v2889
    %v2891 = vmul.f32 %v2881, 1.442695
    %v2892 = vpow.pop %v2891
    %v2893 = vmul.f32 %v2882, 1.442695
    %v2894 = vpow.pop %v2893
    %v2895 = vmul.f32 %v2883, 1.442695
    %v2896 = vpow.pop %v2895
    %v2897 = vmul.f32 %v2884, 1.442695
    %v2898 = vpow.pop %v2897
    %v2899 = vmul.f32 %v2885, 1.442695
    %v2900 = vpow.pop %v2899
    %v2901 = vmul.f32 %v2886, 1.442695
    %v2902 = vpow.pop %v2901
    %v2903 = vsub.f32 1.0, %v2888
    %v2904 = vsub.f32 1.0, %v2890
    %v2905 = vsub.f32 1.0, %v2892
    %v2906 = vsub.f32 1.0, %v2894
    %v2907 = vsub.f32 1.0, %v2896
    %v2908 = vsub.f32 1.0, %v2898
    %v2909 = vsub.f32 1.0, %v2900
    %v2910 = vsub.f32 1.0, %v2902
    %v2911 = vadd.f32 %v2888, 1.0
    %v2912 = vadd.f32 %v2890, 1.0
    %v2913 = vadd.f32 %v2892, 1.0
    %v2914 = vadd.f32 %v2894, 1.0
    %v2915 = vadd.f32 %v2896, 1.0
    %v2916 = vadd.f32 %v2898, 1.0
    %v2917 = vadd.f32 %v2900, 1.0
    %v2918 = vadd.f32 %v2902, 1.0
    %v2919 = vrcp.pop %v2911
    %v2920 = vrcp.pop %v2912
    %v2921 = vrcp.pop %v2913
    %v2922 = vrcp.pop %v2914
    %v2923 = vrcp.pop %v2915
    %v2924 = vrcp.pop %v2916
    %v2925 = vrcp.pop %v2917
    %v2926 = vrcp.pop %v2918
    %v2927 = vmul.f32 %v2903, %v2919
    %v2928 = vmul.f32 %v2904, %v2920
    %v2929 = vmul.f32 %v2905, %v2921
    %v2930 = vmul.f32 %v2906, %v2922
    %v2931 = vmul.f32 %v2907, %v2923
    %v2932 = vmul.f32 %v2908, %v2924
    %v2933 = vmul.f32 %v2909, %v2925
    %v2934 = vmul.f32 %v2910, %v2926
    %vm2935 = vcmp.ge.f32.partialorder %v2852, 0.0
    %vm2936 = vcmp.ge.f32.partialorder %v2854, 0.0
    %vm2937 = vcmp.ge.f32.partialorder %v2857, 0.0
    %vm2938 = vcmp.ge.f32.partialorder %v2859, 0.0
    %vm2939 = vcmp.ge.f32.partialorder %v2862, 0.0
    %vm2940 = vcmp.ge.f32.partialorder %v2864, 0.0
    %vm2941 = vcmp.ge.f32.partialorder %v2867, 0.0
    %vm2942 = vcmp.ge.f32.partialorder %v2869, 0.0
    %v2943 = vsub.f32 0.0, %v2927
    %v2944 = vsub.f32 0.0, %v2928
    %v2945 = vsub.f32 0.0, %v2929
    %v2946 = vsub.f32 0.0, %v2930
    %v2947 = vsub.f32 0.0, %v2931
    %v2948 = vsub.f32 0.0, %v2932
    %v2949 = vsub.f32 0.0, %v2933
    %v2950 = vsub.f32 0.0, %v2934
    %v2951 = vsel %vm2935, %v2927, %v2943
    %v2952 = vsel %vm2936, %v2928, %v2944
    %v2953 = vsel %vm2937, %v2929, %v2945
    %v2954 = vsel %vm2938, %v2930, %v2946
    %v2955 = vsel %vm2939, %v2931, %v2947
    %v2956 = vsel %vm2940, %v2932, %v2948
    %v2957 = vsel %vm2941, %v2933, %v2949
    %v2958 = vsel %vm2942, %v2934, %v2950
    %v2959 = vld [vmem:[%s9] sm:$0xf]
    %v2960 = vld [vmem:[%s9 + $0x4] sm:$0xf]
    %v2961 = vld [vmem:[%s9 + $0x8] sm:$0xf]
    %v2962 = vld [vmem:[%s9 + $0xc] sm:$0xf]
    %v2963 = vld [vmem:[%s9 + $0x10] sm:$0xf]
    %v2964 = vld [vmem:[%s9 + $0x14] sm:$0xf]
    %v2965 = vld [vmem:[%s9 + $0x18] sm:$0xf]
    %v2966 = vld [vmem:[%s9 + $0x1c] sm:$0xf]
    %v2967 = vpack.c.bf16 %v2831, %v2830
    %v2968 = vpack.c.bf16 %v2833, %v2832
    %v2969 = vpack.c.bf16 %v2835, %v2834
    %v2970 = vpack.c.bf16 %v2837, %v2836
    %v2971 = vld [vmem:[%s10] sm:$0xff]
    %v2972 = vld [vmem:[%s10 + $0x8] sm:$0xff]
    %v2973 = vld [vmem:[%s10 + $0x10] sm:$0xff]
    %v2974 = vld [vmem:[%s10 + $0x18] sm:$0xff]
    %v2975 = vld [vmem:[%s10 + $0x20] sm:$0xff]
    %v2976 = vld [vmem:[%s10 + $0x28] sm:$0xff]
    %v2977 = vld [vmem:[%s10 + $0x30] sm:$0xff]
    %v2978 = vld [vmem:[%s10 + $0x38] sm:$0xff]
    %2980 = vset.pattern.permute.xlu0 0
    %2981 = vperm.xlu0 %2980, %v2971
    %v2982 = vpop.permute.xlu0 %2981
    %2985 = vset.pattern.permute.xlu0 0
    %2986 = vperm.xlu0 %2985, %v2972
    %v2987 = vpop.permute.xlu0 %2986
    %2990 = vset.pattern.permute.xlu0 0
    %2991 = vperm.xlu0 %2990, %v2973
    %v2992 = vpop.permute.xlu0 %2991
    %2995 = vset.pattern.permute.xlu0 0
    %2996 = vperm.xlu0 %2995, %v2974
    %v2997 = vpop.permute.xlu0 %2996
    %3000 = vset.pattern.permute.xlu0 0
    %3001 = vperm.xlu0 %3000, %v2975
    %v3002 = vpop.permute.xlu0 %3001
    %3005 = vset.pattern.permute.xlu0 0
    %3006 = vperm.xlu0 %3005, %v2976
    %v3007 = vpop.permute.xlu0 %3006
    %3010 = vset.pattern.permute.xlu0 0
    %3011 = vperm.xlu0 %3010, %v2977
    %v3012 = vpop.permute.xlu0 %3011
    %3015 = vset.pattern.permute.xlu0 0
    %3016 = vperm.xlu0 %3015, %v2978
    %v3017 = vpop.permute.xlu0 %3016
    %v3027 = vunpack.c.l.b16 %v2959
    %v3028 = vunpack.c.l.b16 %v2960
    %v3029 = vunpack.c.l.b16 %v2961
    %v3030 = vunpack.c.l.b16 %v2962
    %v3031 = vunpack.c.l.b16 %v2963
    %v3032 = vunpack.c.l.b16 %v2964
    %v3033 = vunpack.c.l.b16 %v2965
    %v3034 = vunpack.c.l.b16 %v2966
    %v3035 = vpack.c.b16 %v3028, %v3027
    %v3036 = vpack.c.b16 %v3030, %v3029
    %v3037 = vpack.c.b16 %v3032, %v3031
    %v3038 = vpack.c.b16 %v3034, %v3033
    %v3040 = vsel %vm2708, %v3035, 0
    %v3043 = vsel %vm2708, %v3036, 0
    %v3046 = vsel %vm2708, %v3037, 0
    %v3049 = vsel %vm2708, %v3038, 0
    %3051 = vmatpush.bf16.msra.mxu0 0
    %3052 = vmatpush.bf16.msra.mxu0 0
    %3053 = vmatpush.bf16.msra.mxu0 0
    %3054 = vmatpush.bf16.msra.mxu0 0
    %3055 = vmatpush.bf16.msra.mxu0 %v2970
    %3056 = vmatpush.bf16.msra.mxu0 %v2969
    %3057 = vmatpush.bf16.msra.mxu0 %v2968
    %3058 = vmatpush.bf16.msra.mxu0 %v2967
    %3059 = vmatmul.bf16.gmra.mxu0 %v3040
    %v3060 = vpop.f32.mrf.mxu0
    %v3061 = vadd.f32 %v2982, %v3060
    %v3062 = vpop.f32.mrf.mxu0
    %v3063 = vadd.f32 %v2987, %v3062
    %3064 = vmatmul.bf16.gmra.mxu0 %v3043
    %v3065 = vpop.f32.mrf.mxu0
    %v3066 = vadd.f32 %v2992, %v3065
    %v3067 = vpop.f32.mrf.mxu0
    %v3068 = vadd.f32 %v2997, %v3067
    %3069 = vmatmul.bf16.gmra.mxu0 %v3046
    %v3070 = vpop.f32.mrf.mxu0
    %v3071 = vadd.f32 %v3002, %v3070
    %v3072 = vpop.f32.mrf.mxu0
    %v3073 = vadd.f32 %v3007, %v3072
    %3074 = vmatmul.bf16.gmra.mxu0 %v3049
    %v3075 = vpop.f32.mrf.mxu0
    %v3076 = vadd.f32 %v3012, %v3075
    %v3077 = vpop.f32.mrf.mxu0
    %v3078 = vadd.f32 %v3017, %v3077
    %3079 = vdwg.mxu0
    %v3080 = vand.u32 2147483647, %v3061
    %v3081 = vand.u32 2147483647, %v3063
    %v3082 = vand.u32 2147483647, %v3066
    %v3083 = vand.u32 2147483647, %v3068
    %v3084 = vand.u32 2147483647, %v3071
    %v3085 = vand.u32 2147483647, %v3073
    %v3086 = vand.u32 2147483647, %v3076
    %v3087 = vand.u32 2147483647, %v3078
    %v3088 = vmul.f32 %v3080, -2.0
    %v3089 = vmul.f32 %v3081, -2.0
    %v3090 = vmul.f32 %v3082, -2.0
    %v3091 = vmul.f32 %v3083, -2.0
    %v3092 = vmul.f32 %v3084, -2.0
    %v3093 = vmul.f32 %v3085, -2.0
    %v3094 = vmul.f32 %v3086, -2.0
    %v3095 = vmul.f32 %v3087, -2.0
    %v3096 = vmul.f32 %v3088, 1.442695
    %v3097 = vpow.pop %v3096
    %v3098 = vmul.f32 %v3089, 1.442695
    %v3099 = vpow.pop %v3098
    %v3100 = vmul.f32 %v3090, 1.442695
    %v3101 = vpow.pop %v3100
    %v3102 = vmul.f32 %v3091, 1.442695
    %v3103 = vpow.pop %v3102
    %v3104 = vmul.f32 %v3092, 1.442695
    %v3105 = vpow.pop %v3104
    %v3106 = vmul.f32 %v3093, 1.442695
    %v3107 = vpow.pop %v3106
    %v3108 = vmul.f32 %v3094, 1.442695
    %v3109 = vpow.pop %v3108
    %v3110 = vmul.f32 %v3095, 1.442695
    %v3111 = vpow.pop %v3110
    %v3112 = vsub.f32 1.0, %v3097
    %v3113 = vsub.f32 1.0, %v3099
    %v3114 = vsub.f32 1.0, %v3101
    %v3115 = vsub.f32 1.0, %v3103
    %v3116 = vsub.f32 1.0, %v3105
    %v3117 = vsub.f32 1.0, %v3107
    %v3118 = vsub.f32 1.0, %v3109
    %v3119 = vsub.f32 1.0, %v3111
    %v3120 = vadd.f32 %v3097, 1.0
    %v3121 = vadd.f32 %v3099, 1.0
    %v3122 = vadd.f32 %v3101, 1.0
    %v3123 = vadd.f32 %v3103, 1.0
    %v3124 = vadd.f32 %v3105, 1.0
    %v3125 = vadd.f32 %v3107, 1.0
    %v3126 = vadd.f32 %v3109, 1.0
    %v3127 = vadd.f32 %v3111, 1.0
    %v3128 = vrcp.pop %v3120
    %v3129 = vrcp.pop %v3121
    %v3130 = vrcp.pop %v3122
    %v3131 = vrcp.pop %v3123
    %v3132 = vrcp.pop %v3124
    %v3133 = vrcp.pop %v3125
    %v3134 = vrcp.pop %v3126
    %v3135 = vrcp.pop %v3127
    %v3136 = vmul.f32 %v3112, %v3128
    %v3137 = vmul.f32 %v3113, %v3129
    %v3138 = vmul.f32 %v3114, %v3130
    %v3139 = vmul.f32 %v3115, %v3131
    %v3140 = vmul.f32 %v3116, %v3132
    %v3141 = vmul.f32 %v3117, %v3133
    %v3142 = vmul.f32 %v3118, %v3134
    %v3143 = vmul.f32 %v3119, %v3135
    %vm3144 = vcmp.ge.f32.partialorder %v3061, 0.0
    %vm3145 = vcmp.ge.f32.partialorder %v3063, 0.0
    %vm3146 = vcmp.ge.f32.partialorder %v3066, 0.0
    %vm3147 = vcmp.ge.f32.partialorder %v3068, 0.0
    %vm3148 = vcmp.ge.f32.partialorder %v3071, 0.0
    %vm3149 = vcmp.ge.f32.partialorder %v3073, 0.0
    %vm3150 = vcmp.ge.f32.partialorder %v3076, 0.0
    %vm3151 = vcmp.ge.f32.partialorder %v3078, 0.0
    %v3152 = vsub.f32 0.0, %v3136
    %v3153 = vsub.f32 0.0, %v3137
    %v3154 = vsub.f32 0.0, %v3138
    %v3155 = vsub.f32 0.0, %v3139
    %v3156 = vsub.f32 0.0, %v3140
    %v3157 = vsub.f32 0.0, %v3141
    %v3158 = vsub.f32 0.0, %v3142
    %v3159 = vsub.f32 0.0, %v3143
    %v3160 = vsel %vm3144, %v3136, %v3152
    %v3161 = vsel %vm3145, %v3137, %v3153
    %v3162 = vsel %vm3146, %v3138, %v3154
    %v3163 = vsel %vm3147, %v3139, %v3155
    %v3164 = vsel %vm3148, %v3140, %v3156
    %v3165 = vsel %vm3149, %v3141, %v3157
    %v3166 = vsel %vm3150, %v3142, %v3158
    %v3167 = vsel %vm3151, %v3143, %v3159
    %v3168 = vpack.c.bf16 %v2952, %v2951
    %v3169 = vpack.c.bf16 %v2954, %v2953
    %v3170 = vpack.c.bf16 %v2956, %v2955
    %v3171 = vpack.c.bf16 %v2958, %v2957
    %3172 = vmatpush.bf16.msra.mxu0 0
    %3173 = vmatpush.bf16.msra.mxu0 0
    %3174 = vmatpush.bf16.msra.mxu0 0
    %3175 = vmatpush.bf16.msra.mxu0 0
    %3176 = vmatpush.bf16.msra.mxu0 %v3171
    %3177 = vmatpush.bf16.msra.mxu0 %v3170
    %3178 = vmatpush.bf16.msra.mxu0 %v3169
    %3179 = vmatpush.bf16.msra.mxu0 %v3168
    %3180 = vmatmul.bf16.gmra.mxu0 %v3040
    %v3181 = vpop.f32.mrf.mxu0
    %v3182 = vadd.f32 %v2982, %v3181
    %v3183 = vpop.f32.mrf.mxu0
    %v3184 = vadd.f32 %v2987, %v3183
    %3185 = vmatmul.bf16.gmra.mxu0 %v3043
    %v3186 = vpop.f32.mrf.mxu0
    %v3187 = vadd.f32 %v2992, %v3186
    %v3188 = vpop.f32.mrf.mxu0
    %v3189 = vadd.f32 %v2997, %v3188
    %3190 = vmatmul.bf16.gmra.mxu0 %v3046
    %v3191 = vpop.f32.mrf.mxu0
    %v3192 = vadd.f32 %v3002, %v3191
    %v3193 = vpop.f32.mrf.mxu0
    %v3194 = vadd.f32 %v3007, %v3193
    %3195 = vmatmul.bf16.gmra.mxu0 %v3049
    %v3196 = vpop.f32.mrf.mxu0
    %v3197 = vadd.f32 %v3012, %v3196
    %v3198 = vpop.f32.mrf.mxu0
    %v3199 = vadd.f32 %v3017, %v3198
    %3200 = vdwg.mxu0
    %v3201 = vand.u32 2147483647, %v3182
    %v3202 = vand.u32 2147483647, %v3184
    %v3203 = vand.u32 2147483647, %v3187
    %v3204 = vand.u32 2147483647, %v3189
    %v3205 = vand.u32 2147483647, %v3192
    %v3206 = vand.u32 2147483647, %v3194
    %v3207 = vand.u32 2147483647, %v3197
    %v3208 = vand.u32 2147483647, %v3199
    %v3209 = vmul.f32 %v3201, -2.0
    %v3210 = vmul.f32 %v3202, -2.0
    %v3211 = vmul.f32 %v3203, -2.0
    %v3212 = vmul.f32 %v3204, -2.0
    %v3213 = vmul.f32 %v3205, -2.0
    %v3214 = vmul.f32 %v3206, -2.0
    %v3215 = vmul.f32 %v3207, -2.0
    %v3216 = vmul.f32 %v3208, -2.0
    %v3217 = vmul.f32 %v3209, 1.442695
    %v3218 = vpow.pop %v3217
    %v3219 = vmul.f32 %v3210, 1.442695
    %v3220 = vpow.pop %v3219
    %v3221 = vmul.f32 %v3211, 1.442695
    %v3222 = vpow.pop %v3221
    %v3223 = vmul.f32 %v3212, 1.442695
    %v3224 = vpow.pop %v3223
    %v3225 = vmul.f32 %v3213, 1.442695
    %v3226 = vpow.pop %v3225
    %v3227 = vmul.f32 %v3214, 1.442695
    %v3228 = vpow.pop %v3227
    %v3229 = vmul.f32 %v3215, 1.442695
    %v3230 = vpow.pop %v3229
    %v3231 = vmul.f32 %v3216, 1.442695
    %v3232 = vpow.pop %v3231
    %v3233 = vsub.f32 1.0, %v3218
    %v3234 = vsub.f32 1.0, %v3220
    %v3235 = vsub.f32 1.0, %v3222
    %v3236 = vsub.f32 1.0, %v3224
    %v3237 = vsub.f32 1.0, %v3226
    %v3238 = vsub.f32 1.0, %v3228
    %v3239 = vsub.f32 1.0, %v3230
    %v3240 = vsub.f32 1.0, %v3232
    %v3241 = vadd.f32 %v3218, 1.0
    %v3242 = vadd.f32 %v3220, 1.0
    %v3243 = vadd.f32 %v3222, 1.0
    %v3244 = vadd.f32 %v3224, 1.0
    %v3245 = vadd.f32 %v3226, 1.0
    %v3246 = vadd.f32 %v3228, 1.0
    %v3247 = vadd.f32 %v3230, 1.0
    %v3248 = vadd.f32 %v3232, 1.0
    %v3249 = vrcp.pop %v3241
    %v3250 = vrcp.pop %v3242
    %v3251 = vrcp.pop %v3243
    %v3252 = vrcp.pop %v3244
    %v3253 = vrcp.pop %v3245
    %v3254 = vrcp.pop %v3246
    %v3255 = vrcp.pop %v3247
    %v3256 = vrcp.pop %v3248
    %v3257 = vmul.f32 %v3233, %v3249
    %v3258 = vmul.f32 %v3234, %v3250
    %v3259 = vmul.f32 %v3235, %v3251
    %v3260 = vmul.f32 %v3236, %v3252
    %v3261 = vmul.f32 %v3237, %v3253
    %v3262 = vmul.f32 %v3238, %v3254
    %v3263 = vmul.f32 %v3239, %v3255
    %v3264 = vmul.f32 %v3240, %v3256
    %vm3265 = vcmp.ge.f32.partialorder %v3182, 0.0
    %vm3266 = vcmp.ge.f32.partialorder %v3184, 0.0
    %vm3267 = vcmp.ge.f32.partialorder %v3187, 0.0
    %vm3268 = vcmp.ge.f32.partialorder %v3189, 0.0
    %vm3269 = vcmp.ge.f32.partialorder %v3192, 0.0
    %vm3270 = vcmp.ge.f32.partialorder %v3194, 0.0
    %vm3271 = vcmp.ge.f32.partialorder %v3197, 0.0
    %vm3272 = vcmp.ge.f32.partialorder %v3199, 0.0
    %v3273 = vsub.f32 0.0, %v3257
    %v3274 = vsub.f32 0.0, %v3258
    %v3275 = vsub.f32 0.0, %v3259
    %v3276 = vsub.f32 0.0, %v3260
    %v3277 = vsub.f32 0.0, %v3261
    %v3278 = vsub.f32 0.0, %v3262
    %v3279 = vsub.f32 0.0, %v3263
    %v3280 = vsub.f32 0.0, %v3264
    %v3281 = vsel %vm3265, %v3257, %v3273
    %v3282 = vsel %vm3266, %v3258, %v3274
    %v3283 = vsel %vm3267, %v3259, %v3275
    %v3284 = vsel %vm3268, %v3260, %v3276
    %v3285 = vsel %vm3269, %v3261, %v3277
    %v3286 = vsel %vm3270, %v3262, %v3278
    %v3287 = vsel %vm3271, %v3263, %v3279
    %v3288 = vsel %vm3272, %v3264, %v3280
    %v3289 = vld [vmem:[%s11] sm:$0xff]
    %v3290 = vld [vmem:[%s11 + $0x8] sm:$0xff]
    %v3291 = vld [vmem:[%s11 + $0x10] sm:$0xff]
    %v3292 = vld [vmem:[%s11 + $0x18] sm:$0xff]
    %v3293 = vld [vmem:[%s11 + $0x20] sm:$0xff]
    %v3294 = vld [vmem:[%s11 + $0x28] sm:$0xff]
    %v3295 = vld [vmem:[%s11 + $0x30] sm:$0xff]
    %v3296 = vld [vmem:[%s11 + $0x38] sm:$0xff]
    %3298 = vset.pattern.permute.xlu0 0
    %3299 = vperm.xlu0 %3298, %v3289
    %v3300 = vpop.permute.xlu0 %3299
    %3303 = vset.pattern.permute.xlu0 0
    %3304 = vperm.xlu0 %3303, %v3290
    %v3305 = vpop.permute.xlu0 %3304
    %3308 = vset.pattern.permute.xlu0 0
    %3309 = vperm.xlu0 %3308, %v3291
    %v3310 = vpop.permute.xlu0 %3309
    %3313 = vset.pattern.permute.xlu0 0
    %3314 = vperm.xlu0 %3313, %v3292
    %v3315 = vpop.permute.xlu0 %3314
    %3318 = vset.pattern.permute.xlu0 0
    %3319 = vperm.xlu0 %3318, %v3293
    %v3320 = vpop.permute.xlu0 %3319
    %3323 = vset.pattern.permute.xlu0 0
    %3324 = vperm.xlu0 %3323, %v3294
    %v3325 = vpop.permute.xlu0 %3324
    %3328 = vset.pattern.permute.xlu0 0
    %3329 = vperm.xlu0 %3328, %v3295
    %v3330 = vpop.permute.xlu0 %3329
    %3333 = vset.pattern.permute.xlu0 0
    %3334 = vperm.xlu0 %3333, %v3296
    %v3335 = vpop.permute.xlu0 %3334
    %v3337 = vmul.f32 %v3300, %v3160
    %v3338 = vmul.f32 %v3305, %v3161
    %v3339 = vmul.f32 %v3310, %v3162
    %v3340 = vmul.f32 %v3315, %v3163
    %v3341 = vmul.f32 %v3320, %v3164
    %v3342 = vmul.f32 %v3325, %v3165
    %v3343 = vmul.f32 %v3330, %v3166
    %v3344 = vmul.f32 %v3335, %v3167
    %v3345 = vadd.f32 %v3337, %v3338
    %v3346 = vadd.f32 %v3345, %v3339
    %v3347 = vadd.f32 %v3346, %v3340
    %v3348 = vadd.f32 %v3347, %v3341
    %v3349 = vadd.f32 %v3348, %v3342
    %v3350 = vadd.f32 %v3349, %v3343
    %v3351 = vadd.f32 %v3350, %v3344
    %v3352 = vrot.slane %v3351, 4
    %v3353 = vadd.f32 %v3351, %v3352
    %v3354 = vrot.slane %v3353, 2
    %v3355 = vadd.f32 %v3353, %v3354
    %v3356 = vrot.slane %v3355, 1
    %v3357 = vadd.f32 %v3355, %v3356
    %v3358 = vld [vmem:[#allocation2] sm:$0x1]
    %3360 = vset.pattern.permute.xlu0 0
    %3361 = vperm.xlu0 %3360, %v3358
    %v3362 = vpop.permute.xlu0 %3361
    %v3364 = vperm.slane %v3362, 0
    %v3365 = vadd.f32 %v3357, %v3364
    %v3366 = vand.u32 2147483647, %v3365
    %v3367 = vmul.f32 %v3366, -2.0
    %v3368 = vmul.f32 %v3367, 1.442695
    %v3369 = vpow.pop %v3368
    %v3370 = vsub.f32 1.0, %v3369
    %v3371 = vadd.f32 %v3369, 1.0
    %v3372 = vrcp.pop %v3371
    %v3373 = vmul.f32 %v3370, %v3372
    %vm3374 = vcmp.ge.f32.partialorder %v3365, 0.0
    %v3375 = vsub.f32 0.0, %v3373
    %v3376 = vsel %vm3374, %v3373, %v3375
    %v3377 = vlaneseq
    %vm3378 = vcmp.ge.s32.totalorder %v3377, 0
    %vm3379 = vcmp.lt.s32.totalorder %v3377, 128
    %vm3380 = vmand %vm3378, %vm3379
    %3381 = vst.msk [vmem:[#allocation3] sm:$0x1] %vm3380, %v3376
    %v3382 = vld [vmem:[%s11] sm:$0xff]
    %v3383 = vld [vmem:[%s11 + $0x8] sm:$0xff]
    %v3384 = vld [vmem:[%s11 + $0x10] sm:$0xff]
    %v3385 = vld [vmem:[%s11 + $0x18] sm:$0xff]
    %v3386 = vld [vmem:[%s11 + $0x20] sm:$0xff]
    %v3387 = vld [vmem:[%s11 + $0x28] sm:$0xff]
    %v3388 = vld [vmem:[%s11 + $0x30] sm:$0xff]
    %v3389 = vld [vmem:[%s11 + $0x38] sm:$0xff]
    %3391 = vset.pattern.permute.xlu0 0
    %3392 = vperm.xlu0 %3391, %v3382
    %v3393 = vpop.permute.xlu0 %3392
    %3396 = vset.pattern.permute.xlu0 0
    %3397 = vperm.xlu0 %3396, %v3383
    %v3398 = vpop.permute.xlu0 %3397
    %3401 = vset.pattern.permute.xlu0 0
    %3402 = vperm.xlu0 %3401, %v3384
    %v3403 = vpop.permute.xlu0 %3402
    %3406 = vset.pattern.permute.xlu0 0
    %3407 = vperm.xlu0 %3406, %v3385
    %v3408 = vpop.permute.xlu0 %3407
    %3411 = vset.pattern.permute.xlu0 0
    %3412 = vperm.xlu0 %3411, %v3386
    %v3413 = vpop.permute.xlu0 %3412
    %3416 = vset.pattern.permute.xlu0 0
    %3417 = vperm.xlu0 %3416, %v3387
    %v3418 = vpop.permute.xlu0 %3417
    %3421 = vset.pattern.permute.xlu0 0
    %3422 = vperm.xlu0 %3421, %v3388
    %v3423 = vpop.permute.xlu0 %3422
    %3426 = vset.pattern.permute.xlu0 0
    %3427 = vperm.xlu0 %3426, %v3389
    %v3428 = vpop.permute.xlu0 %3427
    %v3430 = vmul.f32 %v3393, %v3281
    %v3431 = vmul.f32 %v3398, %v3282
    %v3432 = vmul.f32 %v3403, %v3283
    %v3433 = vmul.f32 %v3408, %v3284
    %v3434 = vmul.f32 %v3413, %v3285
    %v3435 = vmul.f32 %v3418, %v3286
    %v3436 = vmul.f32 %v3423, %v3287
    %v3437 = vmul.f32 %v3428, %v3288
    %v3438 = vadd.f32 %v3430, %v3431
    %v3439 = vadd.f32 %v3438, %v3432
    %v3440 = vadd.f32 %v3439, %v3433
    %v3441 = vadd.f32 %v3440, %v3434
    %v3442 = vadd.f32 %v3441, %v3435
    %v3443 = vadd.f32 %v3442, %v3436
    %v3444 = vadd.f32 %v3443, %v3437
    %v3445 = vrot.slane %v3444, 4
    %v3446 = vadd.f32 %v3444, %v3445
    %v3447 = vrot.slane %v3446, 2
    %v3448 = vadd.f32 %v3446, %v3447
    %v3449 = vrot.slane %v3448, 1
    %v3450 = vadd.f32 %v3448, %v3449
    %v3451 = vld [vmem:[#allocation2] sm:$0x1]
    %3453 = vset.pattern.permute.xlu0 0
    %3454 = vperm.xlu0 %3453, %v3451
    %v3455 = vpop.permute.xlu0 %3454
    %v3457 = vperm.slane %v3455, 0
    %v3458 = vadd.f32 %v3450, %v3457
    %v3459 = vand.u32 2147483647, %v3458
    %v3460 = vmul.f32 %v3459, -2.0
    %v3461 = vmul.f32 %v3460, 1.442695
    %v3462 = vpow.pop %v3461
    %v3463 = vsub.f32 1.0, %v3462
    %v3464 = vadd.f32 %v3462, 1.0
    %v3465 = vrcp.pop %v3464
    %v3466 = vmul.f32 %v3463, %v3465
    %vm3467 = vcmp.ge.f32.partialorder %v3458, 0.0
    %v3468 = vsub.f32 0.0, %v3466
    %v3469 = vsel %vm3467, %v3466, %v3468
    %3470 = vst.msk [vmem:[#allocation3 + $0x1] sm:$0x1] %vm3380, %v3469
    // Predicated region
    $region54: #{tpu_custom_call.1} parent=1 // pred_check
      _
    $region55: #{tpu_custom_call.1} parent=1 // pred_check_branch
      %3472 = sbr.rel (0) target = $region57
    $region56: #{tpu_custom_call.1} parent=1 // pred_region
      %3474 = vsyncadd [#allocation4], 0
      %s3476 = sshll.u32 [#allocation3], 4
      %s3477 = int_to_ptr.vmem [resolvable:$true] %s3476
      %s3478 = sshll.u32 %s13, 4
      %s3479 = int_to_ptr.hbm [resolvable:$true] %s3478
      %3481 = dma.vmem_to_hbm [thread:$0]  %s3477, 32, %s3479, [#allocation4]
    $region57: #{tpu_custom_call.1} parent=1 // pred_fallthru
      _
    // Predicated region
    $region58: #{tpu_custom_call.1} parent=1 // pred_check
      _
    $region59: #{tpu_custom_call.1} parent=1 // pred_check_branch
      %3483 = sbr.rel (0) target = $region61
    $region60: #{tpu_custom_call.1} parent=1 // pred_region
      %3485 = dma.done [#allocation4], 32
    $region61: #{tpu_custom_call.1} parent=1 // pred_fallthru
      _
    %3486 = vsyncpa [#allocation4], 1

</llo_original>
